<compile_context>
chip_gen: v6e
topology: v6e:2x2x1
jax: 0.10.0
libtpu: 0.0.40
codegen_flags: <defaults>
</compile_context>

<pallas_src>
import functools
import math

import jax
import jax.numpy as jnp
from jax.experimental import pallas as pl
from jax.experimental.pallas import tpu as pltpu


def _round_up(x, m):
    return (x + m - 1) // m * m


def _cdiv(a, b):
    return -(-a // b)


def ibp_encoder_kernel(x_ref, w1_ref, b1_ref, w2_ref, b2_ref, w3_ref, b3_ref, o_ref):
    # x arrives f32 with its original (unpadded) lane dim; cast to bf16 on the
    # VPU (free filler under the MXU) instead of an extra HBM round trip.
    x = x_ref[...].astype(w1_ref.dtype)
    # hidden layer 1: (bm, n_x) @ (n_x, H_p) -> f32 acc; bias + ReLU stay f32
    h1 = jnp.dot(x, w1_ref[...], preferred_element_type=jnp.float32)
    h1 = jnp.maximum(h1 + b1_ref[...], 0.0).astype(w2_ref.dtype)
    # hidden layer 2: (bm, H_p) @ (H_p, H_p)
    h2 = jnp.dot(h1, w2_ref[...], preferred_element_type=jnp.float32)
    h2 = jnp.maximum(h2 + b2_ref[...], 0.0).astype(w3_ref.dtype)
    # output layer: (bm, H_p) @ (H_p, out_p)   (no activation)
    out = jnp.dot(h2, w3_ref[...], preferred_element_type=jnp.float32) + b3_ref[...]
    o_ref[...] = out.astype(o_ref.dtype)


def prepare_params(params, *, n_x, K, lane_pad=128, compute_dtype=jnp.bfloat16):
    """One-time weight preparation: zero-pad to lane-dense shapes + cast to
    bf16.  Call once and reuse across forwards so the per-call HBM traffic is
    only the padded bf16 weight stream."""
    w1, b1, w2, b2, w3, b3 = params
    H = w1.shape[1]
    out_dim = 2 * K
    H_p = _round_up(H, lane_pad)
    out_p = _round_up(out_dim, lane_pad)

    def pad2(a, rows, cols, dtype):
        a = a.astype(dtype)
        return jnp.pad(a, ((0, rows - a.shape[0]), (0, cols - a.shape[1])))

    # W1 keeps its unpadded input dim (= n_x) so x needs no lane padding.
    w1p = pad2(w1, n_x, H_p, compute_dtype)
    w2p = pad2(w2, H_p, H_p, compute_dtype)
    w3p = pad2(w3, H_p, out_p, compute_dtype)
    b1p = pad2(b1.reshape(1, H), 1, H_p, jnp.float32)
    b2p = pad2(b2.reshape(1, H), 1, H_p, jnp.float32)
    b3p = pad2(b3.reshape(1, out_dim), 1, out_p, jnp.float32)
    return (w1p, b1p, w2p, b2p, w3p, b3p)


def ibp_encoder_forward(x, prepared, *, n_x, K, bm=256):
    """x: any shape with prod(trailing dims) == n_x per row (flattened like
    x.view(-1, n_x)).  `prepared` = prepare_params(...) output (padded bf16
    weights / f32 biases, cached across calls).  Use bm=128 on v5e."""
    w1p, b1p, w2p, b2p, w3p, b3p = prepared
    H_p = w1p.shape[1]
    out_p = w3p.shape[1]
    out_dim = 2 * K

    x2d = x.reshape(-1, n_x)
    B = x2d.shape[0]

    # Batch tiling: at least two grid steps so both v7x TensorCores get work
    # (harmless extra ~0.35us step on single-TC v5e/v6e); row tiles are a
    # multiple of 16 (native bf16 sublane tile).
    n_steps = max(2, _cdiv(B, bm))
    bm_eff = max(16, _round_up(_cdiv(B, n_steps), 16))
    B_pad = n_steps * bm_eff

    # x stays f32 and lane-unpadded; only zero-pad the batch dim to the grid.
    xp = jnp.pad(x2d, ((0, B_pad - B), (0, 0)))

    w_itemsize = jnp.dtype(w1p.dtype).itemsize
    flops = 2 * B_pad * (n_x * H_p + H_p * H_p + H_p * out_p)
    bytes_accessed = (
        xp.size * 4
        + (w1p.size + w2p.size + w3p.size) * w_itemsize
        + (b1p.size + b2p.size + b3p.size) * 4
        + B_pad * out_p * 4
    )

    # Resident operands (constant index_map): single-buffered -> the bf16
    # weights are not double-buffered in VMEM.
    def resident(shape):
        return pl.BlockSpec(shape, lambda i: (0, 0), pipeline_mode=pl.Buffered(1))

    out_padded = pl.pallas_call(
        ibp_encoder_kernel,
        out_shape=jax.ShapeDtypeStruct((B_pad, out_p), jnp.float32),
        grid_spec=pltpu.PrefetchScalarGridSpec(
            num_scalar_prefetch=0,
            grid=(n_steps,),
            in_specs=[
                pl.BlockSpec((bm_eff, n_x), lambda i: (i, 0)),  # x row tile (f32)
                resident((n_x, H_p)),    # W1
                resident((1, H_p)),      # b1
                resident((H_p, H_p)),    # W2
                resident((1, H_p)),      # b2
                resident((H_p, out_p)),  # W3
                resident((1, out_p)),    # b3
            ],
            out_specs=pl.BlockSpec((bm_eff, out_p), lambda i: (i, 0)),
        ),
        compiler_params=pltpu.CompilerParams(
            dimension_semantics=("parallel",),
            vmem_limit_bytes=24 << 20,
        ),
        cost_estimate=pl.CostEstimate(
            flops=flops, transcendentals=0, bytes_accessed=bytes_accessed),
    )(xp, w1p, b1p, w2p, b2p, w3p, b3p)

    # slice away batch/lane padding
    return out_padded[:B, :out_dim]


def init_params(key, n_x, K, H=800):
    """Deterministic init matching torch.nn.Linear default (uniform +/- 1/sqrt(fan_in)).
    Weights stored as (in_features, out_features)."""
    ks = jax.random.split(key, 6)
    out_dim = 2 * K

    def lin(kw, kb, fan_in, fan_out):
        bound = 1.0 / math.sqrt(fan_in)
        w = jax.random.uniform(kw, (fan_in, fan_out), jnp.float32, -bound, bound)
        b = jax.random.uniform(kb, (fan_out,), jnp.float32, -bound, bound)
        return w, b

    w1, b1 = lin(ks[0], ks[1], n_x, H)
    w2, b2 = lin(ks[2], ks[3], H, H)
    w3, b3 = lin(ks[4], ks[5], H, out_dim)
    return (w1, b1, w2, b2, w3, b3)


def reference_forward(x, params, n_x, compute_dtype=jnp.float32):
    """Pure-JAX reference with the same (optional) low-precision cast."""
    w1, b1, w2, b2, w3, b3 = params
    x2d = x.reshape(-1, n_x).astype(compute_dtype)
    h1 = jnp.maximum(
        jnp.dot(x2d, w1.astype(compute_dtype), preferred_element_type=jnp.float32) + b1, 0.0)
    h1 = h1.astype(compute_dtype)
    h2 = jnp.maximum(
        jnp.dot(h1, w2.astype(compute_dtype), preferred_element_type=jnp.float32) + b2, 0.0)
    h2 = h2.astype(compute_dtype)
    return jnp.dot(h2, w3.astype(compute_dtype), preferred_element_type=jnp.float32) + b3


if __name__ == "__main__":
    # mlp_mnist config: n_x = 784 (MNIST input), hidden 800 (fixed by the
    # module), K = 32 bottleneck.  Small batch B=8 exercises the small-batch
    # path: two 16-row grid steps (both v7x TensorCores participate).
    K = 32
    n_x = 28 * 28
    B = 8

    key = jax.random.PRNGKey(0)
    k_param, k_x = jax.random.split(key)

    params = init_params(k_param, n_x, K)
    # one-time weight prep (pad + bf16 cast), reused across forward calls
    prepared = prepare_params(params, n_x=n_x, K=K)

    # NCHW image input, flattened inside forward like x.view(-1, n_x)
    x = jax.random.normal(k_x, (B, 1, 28, 28), dtype=jnp.float32)

    fwd = jax.jit(functools.partial(ibp_encoder_forward, n_x=n_x, K=K, bm=256))
    mean_t = jax.block_until_ready(fwd(x, prepared))

    # semantics match the torch module up to the bf16 weight/activation cast;
    # compare against a pure-JAX reference using the same cast.
    ref = reference_forward(x, params, n_x, compute_dtype=jnp.bfloat16)
    assert mean_t.shape == (B, 2 * K), mean_t.shape
    assert jnp.allclose(mean_t, ref, atol=1e-2, rtol=1e-2), "mismatch vs reference"

    print("KERNEL_OK")
</pallas_src>

<mosaic_0001>
module attributes {stable_mosaic.version = 11 : i64} {
  func.func @ibp_encoder_kernel(%arg0: i32, %arg1: memref<16x784xf32, #tpu.memory_space<vmem>>, %arg2: memref<784x896xbf16, #tpu.memory_space<vmem>>, %arg3: memref<1x896xf32, #tpu.memory_space<vmem>>, %arg4: memref<896x896xbf16, #tpu.memory_space<vmem>>, %arg5: memref<1x896xf32, #tpu.memory_space<vmem>>, %arg6: memref<896x128xbf16, #tpu.memory_space<vmem>>, %arg7: memref<1x128xf32, #tpu.memory_space<vmem>>, %arg8: memref<16x128xf32, #tpu.memory_space<vmem>>) attributes {dimension_semantics = [#tpu.dimension_semantics<parallel>], iteration_bounds = array<i64: 2>, scalar_prefetch = 0 : i64, scratch_operands = 0 : i64, tpu.core_type = #tpu.core_type<tc>, window_params = [{transform_indices = @transform_0, window_bounds = array<i64: 16, 784>}, {pipeline_mode = #tpu.pipeline_mode<synchronous>, transform_indices = @transform_1, window_bounds = array<i64: 784, 896>}, {pipeline_mode = #tpu.pipeline_mode<synchronous>, transform_indices = @transform_2, window_bounds = array<i64: 1, 896>}, {pipeline_mode = #tpu.pipeline_mode<synchronous>, transform_indices = @transform_3, window_bounds = array<i64: 896, 896>}, {pipeline_mode = #tpu.pipeline_mode<synchronous>, transform_indices = @transform_4, window_bounds = array<i64: 1, 896>}, {pipeline_mode = #tpu.pipeline_mode<synchronous>, transform_indices = @transform_5, window_bounds = array<i64: 896, 128>}, {pipeline_mode = #tpu.pipeline_mode<synchronous>, transform_indices = @transform_6, window_bounds = array<i64: 1, 128>}, {transform_indices = @transform_7, window_bounds = array<i64: 16, 128>}]} {
    %c0 = arith.constant 0 : index
    %c0_0 = arith.constant 0 : index
    %0 = vector.load %arg1[%c0, %c0_0] : memref<16x784xf32, #tpu.memory_space<vmem>>, vector<16x784xf32>
    %1 = arith.truncf %0 : vector<16x784xf32> to vector<16x784xbf16>
    %c0_1 = arith.constant 0 : index
    %c0_2 = arith.constant 0 : index
    %2 = vector.load %arg2[%c0_1, %c0_2] : memref<784x896xbf16, #tpu.memory_space<vmem>>, vector<784x896xbf16>
    %cst = arith.constant dense<0.000000e+00> : vector<16x896xf32>
    %3 = tpu.matmul %1, %2, %cst {dimension_numbers = #tpu.dot_dimension_numbers<[1], [0], [0], [1], [0, 0, 1, 1], [], []>} : vector<16x784xbf16>, vector<784x896xbf16>, vector<16x896xf32> -> vector<16x896xf32>
    %c0_3 = arith.constant 0 : index
    %c0_4 = arith.constant 0 : index
    %4 = vector.load %arg3[%c0_3, %c0_4] : memref<1x896xf32, #tpu.memory_space<vmem>>, vector<1x896xf32>
    %5 = vector.broadcast %4 : vector<1x896xf32> to vector<16x896xf32>
    %6 = arith.addf %3, %5 : vector<16x896xf32>
    %cst_5 = arith.constant 0.000000e+00 : f32
    %7 = vector.broadcast %cst_5 : f32 to vector<16x896xf32>
    %8 = arith.maximumf %6, %7 : vector<16x896xf32>
    %9 = arith.truncf %8 : vector<16x896xf32> to vector<16x896xbf16>
    %c0_6 = arith.constant 0 : index
    %c0_7 = arith.constant 0 : index
    %10 = vector.load %arg4[%c0_6, %c0_7] : memref<896x896xbf16, #tpu.memory_space<vmem>>, vector<896x896xbf16>
    %cst_8 = arith.constant dense<0.000000e+00> : vector<16x896xf32>
    %11 = tpu.matmul %9, %10, %cst_8 {dimension_numbers = #tpu.dot_dimension_numbers<[1], [0], [0], [1], [0, 0, 1, 1], [], []>} : vector<16x896xbf16>, vector<896x896xbf16>, vector<16x896xf32> -> vector<16x896xf32>
    %c0_9 = arith.constant 0 : index
    %c0_10 = arith.constant 0 : index
    %12 = vector.load %arg5[%c0_9, %c0_10] : memref<1x896xf32, #tpu.memory_space<vmem>>, vector<1x896xf32>
    %13 = vector.broadcast %12 : vector<1x896xf32> to vector<16x896xf32>
    %14 = arith.addf %11, %13 : vector<16x896xf32>
    %cst_11 = arith.constant 0.000000e+00 : f32
    %15 = vector.broadcast %cst_11 : f32 to vector<16x896xf32>
    %16 = arith.maximumf %14, %15 : vector<16x896xf32>
    %17 = arith.truncf %16 : vector<16x896xf32> to vector<16x896xbf16>
    %c0_12 = arith.constant 0 : index
    %c0_13 = arith.constant 0 : index
    %18 = vector.load %arg6[%c0_12, %c0_13] : memref<896x128xbf16, #tpu.memory_space<vmem>>, vector<896x128xbf16>
    %cst_14 = arith.constant dense<0.000000e+00> : vector<16x128xf32>
    %19 = tpu.matmul %17, %18, %cst_14 {dimension_numbers = #tpu.dot_dimension_numbers<[1], [0], [0], [1], [0, 0, 1, 1], [], []>} : vector<16x896xbf16>, vector<896x128xbf16>, vector<16x128xf32> -> vector<16x128xf32>
    %c0_15 = arith.constant 0 : index
    %c0_16 = arith.constant 0 : index
    %20 = vector.load %arg7[%c0_15, %c0_16] : memref<1x128xf32, #tpu.memory_space<vmem>>, vector<1x128xf32>
    %21 = vector.broadcast %20 : vector<1x128xf32> to vector<16x128xf32>
    %22 = arith.addf %19, %21 : vector<16x128xf32>
    %c0_17 = arith.constant 0 : index
    %c0_18 = arith.constant 0 : index
    %23 = vector.load %arg8[%c0_17, %c0_18] : memref<16x128xf32, #tpu.memory_space<vmem>>, vector<16x128xf32>
    tpu.vector_store %arg8[%c0_17, %c0_18], %22 {strides = array<i32>} : memref<16x128xf32, #tpu.memory_space<vmem>>, vector<16x128xf32>,
    return
  }
  func.func @transform_0(%arg0: i32) -> (i32, i32) {
    %c0_i32 = arith.constant 0 : i32
    %c0_i32_0 = arith.constant 0 : i32
    return %arg0, %c0_i32 : i32, i32
  }
  func.func @transform_1(%arg0: i32) -> (i32, i32) {
    %c0_i32 = arith.constant 0 : i32
    %c0_i32_0 = arith.constant 0 : i32
    %c0_i32_1 = arith.constant 0 : i32
    return %c0_i32, %c0_i32_0 : i32, i32
  }
  func.func @transform_2(%arg0: i32) -> (i32, i32) {
    %c0_i32 = arith.constant 0 : i32
    %c0_i32_0 = arith.constant 0 : i32
    %c0_i32_1 = arith.constant 0 : i32
    return %c0_i32, %c0_i32_0 : i32, i32
  }
  func.func @transform_3(%arg0: i32) -> (i32, i32) {
    %c0_i32 = arith.constant 0 : i32
    %c0_i32_0 = arith.constant 0 : i32
    %c0_i32_1 = arith.constant 0 : i32
    return %c0_i32, %c0_i32_0 : i32, i32
  }
  func.func @transform_4(%arg0: i32) -> (i32, i32) {
    %c0_i32 = arith.constant 0 : i32
    %c0_i32_0 = arith.constant 0 : i32
    %c0_i32_1 = arith.constant 0 : i32
    return %c0_i32, %c0_i32_0 : i32, i32
  }
  func.func @transform_5(%arg0: i32) -> (i32, i32) {
    %c0_i32 = arith.constant 0 : i32
    %c0_i32_0 = arith.constant 0 : i32
    %c0_i32_1 = arith.constant 0 : i32
    return %c0_i32, %c0_i32_0 : i32, i32
  }
  func.func @transform_6(%arg0: i32) -> (i32, i32) {
    %c0_i32 = arith.constant 0 : i32
    %c0_i32_0 = arith.constant 0 : i32
    %c0_i32_1 = arith.constant 0 : i32
    return %c0_i32, %c0_i32_0 : i32, i32
  }
  func.func @transform_7(%arg0: i32) -> (i32, i32) {
    %c0_i32 = arith.constant 0 : i32
    %c0_i32_0 = arith.constant 0 : i32
    return %arg0, %c0_i32 : i32, i32
  }
}

</mosaic_0001>

<llo_original>
// kernel: ibp_encoder_forward.1
$region0: #{ibp_encoder_forward.1}
  #allocation0 [shape = 'u32[]', space=smem, size = 0x4, offset = 0x4, fixed_abs, tag = 'smem constant byte address 0x4 - core index']
  #allocation1 [shape = 'u32[144,128]{1,0:T(1,128)}', space=vmem, size = 0x12000, scoped, tag = 'internal scratch']
  %s0 = inlined_call_operand.vmem [shape: f32[32,784], index: 0, kind: input, shape index: {}]
  %s1 = inlined_call_operand.hbm [shape: bf16[784,896], index: 1, kind: input, shape index: {}]
  %s2 = inlined_call_operand.hbm [shape: f32[1,896], index: 2, kind: input, shape index: {}]
  %s3 = inlined_call_operand.hbm [shape: bf16[896,896], index: 3, kind: input, shape index: {}]
  %s4 = inlined_call_operand.hbm [shape: f32[1,896], index: 4, kind: input, shape index: {}]
  %s5 = inlined_call_operand.hbm [shape: bf16[896,128], index: 5, kind: input, shape index: {}]
  %s6 = inlined_call_operand.hbm [shape: f32[1,128], index: 6, kind: input, shape index: {}]
  %s7 = inlined_call_operand.vmem [shape: f32[32,128], index: 7, kind: output, shape index: {}]
  %s8 = sld [smem:[#allocation0]]
  $region85: #{ibp_encoder_forward.1} parent=0
    _
  %s10 = ssub.s32 1, %s8
  %s11 = scalar_select 0, %s10, %s8
  $region1: #{ibp_encoder_forward.1} parent=0
    #allocation2 [shape = 'u8[1404928]{0}', space=vmem, size = 0x157000, scoped, tag = 'input window, operand 1, single buffered']
    #allocation3 [shape = 's32[2]{0}', space=sflag, size = 0x8, scoped, tag = 'scoped memory for ibp_encoder_forward.1']
    #allocation4 [shape = 'u8[3584]{0}', space=vmem, size = 0x1000, scoped, tag = 'input window, operand 2, single buffered']
    #allocation5 [shape = 's32[1]{0}', space=sflag, size = 0x4, scoped, tag = 'scoped memory for ibp_encoder_forward.1']
    #allocation6 [shape = 'u8[1605632]{0}', space=vmem, size = 0x188000, scoped, tag = 'input window, operand 3, single buffered']
    #allocation7 [shape = 'u8[3584]{0}', space=vmem, size = 0x1000, scoped, tag = 'input window, operand 4, single buffered']
    #allocation8 [shape = 's32[1]{0}', space=sflag, size = 0x4, scoped, tag = 'scoped memory for ibp_encoder_forward.1']
    #allocation9 [shape = 'u8[229376]{0}', space=vmem, size = 0x38000, scoped, tag = 'input window, operand 5, single buffered']
    #allocation10 [shape = 'u8[512]{0}', space=vmem, size = 0x400, scoped, tag = 'input window, operand 6, single buffered']
    #allocation11 [shape = 's32[1]{0}', space=sflag, size = 0x4, scoped, tag = 'scoped memory for ibp_encoder_forward.1']
    %12 = vsyncpa [#allocation3], 0
    %13 = vsyncpa [#allocation5], 0
    %14 = vsyncpa [#allocation8], 0
    %15 = vsyncpa [#allocation11], 0
    loop: start=0, step=1, limit=4
    $region2: #{ibp_encoder_forward.1} parent=1 // loop_pre_header
      _
    $region3: #{ibp_encoder_forward.1} parent=1 // loop_header
      %s17 = sphi 0, %s21
      %p18 = scmp.ge.s32.totalorder %s17, 4
      %s27 = sphi 0, %s29
      %s30 = sphi 0, %s27
      %s31 = sphi 0, %s30
      %s47 = sphi 0, %s31
      %s51 = sphi 0, %s51
      %s53 = sphi 0, %s51
      %s54 = sphi 0, %s53
      %s68 = sphi 0, %s54
      %s72 = sphi 0, %s72
      %s74 = sphi 0, %s72
      %s75 = sphi 0, %s74
      %s89 = sphi 0, %s75
      %s93 = sphi 0, %s93
      %s95 = sphi 0, %s93
      %s96 = sphi 0, %s95
      %s110 = sphi 0, %s96
      %s114 = sphi 0, %s114
      %s116 = sphi 0, %s114
      %s117 = sphi 0, %s116
      %s131 = sphi 0, %s117
      %s135 = sphi 0, %s135
      %s137 = sphi 0, %s135
      %s138 = sphi 0, %s137
      %s152 = sphi 0, %s138
      %s156 = sphi 0, %s156
      %s158 = sphi 0, %s156
      %s159 = sphi 0, %s158
      %s173 = sphi 0, %s159
      %s179 = sphi 0, %s181
      %s182 = sphi 0, %s179
      %s183 = sphi 0, %s182
      %s199 = sphi 0, %s183
    $region4: #{ibp_encoder_forward.1} parent=1 // loop_header_branch
      %20 = sbr.rel (%p18) target = $region8
    $region5: #{ibp_encoder_forward.1} parent=1 // loop_body
      %s22 = ssub.s32 %s17, 1
      %s23 = ssub.s32 %s17, 2
      %s24 = sadd.s32 %s17, 1
      %s25 = ssub.s32 %s17, %s24
      %p26 = scmp.eq.s32.totalorder %s25, 0
      %s28 = sadd.s32 %s27, 1
      %s29 = scalar_select %p26, %s27, %s28
      %p32 = pneg %p26
      %p33 = scmp.eq.s32.totalorder %s17, 1
      %p34 = por %p32, %p33
      %p35 = scmp.ne.s32.totalorder %s27, %s30
      %p36 = scmp.eq.s32.totalorder %s17, 0
      %p37 = por %p35, %p36
      %p38 = scmp.ne.s32.totalorder %s27, %s30
      %p39 = scmp.eq.s32.totalorder %s22, 1
      %p40 = por %p38, %p39
      %p41 = scmp.ne.s32.totalorder %s30, %s31
      %p42 = scmp.eq.s32.totalorder %s22, 0
      %p43 = por %p41, %p42
      %p44 = scmp.ne.s32.totalorder %s30, %s31
      %p45 = scmp.eq.s32.totalorder %s23, 1
      %p46 = por %p44, %p45
      %p48 = scmp.ne.s32.totalorder %s31, %s47
      %p49 = scmp.eq.s32.totalorder %s23, 0
      %p50 = por %p48, %p49
      %s52 = sadd.s32 %s51, 1
      %p55 = scmp.eq.s32.totalorder %s17, 1
      %p56 = scmp.ne.s32.totalorder %s51, %s53
      %p57 = scmp.eq.s32.totalorder %s17, 0
      %p58 = por %p56, %p57
      %p59 = scmp.ne.s32.totalorder %s51, %s53
      %p60 = scmp.eq.s32.totalorder %s22, 1
      %p61 = por %p59, %p60
      %p62 = scmp.ne.s32.totalorder %s53, %s54
      %p63 = scmp.eq.s32.totalorder %s22, 0
      %p64 = por %p62, %p63
      %p65 = scmp.ne.s32.totalorder %s53, %s54
      %p66 = scmp.eq.s32.totalorder %s23, 1
      %p67 = por %p65, %p66
      %p69 = scmp.ne.s32.totalorder %s54, %s68
      %p70 = scmp.eq.s32.totalorder %s23, 0
      %p71 = por %p69, %p70
      %s73 = sadd.s32 %s72, 1
      %p76 = scmp.eq.s32.totalorder %s17, 1
      %p77 = scmp.ne.s32.totalorder %s72, %s74
      %p78 = scmp.eq.s32.totalorder %s17, 0
      %p79 = por %p77, %p78
      %p80 = scmp.ne.s32.totalorder %s72, %s74
      %p81 = scmp.eq.s32.totalorder %s22, 1
      %p82 = por %p80, %p81
      %p83 = scmp.ne.s32.totalorder %s74, %s75
      %p84 = scmp.eq.s32.totalorder %s22, 0
      %p85 = por %p83, %p84
      %p86 = scmp.ne.s32.totalorder %s74, %s75
      %p87 = scmp.eq.s32.totalorder %s23, 1
      %p88 = por %p86, %p87
      %p90 = scmp.ne.s32.totalorder %s75, %s89
      %p91 = scmp.eq.s32.totalorder %s23, 0
      %p92 = por %p90, %p91
      %s94 = sadd.s32 %s93, 1
      %p97 = scmp.eq.s32.totalorder %s17, 1
      %p98 = scmp.ne.s32.totalorder %s93, %s95
      %p99 = scmp.eq.s32.totalorder %s17, 0
      %p100 = por %p98, %p99
      %p101 = scmp.ne.s32.totalorder %s93, %s95
      %p102 = scmp.eq.s32.totalorder %s22, 1
      %p103 = por %p101, %p102
      %p104 = scmp.ne.s32.totalorder %s95, %s96
      %p105 = scmp.eq.s32.totalorder %s22, 0
      %p106 = por %p104, %p105
      %p107 = scmp.ne.s32.totalorder %s95, %s96
      %p108 = scmp.eq.s32.totalorder %s23, 1
      %p109 = por %p107, %p108
      %p111 = scmp.ne.s32.totalorder %s96, %s110
      %p112 = scmp.eq.s32.totalorder %s23, 0
      %p113 = por %p111, %p112
      %s115 = sadd.s32 %s114, 1
      %p118 = scmp.eq.s32.totalorder %s17, 1
      %p119 = scmp.ne.s32.totalorder %s114, %s116
      %p120 = scmp.eq.s32.totalorder %s17, 0
      %p121 = por %p119, %p120
      %p122 = scmp.ne.s32.totalorder %s114, %s116
      %p123 = scmp.eq.s32.totalorder %s22, 1
      %p124 = por %p122, %p123
      %p125 = scmp.ne.s32.totalorder %s116, %s117
      %p126 = scmp.eq.s32.totalorder %s22, 0
      %p127 = por %p125, %p126
      %p128 = scmp.ne.s32.totalorder %s116, %s117
      %p129 = scmp.eq.s32.totalorder %s23, 1
      %p130 = por %p128, %p129
      %p132 = scmp.ne.s32.totalorder %s117, %s131
      %p133 = scmp.eq.s32.totalorder %s23, 0
      %p134 = por %p132, %p133
      %s136 = sadd.s32 %s135, 1
      %p139 = scmp.eq.s32.totalorder %s17, 1
      %p140 = scmp.ne.s32.totalorder %s135, %s137
      %p141 = scmp.eq.s32.totalorder %s17, 0
      %p142 = por %p140, %p141
      %p143 = scmp.ne.s32.totalorder %s135, %s137
      %p144 = scmp.eq.s32.totalorder %s22, 1
      %p145 = por %p143, %p144
      %p146 = scmp.ne.s32.totalorder %s137, %s138
      %p147 = scmp.eq.s32.totalorder %s22, 0
      %p148 = por %p146, %p147
      %p149 = scmp.ne.s32.totalorder %s137, %s138
      %p150 = scmp.eq.s32.totalorder %s23, 1
      %p151 = por %p149, %p150
      %p153 = scmp.ne.s32.totalorder %s138, %s152
      %p154 = scmp.eq.s32.totalorder %s23, 0
      %p155 = por %p153, %p154
      %s157 = sadd.s32 %s156, 1
      %p160 = scmp.eq.s32.totalorder %s17, 1
      %p161 = scmp.ne.s32.totalorder %s156, %s158
      %p162 = scmp.eq.s32.totalorder %s17, 0
      %p163 = por %p161, %p162
      %p164 = scmp.ne.s32.totalorder %s156, %s158
      %p165 = scmp.eq.s32.totalorder %s22, 1
      %p166 = por %p164, %p165
      %p167 = scmp.ne.s32.totalorder %s158, %s159
      %p168 = scmp.eq.s32.totalorder %s22, 0
      %p169 = por %p167, %p168
      %p170 = scmp.ne.s32.totalorder %s158, %s159
      %p171 = scmp.eq.s32.totalorder %s23, 1
      %p172 = por %p170, %p171
      %p174 = scmp.ne.s32.totalorder %s159, %s173
      %p175 = scmp.eq.s32.totalorder %s23, 0
      %p176 = por %p174, %p175
      %s177 = ssub.s32 %s17, %s24
      %p178 = scmp.eq.s32.totalorder %s177, 0
      %s180 = sadd.s32 %s179, 1
      %s181 = scalar_select %p178, %s179, %s180
      %p184 = pneg %p178
      %p185 = scmp.eq.s32.totalorder %s17, 1
      %p186 = por %p184, %p185
      %p187 = scmp.ne.s32.totalorder %s179, %s182
      %p188 = scmp.eq.s32.totalorder %s17, 0
      %p189 = por %p187, %p188
      %p190 = scmp.ne.s32.totalorder %s179, %s182
      %p191 = scmp.eq.s32.totalorder %s22, 1
      %p192 = por %p190, %p191
      %p193 = scmp.ne.s32.totalorder %s182, %s183
      %p194 = scmp.eq.s32.totalorder %s22, 0
      %p195 = por %p193, %p194
      %p196 = scmp.ne.s32.totalorder %s182, %s183
      %p197 = scmp.eq.s32.totalorder %s23, 1
      %p198 = por %p196, %p197
      %p200 = scmp.ne.s32.totalorder %s183, %s199
      %p201 = scmp.eq.s32.totalorder %s23, 0
      %p202 = por %p200, %p201
      %p203 = scmp.le.s32.totalorder 1, %s17
      %p204 = scmp.lt.s32.totalorder %s17, 3
      %p205 = pnand %p203, %p204
      %p206 = pneg %p205
      // Predicated region
      $region9: #{ibp_encoder_forward.1} parent=5 // pred_check
        _
      $region10: #{ibp_encoder_forward.1} parent=5 // pred_check_branch
        %208 = sbr.rel (%p205) target = $region12
      $region11: #{ibp_encoder_forward.1} parent=5 // pred_region
        %s209 = ssub.s32 %s17, 1
        // Predicated region
        $region13: #{ibp_encoder_forward.1} parent=11 // pred_check
          %p210 = pneg %p64
        $region14: #{ibp_encoder_forward.1} parent=11 // pred_check_branch
          %212 = sbr.rel (%p210) target = $region16
        $region15: #{ibp_encoder_forward.1} parent=11 // pred_region
          %s214 = ssub.s32 43904, 43904
          %215 = vsyncadd [#allocation3], %s214
          %s216 = sshll.u32 [#allocation2], 4
          %s217 = int_to_ptr.vmem [resolvable:$true] %s216
          %222 = dma.hbm_to_vmem [thread:$0]  %s1, 43904, %s217, [#allocation3], 448, 448, 28
        $region16: #{ibp_encoder_forward.1} parent=11 // pred_fallthru
          _
        // Predicated region
        $region17: #{ibp_encoder_forward.1} parent=11 // pred_check
          %p223 = pneg %p85
        $region18: #{ibp_encoder_forward.1} parent=11 // pred_check_branch
          %225 = sbr.rel (%p223) target = $region20
        $region19: #{ibp_encoder_forward.1} parent=11 // pred_region
          %s227 = ssub.s32 112, 112
          %228 = vsyncadd [#allocation5], %s227
          %s230 = sshll.u32 [#allocation4], 4
          %s231 = int_to_ptr.vmem [resolvable:$true] %s230
          %233 = dma.hbm_to_vmem [thread:$0]  %s2, 112, %s231, [#allocation5]
        $region20: #{ibp_encoder_forward.1} parent=11 // pred_fallthru
          _
        // Predicated region
        $region21: #{ibp_encoder_forward.1} parent=11 // pred_check
          %p234 = pneg %p106
        $region22: #{ibp_encoder_forward.1} parent=11 // pred_check_branch
          %236 = sbr.rel (%p234) target = $region24
        $region23: #{ibp_encoder_forward.1} parent=11 // pred_region
          %s238 = ssub.s32 50176, 50176
          %239 = vsyncadd [#allocation5], %s238
          %s240 = sshll.u32 [#allocation6], 4
          %s241 = int_to_ptr.vmem [resolvable:$true] %s240
          %246 = dma.hbm_to_vmem [thread:$0]  %s3, 50176, %s241, [#allocation5], 448, 448, 28
        $region24: #{ibp_encoder_forward.1} parent=11 // pred_fallthru
          _
        // Predicated region
        $region25: #{ibp_encoder_forward.1} parent=11 // pred_check
          %p247 = pneg %p127
        $region26: #{ibp_encoder_forward.1} parent=11 // pred_check_branch
          %249 = sbr.rel (%p247) target = $region28
        $region27: #{ibp_encoder_forward.1} parent=11 // pred_region
          %s251 = ssub.s32 112, 112
          %252 = vsyncadd [#allocation8], %s251
          %s254 = sshll.u32 [#allocation7], 4
          %s255 = int_to_ptr.vmem [resolvable:$true] %s254
          %257 = dma.hbm_to_vmem [thread:$0]  %s4, 112, %s255, [#allocation8]
        $region28: #{ibp_encoder_forward.1} parent=11 // pred_fallthru
          _
        // Predicated region
        $region29: #{ibp_encoder_forward.1} parent=11 // pred_check
          %p258 = pneg %p148
        $region30: #{ibp_encoder_forward.1} parent=11 // pred_check_branch
          %260 = sbr.rel (%p258) target = $region32
        $region31: #{ibp_encoder_forward.1} parent=11 // pred_region
          %s262 = ssub.s32 7168, 7168
          %263 = vsyncadd [#allocation8], %s262
          %s264 = sshll.u32 [#allocation9], 4
          %s265 = int_to_ptr.vmem [resolvable:$true] %s264
          %270 = dma.hbm_to_vmem [thread:$0]  %s5, 7168, %s265, [#allocation8], 64, 64, 4
        $region32: #{ibp_encoder_forward.1} parent=11 // pred_fallthru
          _
        // Predicated region
        $region33: #{ibp_encoder_forward.1} parent=11 // pred_check
          %p271 = pneg %p169
        $region34: #{ibp_encoder_forward.1} parent=11 // pred_check_branch
          %273 = sbr.rel (%p271) target = $region36
        $region35: #{ibp_encoder_forward.1} parent=11 // pred_region
          %s275 = ssub.s32 16, 16
          %276 = vsyncadd [#allocation11], %s275
          %s278 = sshll.u32 [#allocation10], 4
          %s279 = int_to_ptr.vmem [resolvable:$true] %s278
          %281 = dma.hbm_to_vmem [thread:$0]  %s6, 16, %s279, [#allocation11]
        $region36: #{ibp_encoder_forward.1} parent=11 // pred_fallthru
          _
      $region12: #{ibp_encoder_forward.1} parent=5 // pred_fallthru
        _
      %p282 = scmp.lt.s32.totalorder %s17, 2
      // Predicated region
      $region37: #{ibp_encoder_forward.1} parent=5 // pred_check
        %p283 = pneg %p282
      $region38: #{ibp_encoder_forward.1} parent=5 // pred_check_branch
        %285 = sbr.rel (%p283) target = $region40
      $region39: #{ibp_encoder_forward.1} parent=5 // pred_region
        // Predicated region
        $region41: #{ibp_encoder_forward.1} parent=39 // pred_check
          %p286 = pneg %p37
        $region42: #{ibp_encoder_forward.1} parent=39 // pred_check_branch
          %288 = sbr.rel (%p286) target = $region44
        $region43: #{ibp_encoder_forward.1} parent=39 // pred_region
          %s289 = smul.u32 2, %s17
          %p290 = scmp.lt.s32.totalorder %s289, 3
          %s291 = scalar_select %p290, %s289, 3
          %s292 = smul.addr %s291, 7
          %s293 = smul.addr %s292, 8
          %s294 = scalar_lea.vmem %s0, %s293
          %s295 = smul.u32 2, %s17
        $region44: #{ibp_encoder_forward.1} parent=39 // pred_fallthru
          _
      $region40: #{ibp_encoder_forward.1} parent=5 // pred_fallthru
        _
      %p296 = scmp.le.s32.totalorder 1, %s17
      %p297 = scmp.lt.s32.totalorder %s17, 3
      %p298 = pnand %p296, %p297
      %p299 = pneg %p298
      // Predicated region
      $region45: #{ibp_encoder_forward.1} parent=5 // pred_check
        _
      $region46: #{ibp_encoder_forward.1} parent=5 // pred_check_branch
        %301 = sbr.rel (%p298) target = $region48
      $region47: #{ibp_encoder_forward.1} parent=5 // pred_region
        %s302 = ssub.s32 %s17, 1
        // Predicated region
        $region49: #{ibp_encoder_forward.1} parent=47 // pred_check
          %p303 = pneg %p64
        $region50: #{ibp_encoder_forward.1} parent=47 // pred_check_branch
          %305 = sbr.rel (%p303) target = $region52
        $region51: #{ibp_encoder_forward.1} parent=47 // pred_region
          %306 = dma.done [#allocation3], 43904
        $region52: #{ibp_encoder_forward.1} parent=47 // pred_fallthru
          _
        // Predicated region
        $region53: #{ibp_encoder_forward.1} parent=47 // pred_check
          %p307 = pneg %p85
        $region54: #{ibp_encoder_forward.1} parent=47 // pred_check_branch
          %309 = sbr.rel (%p307) target = $region56
        $region55: #{ibp_encoder_forward.1} parent=47 // pred_region
          %310 = dma.done [#allocation5], 112
        $region56: #{ibp_encoder_forward.1} parent=47 // pred_fallthru
          _
        // Predicated region
        $region57: #{ibp_encoder_forward.1} parent=47 // pred_check
          %p311 = pneg %p106
        $region58: #{ibp_encoder_forward.1} parent=47 // pred_check_branch
          %313 = sbr.rel (%p311) target = $region60
        $region59: #{ibp_encoder_forward.1} parent=47 // pred_region
          %314 = dma.done [#allocation5], 50176
        $region60: #{ibp_encoder_forward.1} parent=47 // pred_fallthru
          _
        // Predicated region
        $region61: #{ibp_encoder_forward.1} parent=47 // pred_check
          %p315 = pneg %p127
        $region62: #{ibp_encoder_forward.1} parent=47 // pred_check_branch
          %317 = sbr.rel (%p315) target = $region64
        $region63: #{ibp_encoder_forward.1} parent=47 // pred_region
          %318 = dma.done [#allocation8], 112
        $region64: #{ibp_encoder_forward.1} parent=47 // pred_fallthru
          _
        // Predicated region
        $region65: #{ibp_encoder_forward.1} parent=47 // pred_check
          %p319 = pneg %p148
        $region66: #{ibp_encoder_forward.1} parent=47 // pred_check_branch
          %321 = sbr.rel (%p319) target = $region68
        $region67: #{ibp_encoder_forward.1} parent=47 // pred_region
          %322 = dma.done [#allocation8], 7168
        $region68: #{ibp_encoder_forward.1} parent=47 // pred_fallthru
          _
        // Predicated region
        $region69: #{ibp_encoder_forward.1} parent=47 // pred_check
          %p323 = pneg %p169
        $region70: #{ibp_encoder_forward.1} parent=47 // pred_check_branch
          %325 = sbr.rel (%p323) target = $region72
        $region71: #{ibp_encoder_forward.1} parent=47 // pred_region
          %326 = dma.done [#allocation11], 16
        $region72: #{ibp_encoder_forward.1} parent=47 // pred_fallthru
          _
        %s327 = smul.u32 2, %s22
        %p328 = scmp.lt.s32.totalorder %s327, 3
        %s329 = scalar_select %p328, %s327, 3
        %s330 = smul.addr %s329, 7
        %s331 = smul.addr %s330, 8
        %s332 = scalar_lea.vmem %s0, %s331
        %p333 = pneg %p43
        %p334 = pneg %p40
        %p335 = pneg %p64
        %p336 = pneg %p61
        %p337 = pneg %p85
        %p338 = pneg %p82
        %p339 = pneg %p106
        %p340 = pneg %p103
        %p341 = pneg %p127
        %p342 = pneg %p124
        %p343 = pneg %p148
        %p344 = pneg %p145
        %p345 = pneg %p169
        %p346 = pneg %p166
        %p347 = pneg %p195
        %p348 = pneg %p192
        %s349 = smul.u32 2, %s22
        %p350 = scmp.lt.s32.totalorder %s349, 3
        %s351 = scalar_select %p350, %s349, 3
        %s352 = smul.addr %s351, 8
        %s353 = scalar_lea.vmem %s7, %s352
        %s354 = smul.u32 2, %s22
        %p355 = scmp.lt.s32.totalorder %s354, 3
        %s356 = scalar_select %p355, %s354, 3
        %s357 = smul.addr %s356, 7
        %s358 = smul.addr %s357, 8
        %s359 = scalar_lea.vmem %s0, %s358
        %s360 = smul.u32 2, %s22
        %s361 = smul.u32 2, %s22
        %p362 = scmp.lt.s32.totalorder %s361, 3
        %s363 = scalar_select %p362, %s361, 3
        %s364 = smul.addr %s363, 8
        %s365 = scalar_lea.vmem %s7, %s364
        %s366 = smul.u32 2, %s22
        %v368 = vld [vmem:[%s359] sm:$0xff]
        %v369 = vld [vmem:[%s359 + $0x8] sm:$0xff]
        %v370 = vld [vmem:[%s359 + $0x10] sm:$0xff]
        %v371 = vld [vmem:[%s359 + $0x18] sm:$0xff]
        %v372 = vld [vmem:[%s359 + $0x20] sm:$0xff]
        %v373 = vld [vmem:[%s359 + $0x28] sm:$0xff]
        %v374 = vld [vmem:[%s359 + $0x30] sm:$0xff]
        %v375 = vld [vmem:[%s359 + $0x38] sm:$0xff]
        %v376 = vld [vmem:[%s359 + $0x40] sm:$0xff]
        %v377 = vld [vmem:[%s359 + $0x48] sm:$0xff]
        %v378 = vld [vmem:[%s359 + $0x50] sm:$0xff]
        %v379 = vld [vmem:[%s359 + $0x58] sm:$0xff]
        %v380 = vld [vmem:[%s359 + $0x60] sm:$0xff]
        %v381 = vld [vmem:[%s359 + $0x68] sm:$0xff]
        %v382 = vpack.c.bf16 %v375, %v368
        %v383 = vpack.c.bf16 %v376, %v369
        %v384 = vpack.c.bf16 %v377, %v370
        %v385 = vpack.c.bf16 %v378, %v371
        %v386 = vpack.c.bf16 %v379, %v372
        %v387 = vpack.c.bf16 %v380, %v373
        %v388 = vpack.c.bf16 %v381, %v374
        %v389 = vld [vmem:[#allocation2] sm:$0xff]
        %v390 = vld [vmem:[#allocation2 + $0x8] sm:$0xff]
        %v391 = vld [vmem:[#allocation2 + $0x10] sm:$0xff]
        %v392 = vld [vmem:[#allocation2 + $0x18] sm:$0xf]
        %v393 = vld [vmem:[#allocation2 + $0x1c] sm:$0xff]
        %v394 = vld [vmem:[#allocation2 + $0x24] sm:$0xff]
        %v395 = vld [vmem:[#allocation2 + $0x2c] sm:$0xff]
        %v396 = vld [vmem:[#allocation2 + $0x34] sm:$0xf]
        %v397 = vld [vmem:[#allocation2 + $0x38] sm:$0xff]
        %v398 = vld [vmem:[#allocation2 + $0x40] sm:$0xff]
        %v399 = vld [vmem:[#allocation2 + $0x48] sm:$0xff]
        %v400 = vld [vmem:[#allocation2 + $0x50] sm:$0xf]
        %v401 = vld [vmem:[#allocation2 + $0x54] sm:$0xff]
        %v402 = vld [vmem:[#allocation2 + $0x5c] sm:$0xff]
        %v403 = vld [vmem:[#allocation2 + $0x64] sm:$0xff]
        %v404 = vld [vmem:[#allocation2 + $0x6c] sm:$0xf]
        %v405 = vld [vmem:[#allocation2 + $0x70] sm:$0xff]
        %v406 = vld [vmem:[#allocation2 + $0x78] sm:$0xff]
        %v407 = vld [vmem:[#allocation2 + $0x80] sm:$0xff]
        %v408 = vld [vmem:[#allocation2 + $0x88] sm:$0xf]
        %v409 = vld [vmem:[#allocation2 + $0x8c] sm:$0xff]
        %v410 = vld [vmem:[#allocation2 + $0x94] sm:$0xff]
        %v411 = vld [vmem:[#allocation2 + $0x9c] sm:$0xff]
        %v412 = vld [vmem:[#allocation2 + $0xa4] sm:$0xf]
        %v413 = vld [vmem:[#allocation2 + $0xa8] sm:$0xff]
        %v414 = vld [vmem:[#allocation2 + $0xb0] sm:$0xff]
        %v415 = vld [vmem:[#allocation2 + $0xb8] sm:$0xff]
        %v416 = vld [vmem:[#allocation2 + $0xc0] sm:$0xf]
        %v417 = vld [vmem:[#allocation2 + $0xc4] sm:$0xff]
        %v418 = vld [vmem:[#allocation2 + $0xcc] sm:$0xff]
        %v419 = vld [vmem:[#allocation2 + $0xd4] sm:$0xff]
        %v420 = vld [vmem:[#allocation2 + $0xdc] sm:$0xf]
        %v421 = vld [vmem:[#allocation2 + $0xe0] sm:$0xff]
        %v422 = vld [vmem:[#allocation2 + $0xe8] sm:$0xff]
        %v423 = vld [vmem:[#allocation2 + $0xf0] sm:$0xff]
        %v424 = vld [vmem:[#allocation2 + $0xf8] sm:$0xf]
        %v425 = vld [vmem:[#allocation2 + $0xfc] sm:$0xff]
        %v426 = vld [vmem:[#allocation2 + $0x104] sm:$0xff]
        %v427 = vld [vmem:[#allocation2 + $0x10c] sm:$0xff]
        %v428 = vld [vmem:[#allocation2 + $0x114] sm:$0xf]
        %v429 = vld [vmem:[#allocation2 + $0x118] sm:$0xff]
        %v430 = vld [vmem:[#allocation2 + $0x120] sm:$0xff]
        %v431 = vld [vmem:[#allocation2 + $0x128] sm:$0xff]
        %v432 = vld [vmem:[#allocation2 + $0x130] sm:$0xf]
        %v433 = vld [vmem:[#allocation2 + $0x134] sm:$0xff]
        %v434 = vld [vmem:[#allocation2 + $0x13c] sm:$0xff]
        %v435 = vld [vmem:[#allocation2 + $0x144] sm:$0xff]
        %v436 = vld [vmem:[#allocation2 + $0x14c] sm:$0xf]
        %v437 = vld [vmem:[#allocation2 + $0x150] sm:$0xff]
        %v438 = vld [vmem:[#allocation2 + $0x158] sm:$0xff]
        %v439 = vld [vmem:[#allocation2 + $0x160] sm:$0xff]
        %v440 = vld [vmem:[#allocation2 + $0x168] sm:$0xf]
        %v441 = vld [vmem:[#allocation2 + $0x16c] sm:$0xff]
        %v442 = vld [vmem:[#allocation2 + $0x174] sm:$0xff]
        %v443 = vld [vmem:[#allocation2 + $0x17c] sm:$0xff]
        %v444 = vld [vmem:[#allocation2 + $0x184] sm:$0xf]
        %v445 = vld [vmem:[#allocation2 + $0x188] sm:$0xff]
        %v446 = vld [vmem:[#allocation2 + $0x190] sm:$0xff]
        %v447 = vld [vmem:[#allocation2 + $0x198] sm:$0xff]
        %v448 = vld [vmem:[#allocation2 + $0x1a0] sm:$0xf]
        %v449 = vld [vmem:[#allocation2 + $0x1a4] sm:$0xff]
        %v450 = vld [vmem:[#allocation2 + $0x1ac] sm:$0xff]
        %v451 = vld [vmem:[#allocation2 + $0x1b4] sm:$0xff]
        %v452 = vld [vmem:[#allocation2 + $0x1bc] sm:$0xf]
        %v453 = vld [vmem:[#allocation2 + $0x1c0] sm:$0xff]
        %v454 = vld [vmem:[#allocation2 + $0x1c8] sm:$0xff]
        %v455 = vld [vmem:[#allocation2 + $0x1d0] sm:$0xff]
        %v456 = vld [vmem:[#allocation2 + $0x1d8] sm:$0xf]
        %v457 = vld [vmem:[#allocation2 + $0x1dc] sm:$0xff]
        %v458 = vld [vmem:[#allocation2 + $0x1e4] sm:$0xff]
        %v459 = vld [vmem:[#allocation2 + $0x1ec] sm:$0xff]
        %v460 = vld [vmem:[#allocation2 + $0x1f4] sm:$0xf]
        %v461 = vld [vmem:[#allocation2 + $0x1f8] sm:$0xff]
        %v462 = vld [vmem:[#allocation2 + $0x200] sm:$0xff]
        %v463 = vld [vmem:[#allocation2 + $0x208] sm:$0xff]
        %v464 = vld [vmem:[#allocation2 + $0x210] sm:$0xf]
        %v465 = vld [vmem:[#allocation2 + $0x214] sm:$0xff]
        %v466 = vld [vmem:[#allocation2 + $0x21c] sm:$0xff]
        %v467 = vld [vmem:[#allocation2 + $0x224] sm:$0xff]
        %v468 = vld [vmem:[#allocation2 + $0x22c] sm:$0xf]
        %v469 = vld [vmem:[#allocation2 + $0x230] sm:$0xff]
        %v470 = vld [vmem:[#allocation2 + $0x238] sm:$0xff]
        %v471 = vld [vmem:[#allocation2 + $0x240] sm:$0xff]
        %v472 = vld [vmem:[#allocation2 + $0x248] sm:$0xf]
        %v473 = vld [vmem:[#allocation2 + $0x24c] sm:$0xff]
        %v474 = vld [vmem:[#allocation2 + $0x254] sm:$0xff]
        %v475 = vld [vmem:[#allocation2 + $0x25c] sm:$0xff]
        %v476 = vld [vmem:[#allocation2 + $0x264] sm:$0xf]
        %v477 = vld [vmem:[#allocation2 + $0x268] sm:$0xff]
        %v478 = vld [vmem:[#allocation2 + $0x270] sm:$0xff]
        %v479 = vld [vmem:[#allocation2 + $0x278] sm:$0xff]
        %v480 = vld [vmem:[#allocation2 + $0x280] sm:$0xf]
        %v481 = vld [vmem:[#allocation2 + $0x284] sm:$0xff]
        %v482 = vld [vmem:[#allocation2 + $0x28c] sm:$0xff]
        %v483 = vld [vmem:[#allocation2 + $0x294] sm:$0xff]
        %v484 = vld [vmem:[#allocation2 + $0x29c] sm:$0xf]
        %v485 = vld [vmem:[#allocation2 + $0x2a0] sm:$0xff]
        %v486 = vld [vmem:[#allocation2 + $0x2a8] sm:$0xff]
        %v487 = vld [vmem:[#allocation2 + $0x2b0] sm:$0xff]
        %v488 = vld [vmem:[#allocation2 + $0x2b8] sm:$0xf]
        %v489 = vld [vmem:[#allocation2 + $0x2bc] sm:$0xff]
        %v490 = vld [vmem:[#allocation2 + $0x2c4] sm:$0xff]
        %v491 = vld [vmem:[#allocation2 + $0x2cc] sm:$0xff]
        %v492 = vld [vmem:[#allocation2 + $0x2d4] sm:$0xf]
        %v493 = vld [vmem:[#allocation2 + $0x2d8] sm:$0xff]
        %v494 = vld [vmem:[#allocation2 + $0x2e0] sm:$0xff]
        %v495 = vld [vmem:[#allocation2 + $0x2e8] sm:$0xff]
        %v496 = vld [vmem:[#allocation2 + $0x2f0] sm:$0xf]
        %v497 = vld [vmem:[#allocation2 + $0x2f4] sm:$0xff]
        %v498 = vld [vmem:[#allocation2 + $0x2fc] sm:$0xff]
        %v499 = vld [vmem:[#allocation2 + $0x304] sm:$0xff]
        %v500 = vld [vmem:[#allocation2 + $0x30c] sm:$0xf]
        %v501 = vld [vmem:[#allocation2 + $0x310] sm:$0xff]
        %v502 = vld [vmem:[#allocation2 + $0x318] sm:$0xff]
        %v503 = vld [vmem:[#allocation2 + $0x320] sm:$0xff]
        %v504 = vld [vmem:[#allocation2 + $0x328] sm:$0xf]
        %v505 = vld [vmem:[#allocation2 + $0x32c] sm:$0xff]
        %v506 = vld [vmem:[#allocation2 + $0x334] sm:$0xff]
        %v507 = vld [vmem:[#allocation2 + $0x33c] sm:$0xff]
        %v508 = vld [vmem:[#allocation2 + $0x344] sm:$0xf]
        %v509 = vld [vmem:[#allocation2 + $0x348] sm:$0xff]
        %v510 = vld [vmem:[#allocation2 + $0x350] sm:$0xff]
        %v511 = vld [vmem:[#allocation2 + $0x358] sm:$0xff]
        %v512 = vld [vmem:[#allocation2 + $0x360] sm:$0xf]
        %v513 = vld [vmem:[#allocation2 + $0x364] sm:$0xff]
        %v514 = vld [vmem:[#allocation2 + $0x36c] sm:$0xff]
        %v515 = vld [vmem:[#allocation2 + $0x374] sm:$0xff]
        %v516 = vld [vmem:[#allocation2 + $0x37c] sm:$0xf]
        %v517 = vld [vmem:[#allocation2 + $0x380] sm:$0xff]
        %v518 = vld [vmem:[#allocation2 + $0x388] sm:$0xff]
        %v519 = vld [vmem:[#allocation2 + $0x390] sm:$0xff]
        %v520 = vld [vmem:[#allocation2 + $0x398] sm:$0xf]
        %v521 = vld [vmem:[#allocation2 + $0x39c] sm:$0xff]
        %v522 = vld [vmem:[#allocation2 + $0x3a4] sm:$0xff]
        %v523 = vld [vmem:[#allocation2 + $0x3ac] sm:$0xff]
        %v524 = vld [vmem:[#allocation2 + $0x3b4] sm:$0xf]
        %v525 = vld [vmem:[#allocation2 + $0x3b8] sm:$0xff]
        %v526 = vld [vmem:[#allocation2 + $0x3c0] sm:$0xff]
        %v527 = vld [vmem:[#allocation2 + $0x3c8] sm:$0xff]
        %v528 = vld [vmem:[#allocation2 + $0x3d0] sm:$0xf]
        %v529 = vld [vmem:[#allocation2 + $0x3d4] sm:$0xff]
        %v530 = vld [vmem:[#allocation2 + $0x3dc] sm:$0xff]
        %v531 = vld [vmem:[#allocation2 + $0x3e4] sm:$0xff]
        %v532 = vld [vmem:[#allocation2 + $0x3ec] sm:$0xf]
        %v533 = vld [vmem:[#allocation2 + $0x3f0] sm:$0xff]
        %v534 = vld [vmem:[#allocation2 + $0x3f8] sm:$0xff]
        %v535 = vld [vmem:[#allocation2 + $0x400] sm:$0xff]
        %v536 = vld [vmem:[#allocation2 + $0x408] sm:$0xf]
        %v537 = vld [vmem:[#allocation2 + $0x40c] sm:$0xff]
        %v538 = vld [vmem:[#allocation2 + $0x414] sm:$0xff]
        %v539 = vld [vmem:[#allocation2 + $0x41c] sm:$0xff]
        %v540 = vld [vmem:[#allocation2 + $0x424] sm:$0xf]
        %v541 = vld [vmem:[#allocation2 + $0x428] sm:$0xff]
        %v542 = vld [vmem:[#allocation2 + $0x430] sm:$0xff]
        %v543 = vld [vmem:[#allocation2 + $0x438] sm:$0xff]
        %v544 = vld [vmem:[#allocation2 + $0x440] sm:$0xf]
        %v545 = vld [vmem:[#allocation2 + $0x444] sm:$0xff]
        %v546 = vld [vmem:[#allocation2 + $0x44c] sm:$0xff]
        %v547 = vld [vmem:[#allocation2 + $0x454] sm:$0xff]
        %v548 = vld [vmem:[#allocation2 + $0x45c] sm:$0xf]
        %v549 = vld [vmem:[#allocation2 + $0x460] sm:$0xff]
        %v550 = vld [vmem:[#allocation2 + $0x468] sm:$0xff]
        %v551 = vld [vmem:[#allocation2 + $0x470] sm:$0xff]
        %v552 = vld [vmem:[#allocation2 + $0x478] sm:$0xf]
        %v553 = vld [vmem:[#allocation2 + $0x47c] sm:$0xff]
        %v554 = vld [vmem:[#allocation2 + $0x484] sm:$0xff]
        %v555 = vld [vmem:[#allocation2 + $0x48c] sm:$0xff]
        %v556 = vld [vmem:[#allocation2 + $0x494] sm:$0xf]
        %v557 = vld [vmem:[#allocation2 + $0x498] sm:$0xff]
        %v558 = vld [vmem:[#allocation2 + $0x4a0] sm:$0xff]
        %v559 = vld [vmem:[#allocation2 + $0x4a8] sm:$0xff]
        %v560 = vld [vmem:[#allocation2 + $0x4b0] sm:$0xf]
        %v561 = vld [vmem:[#allocation2 + $0x4b4] sm:$0xff]
        %v562 = vld [vmem:[#allocation2 + $0x4bc] sm:$0xff]
        %v563 = vld [vmem:[#allocation2 + $0x4c4] sm:$0xff]
        %v564 = vld [vmem:[#allocation2 + $0x4cc] sm:$0xf]
        %v565 = vld [vmem:[#allocation2 + $0x4d0] sm:$0xff]
        %v566 = vld [vmem:[#allocation2 + $0x4d8] sm:$0xff]
        %v567 = vld [vmem:[#allocation2 + $0x4e0] sm:$0xff]
        %v568 = vld [vmem:[#allocation2 + $0x4e8] sm:$0xf]
        %v569 = vld [vmem:[#allocation2 + $0x4ec] sm:$0xff]
        %v570 = vld [vmem:[#allocation2 + $0x4f4] sm:$0xff]
        %v571 = vld [vmem:[#allocation2 + $0x4fc] sm:$0xff]
        %v572 = vld [vmem:[#allocation2 + $0x504] sm:$0xf]
        %v573 = vld [vmem:[#allocation2 + $0x508] sm:$0xff]
        %v574 = vld [vmem:[#allocation2 + $0x510] sm:$0xff]
        %v575 = vld [vmem:[#allocation2 + $0x518] sm:$0xff]
        %v576 = vld [vmem:[#allocation2 + $0x520] sm:$0xf]
        %v577 = vld [vmem:[#allocation2 + $0x524] sm:$0xff]
        %v578 = vld [vmem:[#allocation2 + $0x52c] sm:$0xff]
        %v579 = vld [vmem:[#allocation2 + $0x534] sm:$0xff]
        %v580 = vld [vmem:[#allocation2 + $0x53c] sm:$0xf]
        %v581 = vld [vmem:[#allocation2 + $0x540] sm:$0xff]
        %v582 = vld [vmem:[#allocation2 + $0x548] sm:$0xff]
        %v583 = vld [vmem:[#allocation2 + $0x550] sm:$0xff]
        %v584 = vld [vmem:[#allocation2 + $0x558] sm:$0xf]
        %v585 = vld [vmem:[#allocation2 + $0x55c] sm:$0xff]
        %v586 = vld [vmem:[#allocation2 + $0x564] sm:$0xff]
        %v587 = vld [vmem:[#allocation2 + $0x56c] sm:$0xff]
        %v588 = vld [vmem:[#allocation2 + $0x574] sm:$0xf]
        %v589 = vld [vmem:[#allocation2 + $0x578] sm:$0xff]
        %v590 = vld [vmem:[#allocation2 + $0x580] sm:$0xff]
        %v591 = vld [vmem:[#allocation2 + $0x588] sm:$0xff]
        %v592 = vld [vmem:[#allocation2 + $0x590] sm:$0xf]
        %v593 = vld [vmem:[#allocation2 + $0x594] sm:$0xff]
        %v594 = vld [vmem:[#allocation2 + $0x59c] sm:$0xff]
        %v595 = vld [vmem:[#allocation2 + $0x5a4] sm:$0xff]
        %v596 = vld [vmem:[#allocation2 + $0x5ac] sm:$0xf]
        %v597 = vld [vmem:[#allocation2 + $0x5b0] sm:$0xff]
        %v598 = vld [vmem:[#allocation2 + $0x5b8] sm:$0xff]
        %v599 = vld [vmem:[#allocation2 + $0x5c0] sm:$0xff]
        %v600 = vld [vmem:[#allocation2 + $0x5c8] sm:$0xf]
        %v601 = vld [vmem:[#allocation2 + $0x5cc] sm:$0xff]
        %v602 = vld [vmem:[#allocation2 + $0x5d4] sm:$0xff]
        %v603 = vld [vmem:[#allocation2 + $0x5dc] sm:$0xff]
        %v604 = vld [vmem:[#allocation2 + $0x5e4] sm:$0xf]
        %v605 = vld [vmem:[#allocation2 + $0x5e8] sm:$0xff]
        %v606 = vld [vmem:[#allocation2 + $0x5f0] sm:$0xff]
        %v607 = vld [vmem:[#allocation2 + $0x5f8] sm:$0xff]
        %v608 = vld [vmem:[#allocation2 + $0x600] sm:$0xf]
        %v609 = vld [vmem:[#allocation2 + $0x604] sm:$0xff]
        %v610 = vld [vmem:[#allocation2 + $0x60c] sm:$0xff]
        %v611 = vld [vmem:[#allocation2 + $0x614] sm:$0xff]
        %v612 = vld [vmem:[#allocation2 + $0x61c] sm:$0xf]
        %v613 = vld [vmem:[#allocation2 + $0x620] sm:$0xff]
        %v614 = vld [vmem:[#allocation2 + $0x628] sm:$0xff]
        %v615 = vld [vmem:[#allocation2 + $0x630] sm:$0xff]
        %v616 = vld [vmem:[#allocation2 + $0x638] sm:$0xf]
        %v617 = vld [vmem:[#allocation2 + $0x63c] sm:$0xff]
        %v618 = vld [vmem:[#allocation2 + $0x644] sm:$0xff]
        %v619 = vld [vmem:[#allocation2 + $0x64c] sm:$0xff]
        %v620 = vld [vmem:[#allocation2 + $0x654] sm:$0xf]
        %v621 = vld [vmem:[#allocation2 + $0x658] sm:$0xff]
        %v622 = vld [vmem:[#allocation2 + $0x660] sm:$0xff]
        %v623 = vld [vmem:[#allocation2 + $0x668] sm:$0xff]
        %v624 = vld [vmem:[#allocation2 + $0x670] sm:$0xf]
        %v625 = vld [vmem:[#allocation2 + $0x674] sm:$0xff]
        %v626 = vld [vmem:[#allocation2 + $0x67c] sm:$0xff]
        %v627 = vld [vmem:[#allocation2 + $0x684] sm:$0xff]
        %v628 = vld [vmem:[#allocation2 + $0x68c] sm:$0xf]
        %v629 = vld [vmem:[#allocation2 + $0x690] sm:$0xff]
        %v630 = vld [vmem:[#allocation2 + $0x698] sm:$0xff]
        %v631 = vld [vmem:[#allocation2 + $0x6a0] sm:$0xff]
        %v632 = vld [vmem:[#allocation2 + $0x6a8] sm:$0xf]
        %v633 = vld [vmem:[#allocation2 + $0x6ac] sm:$0xff]
        %v634 = vld [vmem:[#allocation2 + $0x6b4] sm:$0xff]
        %v635 = vld [vmem:[#allocation2 + $0x6bc] sm:$0xff]
        %v636 = vld [vmem:[#allocation2 + $0x6c4] sm:$0xf]
        %v637 = vld [vmem:[#allocation2 + $0x6c8] sm:$0xff]
        %v638 = vld [vmem:[#allocation2 + $0x6d0] sm:$0xff]
        %v639 = vld [vmem:[#allocation2 + $0x6d8] sm:$0xff]
        %v640 = vld [vmem:[#allocation2 + $0x6e0] sm:$0xf]
        %v641 = vld [vmem:[#allocation2 + $0x6e4] sm:$0xff]
        %v642 = vld [vmem:[#allocation2 + $0x6ec] sm:$0xff]
        %v643 = vld [vmem:[#allocation2 + $0x6f4] sm:$0xff]
        %v644 = vld [vmem:[#allocation2 + $0x6fc] sm:$0xf]
        %v645 = vld [vmem:[#allocation2 + $0x700] sm:$0xff]
        %v646 = vld [vmem:[#allocation2 + $0x708] sm:$0xff]
        %v647 = vld [vmem:[#allocation2 + $0x710] sm:$0xff]
        %v648 = vld [vmem:[#allocation2 + $0x718] sm:$0xf]
        %v649 = vld [vmem:[#allocation2 + $0x71c] sm:$0xff]
        %v650 = vld [vmem:[#allocation2 + $0x724] sm:$0xff]
        %v651 = vld [vmem:[#allocation2 + $0x72c] sm:$0xff]
        %v652 = vld [vmem:[#allocation2 + $0x734] sm:$0xf]
        %v653 = vld [vmem:[#allocation2 + $0x738] sm:$0xff]
        %v654 = vld [vmem:[#allocation2 + $0x740] sm:$0xff]
        %v655 = vld [vmem:[#allocation2 + $0x748] sm:$0xff]
        %v656 = vld [vmem:[#allocation2 + $0x750] sm:$0xf]
        %v657 = vld [vmem:[#allocation2 + $0x754] sm:$0xff]
        %v658 = vld [vmem:[#allocation2 + $0x75c] sm:$0xff]
        %v659 = vld [vmem:[#allocation2 + $0x764] sm:$0xff]
        %v660 = vld [vmem:[#allocation2 + $0x76c] sm:$0xf]
        %v661 = vld [vmem:[#allocation2 + $0x770] sm:$0xff]
        %v662 = vld [vmem:[#allocation2 + $0x778] sm:$0xff]
        %v663 = vld [vmem:[#allocation2 + $0x780] sm:$0xff]
        %v664 = vld [vmem:[#allocation2 + $0x788] sm:$0xf]
        %v665 = vld [vmem:[#allocation2 + $0x78c] sm:$0xff]
        %v666 = vld [vmem:[#allocation2 + $0x794] sm:$0xff]
        %v667 = vld [vmem:[#allocation2 + $0x79c] sm:$0xff]
        %v668 = vld [vmem:[#allocation2 + $0x7a4] sm:$0xf]
        %v669 = vld [vmem:[#allocation2 + $0x7a8] sm:$0xff]
        %v670 = vld [vmem:[#allocation2 + $0x7b0] sm:$0xff]
        %v671 = vld [vmem:[#allocation2 + $0x7b8] sm:$0xff]
        %v672 = vld [vmem:[#allocation2 + $0x7c0] sm:$0xf]
        %v673 = vld [vmem:[#allocation2 + $0x7c4] sm:$0xff]
        %v674 = vld [vmem:[#allocation2 + $0x7cc] sm:$0xff]
        %v675 = vld [vmem:[#allocation2 + $0x7d4] sm:$0xff]
        %v676 = vld [vmem:[#allocation2 + $0x7dc] sm:$0xf]
        %v677 = vld [vmem:[#allocation2 + $0x7e0] sm:$0xff]
        %v678 = vld [vmem:[#allocation2 + $0x7e8] sm:$0xff]
        %v679 = vld [vmem:[#allocation2 + $0x7f0] sm:$0xff]
        %v680 = vld [vmem:[#allocation2 + $0x7f8] sm:$0xf]
        %v681 = vld [vmem:[#allocation2 + $0x7fc] sm:$0xff]
        %v682 = vld [vmem:[#allocation2 + $0x804] sm:$0xff]
        %v683 = vld [vmem:[#allocation2 + $0x80c] sm:$0xff]
        %v684 = vld [vmem:[#allocation2 + $0x814] sm:$0xf]
        %v685 = vld [vmem:[#allocation2 + $0x818] sm:$0xff]
        %v686 = vld [vmem:[#allocation2 + $0x820] sm:$0xff]
        %v687 = vld [vmem:[#allocation2 + $0x828] sm:$0xff]
        %v688 = vld [vmem:[#allocation2 + $0x830] sm:$0xf]
        %v689 = vld [vmem:[#allocation2 + $0x834] sm:$0xff]
        %v690 = vld [vmem:[#allocation2 + $0x83c] sm:$0xff]
        %v691 = vld [vmem:[#allocation2 + $0x844] sm:$0xff]
        %v692 = vld [vmem:[#allocation2 + $0x84c] sm:$0xf]
        %v693 = vld [vmem:[#allocation2 + $0x850] sm:$0xff]
        %v694 = vld [vmem:[#allocation2 + $0x858] sm:$0xff]
        %v695 = vld [vmem:[#allocation2 + $0x860] sm:$0xff]
        %v696 = vld [vmem:[#allocation2 + $0x868] sm:$0xf]
        %v697 = vld [vmem:[#allocation2 + $0x86c] sm:$0xff]
        %v698 = vld [vmem:[#allocation2 + $0x874] sm:$0xff]
        %v699 = vld [vmem:[#allocation2 + $0x87c] sm:$0xff]
        %v700 = vld [vmem:[#allocation2 + $0x884] sm:$0xf]
        %v701 = vld [vmem:[#allocation2 + $0x888] sm:$0xff]
        %v702 = vld [vmem:[#allocation2 + $0x890] sm:$0xff]
        %v703 = vld [vmem:[#allocation2 + $0x898] sm:$0xff]
        %v704 = vld [vmem:[#allocation2 + $0x8a0] sm:$0xf]
        %v705 = vld [vmem:[#allocation2 + $0x8a4] sm:$0xff]
        %v706 = vld [vmem:[#allocation2 + $0x8ac] sm:$0xff]
        %v707 = vld [vmem:[#allocation2 + $0x8b4] sm:$0xff]
        %v708 = vld [vmem:[#allocation2 + $0x8bc] sm:$0xf]
        %v709 = vld [vmem:[#allocation2 + $0x8c0] sm:$0xff]
        %v710 = vld [vmem:[#allocation2 + $0x8c8] sm:$0xff]
        %v711 = vld [vmem:[#allocation2 + $0x8d0] sm:$0xff]
        %v712 = vld [vmem:[#allocation2 + $0x8d8] sm:$0xf]
        %v713 = vld [vmem:[#allocation2 + $0x8dc] sm:$0xff]
        %v714 = vld [vmem:[#allocation2 + $0x8e4] sm:$0xff]
        %v715 = vld [vmem:[#allocation2 + $0x8ec] sm:$0xff]
        %v716 = vld [vmem:[#allocation2 + $0x8f4] sm:$0xf]
        %v717 = vld [vmem:[#allocation2 + $0x8f8] sm:$0xff]
        %v718 = vld [vmem:[#allocation2 + $0x900] sm:$0xff]
        %v719 = vld [vmem:[#allocation2 + $0x908] sm:$0xff]
        %v720 = vld [vmem:[#allocation2 + $0x910] sm:$0xf]
        %v721 = vld [vmem:[#allocation2 + $0x914] sm:$0xff]
        %v722 = vld [vmem:[#allocation2 + $0x91c] sm:$0xff]
        %v723 = vld [vmem:[#allocation2 + $0x924] sm:$0xff]
        %v724 = vld [vmem:[#allocation2 + $0x92c] sm:$0xf]
        %v725 = vld [vmem:[#allocation2 + $0x930] sm:$0xff]
        %v726 = vld [vmem:[#allocation2 + $0x938] sm:$0xff]
        %v727 = vld [vmem:[#allocation2 + $0x940] sm:$0xff]
        %v728 = vld [vmem:[#allocation2 + $0x948] sm:$0xf]
        %v729 = vld [vmem:[#allocation2 + $0x94c] sm:$0xff]
        %v730 = vld [vmem:[#allocation2 + $0x954] sm:$0xff]
        %v731 = vld [vmem:[#allocation2 + $0x95c] sm:$0xff]
        %v732 = vld [vmem:[#allocation2 + $0x964] sm:$0xf]
        %v733 = vld [vmem:[#allocation2 + $0x968] sm:$0xff]
        %v734 = vld [vmem:[#allocation2 + $0x970] sm:$0xff]
        %v735 = vld [vmem:[#allocation2 + $0x978] sm:$0xff]
        %v736 = vld [vmem:[#allocation2 + $0x980] sm:$0xf]
        %v737 = vld [vmem:[#allocation2 + $0x984] sm:$0xff]
        %v738 = vld [vmem:[#allocation2 + $0x98c] sm:$0xff]
        %v739 = vld [vmem:[#allocation2 + $0x994] sm:$0xff]
        %v740 = vld [vmem:[#allocation2 + $0x99c] sm:$0xf]
        %v741 = vld [vmem:[#allocation2 + $0x9a0] sm:$0xff]
        %v742 = vld [vmem:[#allocation2 + $0x9a8] sm:$0xff]
        %v743 = vld [vmem:[#allocation2 + $0x9b0] sm:$0xff]
        %v744 = vld [vmem:[#allocation2 + $0x9b8] sm:$0xf]
        %v745 = vld [vmem:[#allocation2 + $0x9bc] sm:$0xff]
        %v746 = vld [vmem:[#allocation2 + $0x9c4] sm:$0xff]
        %v747 = vld [vmem:[#allocation2 + $0x9cc] sm:$0xff]
        %v748 = vld [vmem:[#allocation2 + $0x9d4] sm:$0xf]
        %v749 = vld [vmem:[#allocation2 + $0x9d8] sm:$0xff]
        %v750 = vld [vmem:[#allocation2 + $0x9e0] sm:$0xff]
        %v751 = vld [vmem:[#allocation2 + $0x9e8] sm:$0xff]
        %v752 = vld [vmem:[#allocation2 + $0x9f0] sm:$0xf]
        %v753 = vld [vmem:[#allocation2 + $0x9f4] sm:$0xff]
        %v754 = vld [vmem:[#allocation2 + $0x9fc] sm:$0xff]
        %v755 = vld [vmem:[#allocation2 + $0xa04] sm:$0xff]
        %v756 = vld [vmem:[#allocation2 + $0xa0c] sm:$0xf]
        %v757 = vld [vmem:[#allocation2 + $0xa10] sm:$0xff]
        %v758 = vld [vmem:[#allocation2 + $0xa18] sm:$0xff]
        %v759 = vld [vmem:[#allocation2 + $0xa20] sm:$0xff]
        %v760 = vld [vmem:[#allocation2 + $0xa28] sm:$0xf]
        %v761 = vld [vmem:[#allocation2 + $0xa2c] sm:$0xff]
        %v762 = vld [vmem:[#allocation2 + $0xa34] sm:$0xff]
        %v763 = vld [vmem:[#allocation2 + $0xa3c] sm:$0xff]
        %v764 = vld [vmem:[#allocation2 + $0xa44] sm:$0xf]
        %v765 = vld [vmem:[#allocation2 + $0xa48] sm:$0xff]
        %v766 = vld [vmem:[#allocation2 + $0xa50] sm:$0xff]
        %v767 = vld [vmem:[#allocation2 + $0xa58] sm:$0xff]
        %v768 = vld [vmem:[#allocation2 + $0xa60] sm:$0xf]
        %v769 = vld [vmem:[#allocation2 + $0xa64] sm:$0xff]
        %v770 = vld [vmem:[#allocation2 + $0xa6c] sm:$0xff]
        %v771 = vld [vmem:[#allocation2 + $0xa74] sm:$0xff]
        %v772 = vld [vmem:[#allocation2 + $0xa7c] sm:$0xf]
        %v773 = vld [vmem:[#allocation2 + $0xa80] sm:$0xff]
        %v774 = vld [vmem:[#allocation2 + $0xa88] sm:$0xff]
        %v775 = vld [vmem:[#allocation2 + $0xa90] sm:$0xff]
        %v776 = vld [vmem:[#allocation2 + $0xa98] sm:$0xf]
        %v777 = vld [vmem:[#allocation2 + $0xa9c] sm:$0xff]
        %v778 = vld [vmem:[#allocation2 + $0xaa4] sm:$0xff]
        %v779 = vld [vmem:[#allocation2 + $0xaac] sm:$0xff]
        %v780 = vld [vmem:[#allocation2 + $0xab4] sm:$0xf]
        %v781 = vld [vmem:[#allocation4] sm:$0xff]
        %v783 = vlaneseq
        %v784 = vshrl.u32 %v783, 7
        %v785 = vsub.s32 0, %v784
        %v786 = vrot.slane %v781, %v785
        %v787 = vlaneseq
        %v788 = vshrl.u32 %v787, 7
        %v789 = vsub.s32 1, %v788
        %v790 = vrot.slane %v781, %v789
        %v791 = vlaneseq
        %v792 = vshrl.u32 %v791, 7
        %v793 = vsub.s32 2, %v792
        %v794 = vrot.slane %v781, %v793
        %v795 = vlaneseq
        %v796 = vshrl.u32 %v795, 7
        %v797 = vsub.s32 3, %v796
        %v798 = vrot.slane %v781, %v797
        %v799 = vlaneseq
        %v800 = vshrl.u32 %v799, 7
        %v801 = vsub.s32 4, %v800
        %v802 = vrot.slane %v781, %v801
        %v803 = vlaneseq
        %v804 = vshrl.u32 %v803, 7
        %v805 = vsub.s32 5, %v804
        %v806 = vrot.slane %v781, %v805
        %v807 = vlaneseq
        %v808 = vshrl.u32 %v807, 7
        %v809 = vsub.s32 6, %v808
        %v810 = vrot.slane %v781, %v809
        %v1210 = vunpack.c.l.b16 %v389
        %v1211 = vunpack.c.h.b16 %v389
        %v1212 = vunpack.c.l.b16 %v390
        %v1213 = vunpack.c.h.b16 %v390
        %v1214 = vunpack.c.l.b16 %v391
        %v1215 = vunpack.c.h.b16 %v391
        %v1216 = vunpack.c.l.b16 %v392
        %v1217 = vunpack.c.l.b16 %v393
        %v1218 = vunpack.c.h.b16 %v393
        %v1219 = vunpack.c.l.b16 %v394
        %v1220 = vunpack.c.h.b16 %v394
        %v1221 = vunpack.c.l.b16 %v395
        %v1222 = vunpack.c.h.b16 %v395
        %v1223 = vunpack.c.l.b16 %v396
        %v1224 = vunpack.c.l.b16 %v397
        %v1225 = vunpack.c.h.b16 %v397
        %v1226 = vunpack.c.l.b16 %v398
        %v1227 = vunpack.c.h.b16 %v398
        %v1228 = vunpack.c.l.b16 %v399
        %v1229 = vunpack.c.h.b16 %v399
        %v1230 = vunpack.c.l.b16 %v400
        %v1231 = vunpack.c.l.b16 %v401
        %v1232 = vunpack.c.h.b16 %v401
        %v1233 = vunpack.c.l.b16 %v402
        %v1234 = vunpack.c.h.b16 %v402
        %v1235 = vunpack.c.l.b16 %v403
        %v1236 = vunpack.c.h.b16 %v403
        %v1237 = vunpack.c.l.b16 %v404
        %v1238 = vunpack.c.l.b16 %v405
        %v1239 = vunpack.c.h.b16 %v405
        %v1240 = vunpack.c.l.b16 %v406
        %v1241 = vunpack.c.h.b16 %v406
        %v1242 = vunpack.c.l.b16 %v407
        %v1243 = vunpack.c.h.b16 %v407
        %v1244 = vunpack.c.l.b16 %v408
        %v1245 = vunpack.c.l.b16 %v409
        %v1246 = vunpack.c.h.b16 %v409
        %v1247 = vunpack.c.l.b16 %v410
        %v1248 = vunpack.c.h.b16 %v410
        %v1249 = vunpack.c.l.b16 %v411
        %v1250 = vunpack.c.h.b16 %v411
        %v1251 = vunpack.c.l.b16 %v412
        %v1252 = vunpack.c.l.b16 %v413
        %v1253 = vunpack.c.h.b16 %v413
        %v1254 = vunpack.c.l.b16 %v414
        %v1255 = vunpack.c.h.b16 %v414
        %v1256 = vunpack.c.l.b16 %v415
        %v1257 = vunpack.c.h.b16 %v415
        %v1258 = vunpack.c.l.b16 %v416
        %v1259 = vunpack.c.l.b16 %v417
        %v1260 = vunpack.c.h.b16 %v417
        %v1261 = vunpack.c.l.b16 %v418
        %v1262 = vunpack.c.h.b16 %v418
        %v1263 = vunpack.c.l.b16 %v419
        %v1264 = vunpack.c.h.b16 %v419
        %v1265 = vunpack.c.l.b16 %v420
        %v1266 = vunpack.c.l.b16 %v421
        %v1267 = vunpack.c.h.b16 %v421
        %v1268 = vunpack.c.l.b16 %v422
        %v1269 = vunpack.c.h.b16 %v422
        %v1270 = vunpack.c.l.b16 %v423
        %v1271 = vunpack.c.h.b16 %v423
        %v1272 = vunpack.c.l.b16 %v424
        %v1273 = vunpack.c.l.b16 %v425
        %v1274 = vunpack.c.h.b16 %v425
        %v1275 = vunpack.c.l.b16 %v426
        %v1276 = vunpack.c.h.b16 %v426
        %v1277 = vunpack.c.l.b16 %v427
        %v1278 = vunpack.c.h.b16 %v427
        %v1279 = vunpack.c.l.b16 %v428
        %v1280 = vunpack.c.l.b16 %v429
        %v1281 = vunpack.c.h.b16 %v429
        %v1282 = vunpack.c.l.b16 %v430
        %v1283 = vunpack.c.h.b16 %v430
        %v1284 = vunpack.c.l.b16 %v431
        %v1285 = vunpack.c.h.b16 %v431
        %v1286 = vunpack.c.l.b16 %v432
        %v1287 = vunpack.c.l.b16 %v433
        %v1288 = vunpack.c.h.b16 %v433
        %v1289 = vunpack.c.l.b16 %v434
        %v1290 = vunpack.c.h.b16 %v434
        %v1291 = vunpack.c.l.b16 %v435
        %v1292 = vunpack.c.h.b16 %v435
        %v1293 = vunpack.c.l.b16 %v436
        %v1294 = vunpack.c.l.b16 %v437
        %v1295 = vunpack.c.h.b16 %v437
        %v1296 = vunpack.c.l.b16 %v438
        %v1297 = vunpack.c.h.b16 %v438
        %v1298 = vunpack.c.l.b16 %v439
        %v1299 = vunpack.c.h.b16 %v439
        %v1300 = vunpack.c.l.b16 %v440
        %v1301 = vunpack.c.l.b16 %v441
        %v1302 = vunpack.c.h.b16 %v441
        %v1303 = vunpack.c.l.b16 %v442
        %v1304 = vunpack.c.h.b16 %v442
        %v1305 = vunpack.c.l.b16 %v443
        %v1306 = vunpack.c.h.b16 %v443
        %v1307 = vunpack.c.l.b16 %v444
        %v1308 = vunpack.c.l.b16 %v445
        %v1309 = vunpack.c.h.b16 %v445
        %v1310 = vunpack.c.l.b16 %v446
        %v1311 = vunpack.c.h.b16 %v446
        %v1312 = vunpack.c.l.b16 %v447
        %v1313 = vunpack.c.h.b16 %v447
        %v1314 = vunpack.c.l.b16 %v448
        %v1315 = vunpack.c.l.b16 %v449
        %v1316 = vunpack.c.h.b16 %v449
        %v1317 = vunpack.c.l.b16 %v450
        %v1318 = vunpack.c.h.b16 %v450
        %v1319 = vunpack.c.l.b16 %v451
        %v1320 = vunpack.c.h.b16 %v451
        %v1321 = vunpack.c.l.b16 %v452
        %v1322 = vunpack.c.l.b16 %v453
        %v1323 = vunpack.c.h.b16 %v453
        %v1324 = vunpack.c.l.b16 %v454
        %v1325 = vunpack.c.h.b16 %v454
        %v1326 = vunpack.c.l.b16 %v455
        %v1327 = vunpack.c.h.b16 %v455
        %v1328 = vunpack.c.l.b16 %v456
        %v1329 = vunpack.c.l.b16 %v457
        %v1330 = vunpack.c.h.b16 %v457
        %v1331 = vunpack.c.l.b16 %v458
        %v1332 = vunpack.c.h.b16 %v458
        %v1333 = vunpack.c.l.b16 %v459
        %v1334 = vunpack.c.h.b16 %v459
        %v1335 = vunpack.c.l.b16 %v460
        %v1336 = vunpack.c.l.b16 %v461
        %v1337 = vunpack.c.h.b16 %v461
        %v1338 = vunpack.c.l.b16 %v462
        %v1339 = vunpack.c.h.b16 %v462
        %v1340 = vunpack.c.l.b16 %v463
        %v1341 = vunpack.c.h.b16 %v463
        %v1342 = vunpack.c.l.b16 %v464
        %v1343 = vunpack.c.l.b16 %v465
        %v1344 = vunpack.c.h.b16 %v465
        %v1345 = vunpack.c.l.b16 %v466
        %v1346 = vunpack.c.h.b16 %v466
        %v1347 = vunpack.c.l.b16 %v467
        %v1348 = vunpack.c.h.b16 %v467
        %v1349 = vunpack.c.l.b16 %v468
        %v1350 = vunpack.c.l.b16 %v469
        %v1351 = vunpack.c.h.b16 %v469
        %v1352 = vunpack.c.l.b16 %v470
        %v1353 = vunpack.c.h.b16 %v470
        %v1354 = vunpack.c.l.b16 %v471
        %v1355 = vunpack.c.h.b16 %v471
        %v1356 = vunpack.c.l.b16 %v472
        %v1357 = vunpack.c.l.b16 %v473
        %v1358 = vunpack.c.h.b16 %v473
        %v1359 = vunpack.c.l.b16 %v474
        %v1360 = vunpack.c.h.b16 %v474
        %v1361 = vunpack.c.l.b16 %v475
        %v1362 = vunpack.c.h.b16 %v475
        %v1363 = vunpack.c.l.b16 %v476
        %v1364 = vunpack.c.l.b16 %v477
        %v1365 = vunpack.c.h.b16 %v477
        %v1366 = vunpack.c.l.b16 %v478
        %v1367 = vunpack.c.h.b16 %v478
        %v1368 = vunpack.c.l.b16 %v479
        %v1369 = vunpack.c.h.b16 %v479
        %v1370 = vunpack.c.l.b16 %v480
        %v1371 = vunpack.c.l.b16 %v481
        %v1372 = vunpack.c.h.b16 %v481
        %v1373 = vunpack.c.l.b16 %v482
        %v1374 = vunpack.c.h.b16 %v482
        %v1375 = vunpack.c.l.b16 %v483
        %v1376 = vunpack.c.h.b16 %v483
        %v1377 = vunpack.c.l.b16 %v484
        %v1378 = vunpack.c.l.b16 %v485
        %v1379 = vunpack.c.h.b16 %v485
        %v1380 = vunpack.c.l.b16 %v486
        %v1381 = vunpack.c.h.b16 %v486
        %v1382 = vunpack.c.l.b16 %v487
        %v1383 = vunpack.c.h.b16 %v487
        %v1384 = vunpack.c.l.b16 %v488
        %v1385 = vunpack.c.l.b16 %v489
        %v1386 = vunpack.c.h.b16 %v489
        %v1387 = vunpack.c.l.b16 %v490
        %v1388 = vunpack.c.h.b16 %v490
        %v1389 = vunpack.c.l.b16 %v491
        %v1390 = vunpack.c.h.b16 %v491
        %v1391 = vunpack.c.l.b16 %v492
        %v1392 = vunpack.c.l.b16 %v493
        %v1393 = vunpack.c.h.b16 %v493
        %v1394 = vunpack.c.l.b16 %v494
        %v1395 = vunpack.c.h.b16 %v494
        %v1396 = vunpack.c.l.b16 %v495
        %v1397 = vunpack.c.h.b16 %v495
        %v1398 = vunpack.c.l.b16 %v496
        %v1399 = vunpack.c.l.b16 %v497
        %v1400 = vunpack.c.h.b16 %v497
        %v1401 = vunpack.c.l.b16 %v498
        %v1402 = vunpack.c.h.b16 %v498
        %v1403 = vunpack.c.l.b16 %v499
        %v1404 = vunpack.c.h.b16 %v499
        %v1405 = vunpack.c.l.b16 %v500
        %v1406 = vunpack.c.l.b16 %v501
        %v1407 = vunpack.c.h.b16 %v501
        %v1408 = vunpack.c.l.b16 %v502
        %v1409 = vunpack.c.h.b16 %v502
        %v1410 = vunpack.c.l.b16 %v503
        %v1411 = vunpack.c.h.b16 %v503
        %v1412 = vunpack.c.l.b16 %v504
        %v1413 = vunpack.c.l.b16 %v505
        %v1414 = vunpack.c.h.b16 %v505
        %v1415 = vunpack.c.l.b16 %v506
        %v1416 = vunpack.c.h.b16 %v506
        %v1417 = vunpack.c.l.b16 %v507
        %v1418 = vunpack.c.h.b16 %v507
        %v1419 = vunpack.c.l.b16 %v508
        %v1420 = vunpack.c.l.b16 %v509
        %v1421 = vunpack.c.h.b16 %v509
        %v1422 = vunpack.c.l.b16 %v510
        %v1423 = vunpack.c.h.b16 %v510
        %v1424 = vunpack.c.l.b16 %v511
        %v1425 = vunpack.c.h.b16 %v511
        %v1426 = vunpack.c.l.b16 %v512
        %v1427 = vunpack.c.l.b16 %v513
        %v1428 = vunpack.c.h.b16 %v513
        %v1429 = vunpack.c.l.b16 %v514
        %v1430 = vunpack.c.h.b16 %v514
        %v1431 = vunpack.c.l.b16 %v515
        %v1432 = vunpack.c.h.b16 %v515
        %v1433 = vunpack.c.l.b16 %v516
        %v1434 = vunpack.c.l.b16 %v517
        %v1435 = vunpack.c.h.b16 %v517
        %v1436 = vunpack.c.l.b16 %v518
        %v1437 = vunpack.c.h.b16 %v518
        %v1438 = vunpack.c.l.b16 %v519
        %v1439 = vunpack.c.h.b16 %v519
        %v1440 = vunpack.c.l.b16 %v520
        %v1441 = vunpack.c.l.b16 %v521
        %v1442 = vunpack.c.h.b16 %v521
        %v1443 = vunpack.c.l.b16 %v522
        %v1444 = vunpack.c.h.b16 %v522
        %v1445 = vunpack.c.l.b16 %v523
        %v1446 = vunpack.c.h.b16 %v523
        %v1447 = vunpack.c.l.b16 %v524
        %v1448 = vunpack.c.l.b16 %v525
        %v1449 = vunpack.c.h.b16 %v525
        %v1450 = vunpack.c.l.b16 %v526
        %v1451 = vunpack.c.h.b16 %v526
        %v1452 = vunpack.c.l.b16 %v527
        %v1453 = vunpack.c.h.b16 %v527
        %v1454 = vunpack.c.l.b16 %v528
        %v1455 = vunpack.c.l.b16 %v529
        %v1456 = vunpack.c.h.b16 %v529
        %v1457 = vunpack.c.l.b16 %v530
        %v1458 = vunpack.c.h.b16 %v530
        %v1459 = vunpack.c.l.b16 %v531
        %v1460 = vunpack.c.h.b16 %v531
        %v1461 = vunpack.c.l.b16 %v532
        %v1462 = vunpack.c.l.b16 %v533
        %v1463 = vunpack.c.h.b16 %v533
        %v1464 = vunpack.c.l.b16 %v534
        %v1465 = vunpack.c.h.b16 %v534
        %v1466 = vunpack.c.l.b16 %v535
        %v1467 = vunpack.c.h.b16 %v535
        %v1468 = vunpack.c.l.b16 %v536
        %v1469 = vunpack.c.l.b16 %v537
        %v1470 = vunpack.c.h.b16 %v537
        %v1471 = vunpack.c.l.b16 %v538
        %v1472 = vunpack.c.h.b16 %v538
        %v1473 = vunpack.c.l.b16 %v539
        %v1474 = vunpack.c.h.b16 %v539
        %v1475 = vunpack.c.l.b16 %v540
        %v1476 = vunpack.c.l.b16 %v541
        %v1477 = vunpack.c.h.b16 %v541
        %v1478 = vunpack.c.l.b16 %v542
        %v1479 = vunpack.c.h.b16 %v542
        %v1480 = vunpack.c.l.b16 %v543
        %v1481 = vunpack.c.h.b16 %v543
        %v1482 = vunpack.c.l.b16 %v544
        %v1483 = vunpack.c.l.b16 %v545
        %v1484 = vunpack.c.h.b16 %v545
        %v1485 = vunpack.c.l.b16 %v546
        %v1486 = vunpack.c.h.b16 %v546
        %v1487 = vunpack.c.l.b16 %v547
        %v1488 = vunpack.c.h.b16 %v547
        %v1489 = vunpack.c.l.b16 %v548
        %v1490 = vunpack.c.l.b16 %v549
        %v1491 = vunpack.c.h.b16 %v549
        %v1492 = vunpack.c.l.b16 %v550
        %v1493 = vunpack.c.h.b16 %v550
        %v1494 = vunpack.c.l.b16 %v551
        %v1495 = vunpack.c.h.b16 %v551
        %v1496 = vunpack.c.l.b16 %v552
        %v1497 = vunpack.c.l.b16 %v553
        %v1498 = vunpack.c.h.b16 %v553
        %v1499 = vunpack.c.l.b16 %v554
        %v1500 = vunpack.c.h.b16 %v554
        %v1501 = vunpack.c.l.b16 %v555
        %v1502 = vunpack.c.h.b16 %v555
        %v1503 = vunpack.c.l.b16 %v556
        %v1504 = vunpack.c.l.b16 %v557
        %v1505 = vunpack.c.h.b16 %v557
        %v1506 = vunpack.c.l.b16 %v558
        %v1507 = vunpack.c.h.b16 %v558
        %v1508 = vunpack.c.l.b16 %v559
        %v1509 = vunpack.c.h.b16 %v559
        %v1510 = vunpack.c.l.b16 %v560
        %v1511 = vunpack.c.l.b16 %v561
        %v1512 = vunpack.c.h.b16 %v561
        %v1513 = vunpack.c.l.b16 %v562
        %v1514 = vunpack.c.h.b16 %v562
        %v1515 = vunpack.c.l.b16 %v563
        %v1516 = vunpack.c.h.b16 %v563
        %v1517 = vunpack.c.l.b16 %v564
        %v1518 = vunpack.c.l.b16 %v565
        %v1519 = vunpack.c.h.b16 %v565
        %v1520 = vunpack.c.l.b16 %v566
        %v1521 = vunpack.c.h.b16 %v566
        %v1522 = vunpack.c.l.b16 %v567
        %v1523 = vunpack.c.h.b16 %v567
        %v1524 = vunpack.c.l.b16 %v568
        %v1525 = vunpack.c.l.b16 %v569
        %v1526 = vunpack.c.h.b16 %v569
        %v1527 = vunpack.c.l.b16 %v570
        %v1528 = vunpack.c.h.b16 %v570
        %v1529 = vunpack.c.l.b16 %v571
        %v1530 = vunpack.c.h.b16 %v571
        %v1531 = vunpack.c.l.b16 %v572
        %v1532 = vunpack.c.l.b16 %v573
        %v1533 = vunpack.c.h.b16 %v573
        %v1534 = vunpack.c.l.b16 %v574
        %v1535 = vunpack.c.h.b16 %v574
        %v1536 = vunpack.c.l.b16 %v575
        %v1537 = vunpack.c.h.b16 %v575
        %v1538 = vunpack.c.l.b16 %v576
        %v1539 = vunpack.c.l.b16 %v577
        %v1540 = vunpack.c.h.b16 %v577
        %v1541 = vunpack.c.l.b16 %v578
        %v1542 = vunpack.c.h.b16 %v578
        %v1543 = vunpack.c.l.b16 %v579
        %v1544 = vunpack.c.h.b16 %v579
        %v1545 = vunpack.c.l.b16 %v580
        %v1546 = vunpack.c.l.b16 %v581
        %v1547 = vunpack.c.h.b16 %v581
        %v1548 = vunpack.c.l.b16 %v582
        %v1549 = vunpack.c.h.b16 %v582
        %v1550 = vunpack.c.l.b16 %v583
        %v1551 = vunpack.c.h.b16 %v583
        %v1552 = vunpack.c.l.b16 %v584
        %v1553 = vunpack.c.l.b16 %v585
        %v1554 = vunpack.c.h.b16 %v585
        %v1555 = vunpack.c.l.b16 %v586
        %v1556 = vunpack.c.h.b16 %v586
        %v1557 = vunpack.c.l.b16 %v587
        %v1558 = vunpack.c.h.b16 %v587
        %v1559 = vunpack.c.l.b16 %v588
        %v1560 = vunpack.c.l.b16 %v589
        %v1561 = vunpack.c.h.b16 %v589
        %v1562 = vunpack.c.l.b16 %v590
        %v1563 = vunpack.c.h.b16 %v590
        %v1564 = vunpack.c.l.b16 %v591
        %v1565 = vunpack.c.h.b16 %v591
        %v1566 = vunpack.c.l.b16 %v592
        %v1567 = vunpack.c.l.b16 %v593
        %v1568 = vunpack.c.h.b16 %v593
        %v1569 = vunpack.c.l.b16 %v594
        %v1570 = vunpack.c.h.b16 %v594
        %v1571 = vunpack.c.l.b16 %v595
        %v1572 = vunpack.c.h.b16 %v595
        %v1573 = vunpack.c.l.b16 %v596
        %v1574 = vunpack.c.l.b16 %v597
        %v1575 = vunpack.c.h.b16 %v597
        %v1576 = vunpack.c.l.b16 %v598
        %v1577 = vunpack.c.h.b16 %v598
        %v1578 = vunpack.c.l.b16 %v599
        %v1579 = vunpack.c.h.b16 %v599
        %v1580 = vunpack.c.l.b16 %v600
        %v1581 = vunpack.c.l.b16 %v601
        %v1582 = vunpack.c.h.b16 %v601
        %v1583 = vunpack.c.l.b16 %v602
        %v1584 = vunpack.c.h.b16 %v602
        %v1585 = vunpack.c.l.b16 %v603
        %v1586 = vunpack.c.h.b16 %v603
        %v1587 = vunpack.c.l.b16 %v604
        %v1588 = vunpack.c.l.b16 %v605
        %v1589 = vunpack.c.h.b16 %v605
        %v1590 = vunpack.c.l.b16 %v606
        %v1591 = vunpack.c.h.b16 %v606
        %v1592 = vunpack.c.l.b16 %v607
        %v1593 = vunpack.c.h.b16 %v607
        %v1594 = vunpack.c.l.b16 %v608
        %v1595 = vunpack.c.l.b16 %v609
        %v1596 = vunpack.c.h.b16 %v609
        %v1597 = vunpack.c.l.b16 %v610
        %v1598 = vunpack.c.h.b16 %v610
        %v1599 = vunpack.c.l.b16 %v611
        %v1600 = vunpack.c.h.b16 %v611
        %v1601 = vunpack.c.l.b16 %v612
        %v1602 = vunpack.c.l.b16 %v613
        %v1603 = vunpack.c.h.b16 %v613
        %v1604 = vunpack.c.l.b16 %v614
        %v1605 = vunpack.c.h.b16 %v614
        %v1606 = vunpack.c.l.b16 %v615
        %v1607 = vunpack.c.h.b16 %v615
        %v1608 = vunpack.c.l.b16 %v616
        %v1609 = vunpack.c.l.b16 %v617
        %v1610 = vunpack.c.h.b16 %v617
        %v1611 = vunpack.c.l.b16 %v618
        %v1612 = vunpack.c.h.b16 %v618
        %v1613 = vunpack.c.l.b16 %v619
        %v1614 = vunpack.c.h.b16 %v619
        %v1615 = vunpack.c.l.b16 %v620
        %v1616 = vunpack.c.l.b16 %v621
        %v1617 = vunpack.c.h.b16 %v621
        %v1618 = vunpack.c.l.b16 %v622
        %v1619 = vunpack.c.h.b16 %v622
        %v1620 = vunpack.c.l.b16 %v623
        %v1621 = vunpack.c.h.b16 %v623
        %v1622 = vunpack.c.l.b16 %v624
        %v1623 = vunpack.c.l.b16 %v625
        %v1624 = vunpack.c.h.b16 %v625
        %v1625 = vunpack.c.l.b16 %v626
        %v1626 = vunpack.c.h.b16 %v626
        %v1627 = vunpack.c.l.b16 %v627
        %v1628 = vunpack.c.h.b16 %v627
        %v1629 = vunpack.c.l.b16 %v628
        %v1630 = vunpack.c.l.b16 %v629
        %v1631 = vunpack.c.h.b16 %v629
        %v1632 = vunpack.c.l.b16 %v630
        %v1633 = vunpack.c.h.b16 %v630
        %v1634 = vunpack.c.l.b16 %v631
        %v1635 = vunpack.c.h.b16 %v631
        %v1636 = vunpack.c.l.b16 %v632
        %v1637 = vunpack.c.l.b16 %v633
        %v1638 = vunpack.c.h.b16 %v633
        %v1639 = vunpack.c.l.b16 %v634
        %v1640 = vunpack.c.h.b16 %v634
        %v1641 = vunpack.c.l.b16 %v635
        %v1642 = vunpack.c.h.b16 %v635
        %v1643 = vunpack.c.l.b16 %v636
        %v1644 = vunpack.c.l.b16 %v637
        %v1645 = vunpack.c.h.b16 %v637
        %v1646 = vunpack.c.l.b16 %v638
        %v1647 = vunpack.c.h.b16 %v638
        %v1648 = vunpack.c.l.b16 %v639
        %v1649 = vunpack.c.h.b16 %v639
        %v1650 = vunpack.c.l.b16 %v640
        %v1651 = vunpack.c.l.b16 %v641
        %v1652 = vunpack.c.h.b16 %v641
        %v1653 = vunpack.c.l.b16 %v642
        %v1654 = vunpack.c.h.b16 %v642
        %v1655 = vunpack.c.l.b16 %v643
        %v1656 = vunpack.c.h.b16 %v643
        %v1657 = vunpack.c.l.b16 %v644
        %v1658 = vunpack.c.l.b16 %v645
        %v1659 = vunpack.c.h.b16 %v645
        %v1660 = vunpack.c.l.b16 %v646
        %v1661 = vunpack.c.h.b16 %v646
        %v1662 = vunpack.c.l.b16 %v647
        %v1663 = vunpack.c.h.b16 %v647
        %v1664 = vunpack.c.l.b16 %v648
        %v1665 = vunpack.c.l.b16 %v649
        %v1666 = vunpack.c.h.b16 %v649
        %v1667 = vunpack.c.l.b16 %v650
        %v1668 = vunpack.c.h.b16 %v650
        %v1669 = vunpack.c.l.b16 %v651
        %v1670 = vunpack.c.h.b16 %v651
        %v1671 = vunpack.c.l.b16 %v652
        %v1672 = vunpack.c.l.b16 %v653
        %v1673 = vunpack.c.h.b16 %v653
        %v1674 = vunpack.c.l.b16 %v654
        %v1675 = vunpack.c.h.b16 %v654
        %v1676 = vunpack.c.l.b16 %v655
        %v1677 = vunpack.c.h.b16 %v655
        %v1678 = vunpack.c.l.b16 %v656
        %v1679 = vunpack.c.l.b16 %v657
        %v1680 = vunpack.c.h.b16 %v657
        %v1681 = vunpack.c.l.b16 %v658
        %v1682 = vunpack.c.h.b16 %v658
        %v1683 = vunpack.c.l.b16 %v659
        %v1684 = vunpack.c.h.b16 %v659
        %v1685 = vunpack.c.l.b16 %v660
        %v1686 = vunpack.c.l.b16 %v661
        %v1687 = vunpack.c.h.b16 %v661
        %v1688 = vunpack.c.l.b16 %v662
        %v1689 = vunpack.c.h.b16 %v662
        %v1690 = vunpack.c.l.b16 %v663
        %v1691 = vunpack.c.h.b16 %v663
        %v1692 = vunpack.c.l.b16 %v664
        %v1693 = vunpack.c.l.b16 %v665
        %v1694 = vunpack.c.h.b16 %v665
        %v1695 = vunpack.c.l.b16 %v666
        %v1696 = vunpack.c.h.b16 %v666
        %v1697 = vunpack.c.l.b16 %v667
        %v1698 = vunpack.c.h.b16 %v667
        %v1699 = vunpack.c.l.b16 %v668
        %v1700 = vunpack.c.l.b16 %v669
        %v1701 = vunpack.c.h.b16 %v669
        %v1702 = vunpack.c.l.b16 %v670
        %v1703 = vunpack.c.h.b16 %v670
        %v1704 = vunpack.c.l.b16 %v671
        %v1705 = vunpack.c.h.b16 %v671
        %v1706 = vunpack.c.l.b16 %v672
        %v1707 = vunpack.c.l.b16 %v673
        %v1708 = vunpack.c.h.b16 %v673
        %v1709 = vunpack.c.l.b16 %v674
        %v1710 = vunpack.c.h.b16 %v674
        %v1711 = vunpack.c.l.b16 %v675
        %v1712 = vunpack.c.h.b16 %v675
        %v1713 = vunpack.c.l.b16 %v676
        %v1714 = vunpack.c.l.b16 %v677
        %v1715 = vunpack.c.h.b16 %v677
        %v1716 = vunpack.c.l.b16 %v678
        %v1717 = vunpack.c.h.b16 %v678
        %v1718 = vunpack.c.l.b16 %v679
        %v1719 = vunpack.c.h.b16 %v679
        %v1720 = vunpack.c.l.b16 %v680
        %v1721 = vunpack.c.l.b16 %v681
        %v1722 = vunpack.c.h.b16 %v681
        %v1723 = vunpack.c.l.b16 %v682
        %v1724 = vunpack.c.h.b16 %v682
        %v1725 = vunpack.c.l.b16 %v683
        %v1726 = vunpack.c.h.b16 %v683
        %v1727 = vunpack.c.l.b16 %v684
        %v1728 = vunpack.c.l.b16 %v685
        %v1729 = vunpack.c.h.b16 %v685
        %v1730 = vunpack.c.l.b16 %v686
        %v1731 = vunpack.c.h.b16 %v686
        %v1732 = vunpack.c.l.b16 %v687
        %v1733 = vunpack.c.h.b16 %v687
        %v1734 = vunpack.c.l.b16 %v688
        %v1735 = vunpack.c.l.b16 %v689
        %v1736 = vunpack.c.h.b16 %v689
        %v1737 = vunpack.c.l.b16 %v690
        %v1738 = vunpack.c.h.b16 %v690
        %v1739 = vunpack.c.l.b16 %v691
        %v1740 = vunpack.c.h.b16 %v691
        %v1741 = vunpack.c.l.b16 %v692
        %v1742 = vunpack.c.l.b16 %v693
        %v1743 = vunpack.c.h.b16 %v693
        %v1744 = vunpack.c.l.b16 %v694
        %v1745 = vunpack.c.h.b16 %v694
        %v1746 = vunpack.c.l.b16 %v695
        %v1747 = vunpack.c.h.b16 %v695
        %v1748 = vunpack.c.l.b16 %v696
        %v1749 = vunpack.c.l.b16 %v697
        %v1750 = vunpack.c.h.b16 %v697
        %v1751 = vunpack.c.l.b16 %v698
        %v1752 = vunpack.c.h.b16 %v698
        %v1753 = vunpack.c.l.b16 %v699
        %v1754 = vunpack.c.h.b16 %v699
        %v1755 = vunpack.c.l.b16 %v700
        %v1756 = vunpack.c.l.b16 %v701
        %v1757 = vunpack.c.h.b16 %v701
        %v1758 = vunpack.c.l.b16 %v702
        %v1759 = vunpack.c.h.b16 %v702
        %v1760 = vunpack.c.l.b16 %v703
        %v1761 = vunpack.c.h.b16 %v703
        %v1762 = vunpack.c.l.b16 %v704
        %v1763 = vunpack.c.l.b16 %v705
        %v1764 = vunpack.c.h.b16 %v705
        %v1765 = vunpack.c.l.b16 %v706
        %v1766 = vunpack.c.h.b16 %v706
        %v1767 = vunpack.c.l.b16 %v707
        %v1768 = vunpack.c.h.b16 %v707
        %v1769 = vunpack.c.l.b16 %v708
        %v1770 = vunpack.c.l.b16 %v709
        %v1771 = vunpack.c.h.b16 %v709
        %v1772 = vunpack.c.l.b16 %v710
        %v1773 = vunpack.c.h.b16 %v710
        %v1774 = vunpack.c.l.b16 %v711
        %v1775 = vunpack.c.h.b16 %v711
        %v1776 = vunpack.c.l.b16 %v712
        %v1777 = vunpack.c.l.b16 %v713
        %v1778 = vunpack.c.h.b16 %v713
        %v1779 = vunpack.c.l.b16 %v714
        %v1780 = vunpack.c.h.b16 %v714
        %v1781 = vunpack.c.l.b16 %v715
        %v1782 = vunpack.c.h.b16 %v715
        %v1783 = vunpack.c.l.b16 %v716
        %v1784 = vunpack.c.l.b16 %v717
        %v1785 = vunpack.c.h.b16 %v717
        %v1786 = vunpack.c.l.b16 %v718
        %v1787 = vunpack.c.h.b16 %v718
        %v1788 = vunpack.c.l.b16 %v719
        %v1789 = vunpack.c.h.b16 %v719
        %v1790 = vunpack.c.l.b16 %v720
        %v1791 = vunpack.c.l.b16 %v721
        %v1792 = vunpack.c.h.b16 %v721
        %v1793 = vunpack.c.l.b16 %v722
        %v1794 = vunpack.c.h.b16 %v722
        %v1795 = vunpack.c.l.b16 %v723
        %v1796 = vunpack.c.h.b16 %v723
        %v1797 = vunpack.c.l.b16 %v724
        %v1798 = vunpack.c.l.b16 %v725
        %v1799 = vunpack.c.h.b16 %v725
        %v1800 = vunpack.c.l.b16 %v726
        %v1801 = vunpack.c.h.b16 %v726
        %v1802 = vunpack.c.l.b16 %v727
        %v1803 = vunpack.c.h.b16 %v727
        %v1804 = vunpack.c.l.b16 %v728
        %v1805 = vunpack.c.l.b16 %v729
        %v1806 = vunpack.c.h.b16 %v729
        %v1807 = vunpack.c.l.b16 %v730
        %v1808 = vunpack.c.h.b16 %v730
        %v1809 = vunpack.c.l.b16 %v731
        %v1810 = vunpack.c.h.b16 %v731
        %v1811 = vunpack.c.l.b16 %v732
        %v1812 = vunpack.c.l.b16 %v733
        %v1813 = vunpack.c.h.b16 %v733
        %v1814 = vunpack.c.l.b16 %v734
        %v1815 = vunpack.c.h.b16 %v734
        %v1816 = vunpack.c.l.b16 %v735
        %v1817 = vunpack.c.h.b16 %v735
        %v1818 = vunpack.c.l.b16 %v736
        %v1819 = vunpack.c.l.b16 %v737
        %v1820 = vunpack.c.h.b16 %v737
        %v1821 = vunpack.c.l.b16 %v738
        %v1822 = vunpack.c.h.b16 %v738
        %v1823 = vunpack.c.l.b16 %v739
        %v1824 = vunpack.c.h.b16 %v739
        %v1825 = vunpack.c.l.b16 %v740
        %v1826 = vunpack.c.l.b16 %v741
        %v1827 = vunpack.c.h.b16 %v741
        %v1828 = vunpack.c.l.b16 %v742
        %v1829 = vunpack.c.h.b16 %v742
        %v1830 = vunpack.c.l.b16 %v743
        %v1831 = vunpack.c.h.b16 %v743
        %v1832 = vunpack.c.l.b16 %v744
        %v1833 = vunpack.c.l.b16 %v745
        %v1834 = vunpack.c.h.b16 %v745
        %v1835 = vunpack.c.l.b16 %v746
        %v1836 = vunpack.c.h.b16 %v746
        %v1837 = vunpack.c.l.b16 %v747
        %v1838 = vunpack.c.h.b16 %v747
        %v1839 = vunpack.c.l.b16 %v748
        %v1840 = vunpack.c.l.b16 %v749
        %v1841 = vunpack.c.h.b16 %v749
        %v1842 = vunpack.c.l.b16 %v750
        %v1843 = vunpack.c.h.b16 %v750
        %v1844 = vunpack.c.l.b16 %v751
        %v1845 = vunpack.c.h.b16 %v751
        %v1846 = vunpack.c.l.b16 %v752
        %v1847 = vunpack.c.l.b16 %v753
        %v1848 = vunpack.c.h.b16 %v753
        %v1849 = vunpack.c.l.b16 %v754
        %v1850 = vunpack.c.h.b16 %v754
        %v1851 = vunpack.c.l.b16 %v755
        %v1852 = vunpack.c.h.b16 %v755
        %v1853 = vunpack.c.l.b16 %v756
        %v1854 = vunpack.c.l.b16 %v757
        %v1855 = vunpack.c.h.b16 %v757
        %v1856 = vunpack.c.l.b16 %v758
        %v1857 = vunpack.c.h.b16 %v758
        %v1858 = vunpack.c.l.b16 %v759
        %v1859 = vunpack.c.h.b16 %v759
        %v1860 = vunpack.c.l.b16 %v760
        %v1861 = vunpack.c.l.b16 %v761
        %v1862 = vunpack.c.h.b16 %v761
        %v1863 = vunpack.c.l.b16 %v762
        %v1864 = vunpack.c.h.b16 %v762
        %v1865 = vunpack.c.l.b16 %v763
        %v1866 = vunpack.c.h.b16 %v763
        %v1867 = vunpack.c.l.b16 %v764
        %v1868 = vunpack.c.l.b16 %v765
        %v1869 = vunpack.c.h.b16 %v765
        %v1870 = vunpack.c.l.b16 %v766
        %v1871 = vunpack.c.h.b16 %v766
        %v1872 = vunpack.c.l.b16 %v767
        %v1873 = vunpack.c.h.b16 %v767
        %v1874 = vunpack.c.l.b16 %v768
        %v1875 = vunpack.c.l.b16 %v769
        %v1876 = vunpack.c.h.b16 %v769
        %v1877 = vunpack.c.l.b16 %v770
        %v1878 = vunpack.c.h.b16 %v770
        %v1879 = vunpack.c.l.b16 %v771
        %v1880 = vunpack.c.h.b16 %v771
        %v1881 = vunpack.c.l.b16 %v772
        %v1882 = vunpack.c.l.b16 %v773
        %v1883 = vunpack.c.h.b16 %v773
        %v1884 = vunpack.c.l.b16 %v774
        %v1885 = vunpack.c.h.b16 %v774
        %v1886 = vunpack.c.l.b16 %v775
        %v1887 = vunpack.c.h.b16 %v775
        %v1888 = vunpack.c.l.b16 %v776
        %v1889 = vunpack.c.l.b16 %v777
        %v1890 = vunpack.c.h.b16 %v777
        %v1891 = vunpack.c.l.b16 %v778
        %v1892 = vunpack.c.h.b16 %v778
        %v1893 = vunpack.c.l.b16 %v779
        %v1894 = vunpack.c.h.b16 %v779
        %v1895 = vunpack.c.l.b16 %v780
        %v1896 = vpack.c.b16 %v1217, %v1210
        %v1897 = vpack.c.b16 %v1218, %v1211
        %v1898 = vpack.c.b16 %v1219, %v1212
        %v1899 = vpack.c.b16 %v1220, %v1213
        %v1900 = vpack.c.b16 %v1221, %v1214
        %v1901 = vpack.c.b16 %v1222, %v1215
        %v1902 = vpack.c.b16 %v1223, %v1216
        %v1903 = vpack.c.b16 %v1231, %v1224
        %v1904 = vpack.c.b16 %v1232, %v1225
        %v1905 = vpack.c.b16 %v1233, %v1226
        %v1906 = vpack.c.b16 %v1234, %v1227
        %v1907 = vpack.c.b16 %v1235, %v1228
        %v1908 = vpack.c.b16 %v1236, %v1229
        %v1909 = vpack.c.b16 %v1237, %v1230
        %v1910 = vpack.c.b16 %v1245, %v1238
        %v1911 = vpack.c.b16 %v1246, %v1239
        %v1912 = vpack.c.b16 %v1247, %v1240
        %v1913 = vpack.c.b16 %v1248, %v1241
        %v1914 = vpack.c.b16 %v1249, %v1242
        %v1915 = vpack.c.b16 %v1250, %v1243
        %v1916 = vpack.c.b16 %v1251, %v1244
        %v1917 = vpack.c.b16 %v1259, %v1252
        %v1918 = vpack.c.b16 %v1260, %v1253
        %v1919 = vpack.c.b16 %v1261, %v1254
        %v1920 = vpack.c.b16 %v1262, %v1255
        %v1921 = vpack.c.b16 %v1263, %v1256
        %v1922 = vpack.c.b16 %v1264, %v1257
        %v1923 = vpack.c.b16 %v1265, %v1258
        %v1924 = vpack.c.b16 %v1273, %v1266
        %v1925 = vpack.c.b16 %v1274, %v1267
        %v1926 = vpack.c.b16 %v1275, %v1268
        %v1927 = vpack.c.b16 %v1276, %v1269
        %v1928 = vpack.c.b16 %v1277, %v1270
        %v1929 = vpack.c.b16 %v1278, %v1271
        %v1930 = vpack.c.b16 %v1279, %v1272
        %v1931 = vpack.c.b16 %v1287, %v1280
        %v1932 = vpack.c.b16 %v1288, %v1281
        %v1933 = vpack.c.b16 %v1289, %v1282
        %v1934 = vpack.c.b16 %v1290, %v1283
        %v1935 = vpack.c.b16 %v1291, %v1284
        %v1936 = vpack.c.b16 %v1292, %v1285
        %v1937 = vpack.c.b16 %v1293, %v1286
        %v1938 = vpack.c.b16 %v1301, %v1294
        %v1939 = vpack.c.b16 %v1302, %v1295
        %v1940 = vpack.c.b16 %v1303, %v1296
        %v1941 = vpack.c.b16 %v1304, %v1297
        %v1942 = vpack.c.b16 %v1305, %v1298
        %v1943 = vpack.c.b16 %v1306, %v1299
        %v1944 = vpack.c.b16 %v1307, %v1300
        %v1945 = vpack.c.b16 %v1315, %v1308
        %v1946 = vpack.c.b16 %v1316, %v1309
        %v1947 = vpack.c.b16 %v1317, %v1310
        %v1948 = vpack.c.b16 %v1318, %v1311
        %v1949 = vpack.c.b16 %v1319, %v1312
        %v1950 = vpack.c.b16 %v1320, %v1313
        %v1951 = vpack.c.b16 %v1321, %v1314
        %v1952 = vpack.c.b16 %v1329, %v1322
        %v1953 = vpack.c.b16 %v1330, %v1323
        %v1954 = vpack.c.b16 %v1331, %v1324
        %v1955 = vpack.c.b16 %v1332, %v1325
        %v1956 = vpack.c.b16 %v1333, %v1326
        %v1957 = vpack.c.b16 %v1334, %v1327
        %v1958 = vpack.c.b16 %v1335, %v1328
        %v1959 = vpack.c.b16 %v1343, %v1336
        %v1960 = vpack.c.b16 %v1344, %v1337
        %v1961 = vpack.c.b16 %v1345, %v1338
        %v1962 = vpack.c.b16 %v1346, %v1339
        %v1963 = vpack.c.b16 %v1347, %v1340
        %v1964 = vpack.c.b16 %v1348, %v1341
        %v1965 = vpack.c.b16 %v1349, %v1342
        %v1966 = vpack.c.b16 %v1357, %v1350
        %v1967 = vpack.c.b16 %v1358, %v1351
        %v1968 = vpack.c.b16 %v1359, %v1352
        %v1969 = vpack.c.b16 %v1360, %v1353
        %v1970 = vpack.c.b16 %v1361, %v1354
        %v1971 = vpack.c.b16 %v1362, %v1355
        %v1972 = vpack.c.b16 %v1363, %v1356
        %v1973 = vpack.c.b16 %v1371, %v1364
        %v1974 = vpack.c.b16 %v1372, %v1365
        %v1975 = vpack.c.b16 %v1373, %v1366
        %v1976 = vpack.c.b16 %v1374, %v1367
        %v1977 = vpack.c.b16 %v1375, %v1368
        %v1978 = vpack.c.b16 %v1376, %v1369
        %v1979 = vpack.c.b16 %v1377, %v1370
        %v1980 = vpack.c.b16 %v1385, %v1378
        %v1981 = vpack.c.b16 %v1386, %v1379
        %v1982 = vpack.c.b16 %v1387, %v1380
        %v1983 = vpack.c.b16 %v1388, %v1381
        %v1984 = vpack.c.b16 %v1389, %v1382
        %v1985 = vpack.c.b16 %v1390, %v1383
        %v1986 = vpack.c.b16 %v1391, %v1384
        %v1987 = vpack.c.b16 %v1399, %v1392
        %v1988 = vpack.c.b16 %v1400, %v1393
        %v1989 = vpack.c.b16 %v1401, %v1394
        %v1990 = vpack.c.b16 %v1402, %v1395
        %v1991 = vpack.c.b16 %v1403, %v1396
        %v1992 = vpack.c.b16 %v1404, %v1397
        %v1993 = vpack.c.b16 %v1405, %v1398
        %v1994 = vpack.c.b16 %v1413, %v1406
        %v1995 = vpack.c.b16 %v1414, %v1407
        %v1996 = vpack.c.b16 %v1415, %v1408
        %v1997 = vpack.c.b16 %v1416, %v1409
        %v1998 = vpack.c.b16 %v1417, %v1410
        %v1999 = vpack.c.b16 %v1418, %v1411
        %v2000 = vpack.c.b16 %v1419, %v1412
        %v2001 = vpack.c.b16 %v1427, %v1420
        %v2002 = vpack.c.b16 %v1428, %v1421
        %v2003 = vpack.c.b16 %v1429, %v1422
        %v2004 = vpack.c.b16 %v1430, %v1423
        %v2005 = vpack.c.b16 %v1431, %v1424
        %v2006 = vpack.c.b16 %v1432, %v1425
        %v2007 = vpack.c.b16 %v1433, %v1426
        %v2008 = vpack.c.b16 %v1441, %v1434
        %v2009 = vpack.c.b16 %v1442, %v1435
        %v2010 = vpack.c.b16 %v1443, %v1436
        %v2011 = vpack.c.b16 %v1444, %v1437
        %v2012 = vpack.c.b16 %v1445, %v1438
        %v2013 = vpack.c.b16 %v1446, %v1439
        %v2014 = vpack.c.b16 %v1447, %v1440
        %v2015 = vpack.c.b16 %v1455, %v1448
        %v2016 = vpack.c.b16 %v1456, %v1449
        %v2017 = vpack.c.b16 %v1457, %v1450
        %v2018 = vpack.c.b16 %v1458, %v1451
        %v2019 = vpack.c.b16 %v1459, %v1452
        %v2020 = vpack.c.b16 %v1460, %v1453
        %v2021 = vpack.c.b16 %v1461, %v1454
        %v2022 = vpack.c.b16 %v1469, %v1462
        %v2023 = vpack.c.b16 %v1470, %v1463
        %v2024 = vpack.c.b16 %v1471, %v1464
        %v2025 = vpack.c.b16 %v1472, %v1465
        %v2026 = vpack.c.b16 %v1473, %v1466
        %v2027 = vpack.c.b16 %v1474, %v1467
        %v2028 = vpack.c.b16 %v1475, %v1468
        %v2029 = vpack.c.b16 %v1483, %v1476
        %v2030 = vpack.c.b16 %v1484, %v1477
        %v2031 = vpack.c.b16 %v1485, %v1478
        %v2032 = vpack.c.b16 %v1486, %v1479
        %v2033 = vpack.c.b16 %v1487, %v1480
        %v2034 = vpack.c.b16 %v1488, %v1481
        %v2035 = vpack.c.b16 %v1489, %v1482
        %v2036 = vpack.c.b16 %v1497, %v1490
        %v2037 = vpack.c.b16 %v1498, %v1491
        %v2038 = vpack.c.b16 %v1499, %v1492
        %v2039 = vpack.c.b16 %v1500, %v1493
        %v2040 = vpack.c.b16 %v1501, %v1494
        %v2041 = vpack.c.b16 %v1502, %v1495
        %v2042 = vpack.c.b16 %v1503, %v1496
        %v2043 = vpack.c.b16 %v1511, %v1504
        %v2044 = vpack.c.b16 %v1512, %v1505
        %v2045 = vpack.c.b16 %v1513, %v1506
        %v2046 = vpack.c.b16 %v1514, %v1507
        %v2047 = vpack.c.b16 %v1515, %v1508
        %v2048 = vpack.c.b16 %v1516, %v1509
        %v2049 = vpack.c.b16 %v1517, %v1510
        %v2050 = vpack.c.b16 %v1525, %v1518
        %v2051 = vpack.c.b16 %v1526, %v1519
        %v2052 = vpack.c.b16 %v1527, %v1520
        %v2053 = vpack.c.b16 %v1528, %v1521
        %v2054 = vpack.c.b16 %v1529, %v1522
        %v2055 = vpack.c.b16 %v1530, %v1523
        %v2056 = vpack.c.b16 %v1531, %v1524
        %v2057 = vpack.c.b16 %v1539, %v1532
        %v2058 = vpack.c.b16 %v1540, %v1533
        %v2059 = vpack.c.b16 %v1541, %v1534
        %v2060 = vpack.c.b16 %v1542, %v1535
        %v2061 = vpack.c.b16 %v1543, %v1536
        %v2062 = vpack.c.b16 %v1544, %v1537
        %v2063 = vpack.c.b16 %v1545, %v1538
        %v2064 = vpack.c.b16 %v1553, %v1546
        %v2065 = vpack.c.b16 %v1554, %v1547
        %v2066 = vpack.c.b16 %v1555, %v1548
        %v2067 = vpack.c.b16 %v1556, %v1549
        %v2068 = vpack.c.b16 %v1557, %v1550
        %v2069 = vpack.c.b16 %v1558, %v1551
        %v2070 = vpack.c.b16 %v1559, %v1552
        %v2071 = vpack.c.b16 %v1567, %v1560
        %v2072 = vpack.c.b16 %v1568, %v1561
        %v2073 = vpack.c.b16 %v1569, %v1562
        %v2074 = vpack.c.b16 %v1570, %v1563
        %v2075 = vpack.c.b16 %v1571, %v1564
        %v2076 = vpack.c.b16 %v1572, %v1565
        %v2077 = vpack.c.b16 %v1573, %v1566
        %v2078 = vpack.c.b16 %v1581, %v1574
        %v2079 = vpack.c.b16 %v1582, %v1575
        %v2080 = vpack.c.b16 %v1583, %v1576
        %v2081 = vpack.c.b16 %v1584, %v1577
        %v2082 = vpack.c.b16 %v1585, %v1578
        %v2083 = vpack.c.b16 %v1586, %v1579
        %v2084 = vpack.c.b16 %v1587, %v1580
        %v2085 = vpack.c.b16 %v1595, %v1588
        %v2086 = vpack.c.b16 %v1596, %v1589
        %v2087 = vpack.c.b16 %v1597, %v1590
        %v2088 = vpack.c.b16 %v1598, %v1591
        %v2089 = vpack.c.b16 %v1599, %v1592
        %v2090 = vpack.c.b16 %v1600, %v1593
        %v2091 = vpack.c.b16 %v1601, %v1594
        %v2092 = vpack.c.b16 %v1609, %v1602
        %v2093 = vpack.c.b16 %v1610, %v1603
        %v2094 = vpack.c.b16 %v1611, %v1604
        %v2095 = vpack.c.b16 %v1612, %v1605
        %v2096 = vpack.c.b16 %v1613, %v1606
        %v2097 = vpack.c.b16 %v1614, %v1607
        %v2098 = vpack.c.b16 %v1615, %v1608
        %v2099 = vpack.c.b16 %v1623, %v1616
        %v2100 = vpack.c.b16 %v1624, %v1617
        %v2101 = vpack.c.b16 %v1625, %v1618
        %v2102 = vpack.c.b16 %v1626, %v1619
        %v2103 = vpack.c.b16 %v1627, %v1620
        %v2104 = vpack.c.b16 %v1628, %v1621
        %v2105 = vpack.c.b16 %v1629, %v1622
        %v2106 = vpack.c.b16 %v1637, %v1630
        %v2107 = vpack.c.b16 %v1638, %v1631
        %v2108 = vpack.c.b16 %v1639, %v1632
        %v2109 = vpack.c.b16 %v1640, %v1633
        %v2110 = vpack.c.b16 %v1641, %v1634
        %v2111 = vpack.c.b16 %v1642, %v1635
        %v2112 = vpack.c.b16 %v1643, %v1636
        %v2113 = vpack.c.b16 %v1651, %v1644
        %v2114 = vpack.c.b16 %v1652, %v1645
        %v2115 = vpack.c.b16 %v1653, %v1646
        %v2116 = vpack.c.b16 %v1654, %v1647
        %v2117 = vpack.c.b16 %v1655, %v1648
        %v2118 = vpack.c.b16 %v1656, %v1649
        %v2119 = vpack.c.b16 %v1657, %v1650
        %v2120 = vpack.c.b16 %v1665, %v1658
        %v2121 = vpack.c.b16 %v1666, %v1659
        %v2122 = vpack.c.b16 %v1667, %v1660
        %v2123 = vpack.c.b16 %v1668, %v1661
        %v2124 = vpack.c.b16 %v1669, %v1662
        %v2125 = vpack.c.b16 %v1670, %v1663
        %v2126 = vpack.c.b16 %v1671, %v1664
        %v2127 = vpack.c.b16 %v1679, %v1672
        %v2128 = vpack.c.b16 %v1680, %v1673
        %v2129 = vpack.c.b16 %v1681, %v1674
        %v2130 = vpack.c.b16 %v1682, %v1675
        %v2131 = vpack.c.b16 %v1683, %v1676
        %v2132 = vpack.c.b16 %v1684, %v1677
        %v2133 = vpack.c.b16 %v1685, %v1678
        %v2134 = vpack.c.b16 %v1693, %v1686
        %v2135 = vpack.c.b16 %v1694, %v1687
        %v2136 = vpack.c.b16 %v1695, %v1688
        %v2137 = vpack.c.b16 %v1696, %v1689
        %v2138 = vpack.c.b16 %v1697, %v1690
        %v2139 = vpack.c.b16 %v1698, %v1691
        %v2140 = vpack.c.b16 %v1699, %v1692
        %v2141 = vpack.c.b16 %v1707, %v1700
        %v2142 = vpack.c.b16 %v1708, %v1701
        %v2143 = vpack.c.b16 %v1709, %v1702
        %v2144 = vpack.c.b16 %v1710, %v1703
        %v2145 = vpack.c.b16 %v1711, %v1704
        %v2146 = vpack.c.b16 %v1712, %v1705
        %v2147 = vpack.c.b16 %v1713, %v1706
        %v2148 = vpack.c.b16 %v1721, %v1714
        %v2149 = vpack.c.b16 %v1722, %v1715
        %v2150 = vpack.c.b16 %v1723, %v1716
        %v2151 = vpack.c.b16 %v1724, %v1717
        %v2152 = vpack.c.b16 %v1725, %v1718
        %v2153 = vpack.c.b16 %v1726, %v1719
        %v2154 = vpack.c.b16 %v1727, %v1720
        %v2155 = vpack.c.b16 %v1735, %v1728
        %v2156 = vpack.c.b16 %v1736, %v1729
        %v2157 = vpack.c.b16 %v1737, %v1730
        %v2158 = vpack.c.b16 %v1738, %v1731
        %v2159 = vpack.c.b16 %v1739, %v1732
        %v2160 = vpack.c.b16 %v1740, %v1733
        %v2161 = vpack.c.b16 %v1741, %v1734
        %v2162 = vpack.c.b16 %v1749, %v1742
        %v2163 = vpack.c.b16 %v1750, %v1743
        %v2164 = vpack.c.b16 %v1751, %v1744
        %v2165 = vpack.c.b16 %v1752, %v1745
        %v2166 = vpack.c.b16 %v1753, %v1746
        %v2167 = vpack.c.b16 %v1754, %v1747
        %v2168 = vpack.c.b16 %v1755, %v1748
        %v2169 = vpack.c.b16 %v1763, %v1756
        %v2170 = vpack.c.b16 %v1764, %v1757
        %v2171 = vpack.c.b16 %v1765, %v1758
        %v2172 = vpack.c.b16 %v1766, %v1759
        %v2173 = vpack.c.b16 %v1767, %v1760
        %v2174 = vpack.c.b16 %v1768, %v1761
        %v2175 = vpack.c.b16 %v1769, %v1762
        %v2176 = vpack.c.b16 %v1777, %v1770
        %v2177 = vpack.c.b16 %v1778, %v1771
        %v2178 = vpack.c.b16 %v1779, %v1772
        %v2179 = vpack.c.b16 %v1780, %v1773
        %v2180 = vpack.c.b16 %v1781, %v1774
        %v2181 = vpack.c.b16 %v1782, %v1775
        %v2182 = vpack.c.b16 %v1783, %v1776
        %v2183 = vpack.c.b16 %v1791, %v1784
        %v2184 = vpack.c.b16 %v1792, %v1785
        %v2185 = vpack.c.b16 %v1793, %v1786
        %v2186 = vpack.c.b16 %v1794, %v1787
        %v2187 = vpack.c.b16 %v1795, %v1788
        %v2188 = vpack.c.b16 %v1796, %v1789
        %v2189 = vpack.c.b16 %v1797, %v1790
        %v2190 = vpack.c.b16 %v1805, %v1798
        %v2191 = vpack.c.b16 %v1806, %v1799
        %v2192 = vpack.c.b16 %v1807, %v1800
        %v2193 = vpack.c.b16 %v1808, %v1801
        %v2194 = vpack.c.b16 %v1809, %v1802
        %v2195 = vpack.c.b16 %v1810, %v1803
        %v2196 = vpack.c.b16 %v1811, %v1804
        %v2197 = vpack.c.b16 %v1819, %v1812
        %v2198 = vpack.c.b16 %v1820, %v1813
        %v2199 = vpack.c.b16 %v1821, %v1814
        %v2200 = vpack.c.b16 %v1822, %v1815
        %v2201 = vpack.c.b16 %v1823, %v1816
        %v2202 = vpack.c.b16 %v1824, %v1817
        %v2203 = vpack.c.b16 %v1825, %v1818
        %v2204 = vpack.c.b16 %v1833, %v1826
        %v2205 = vpack.c.b16 %v1834, %v1827
        %v2206 = vpack.c.b16 %v1835, %v1828
        %v2207 = vpack.c.b16 %v1836, %v1829
        %v2208 = vpack.c.b16 %v1837, %v1830
        %v2209 = vpack.c.b16 %v1838, %v1831
        %v2210 = vpack.c.b16 %v1839, %v1832
        %v2211 = vpack.c.b16 %v1847, %v1840
        %v2212 = vpack.c.b16 %v1848, %v1841
        %v2213 = vpack.c.b16 %v1849, %v1842
        %v2214 = vpack.c.b16 %v1850, %v1843
        %v2215 = vpack.c.b16 %v1851, %v1844
        %v2216 = vpack.c.b16 %v1852, %v1845
        %v2217 = vpack.c.b16 %v1853, %v1846
        %v2218 = vpack.c.b16 %v1861, %v1854
        %v2219 = vpack.c.b16 %v1862, %v1855
        %v2220 = vpack.c.b16 %v1863, %v1856
        %v2221 = vpack.c.b16 %v1864, %v1857
        %v2222 = vpack.c.b16 %v1865, %v1858
        %v2223 = vpack.c.b16 %v1866, %v1859
        %v2224 = vpack.c.b16 %v1867, %v1860
        %v2225 = vpack.c.b16 %v1875, %v1868
        %v2226 = vpack.c.b16 %v1876, %v1869
        %v2227 = vpack.c.b16 %v1877, %v1870
        %v2228 = vpack.c.b16 %v1878, %v1871
        %v2229 = vpack.c.b16 %v1879, %v1872
        %v2230 = vpack.c.b16 %v1880, %v1873
        %v2231 = vpack.c.b16 %v1881, %v1874
        %v2232 = vpack.c.b16 %v1889, %v1882
        %v2233 = vpack.c.b16 %v1890, %v1883
        %v2234 = vpack.c.b16 %v1891, %v1884
        %v2235 = vpack.c.b16 %v1892, %v1885
        %v2236 = vpack.c.b16 %v1893, %v1886
        %v2237 = vpack.c.b16 %v1894, %v1887
        %v2238 = vpack.c.b16 %v1895, %v1888
        %vm2582 = vcmask 130048
        %v2584 = vsel %vm2582, %v388, 0
        %2586 = vmatprep.subr.bf16.mxu0 %v1946
        %2587 = vmatpush1.bf16.msra.mxu0 %v1945
        %2588 = vmatprep.subr.bf16.mxu0 %v1939
        %2589 = vmatpush1.bf16.msra.mxu0 %v1938
        %2590 = vmatprep.subr.bf16.mxu0 %v1932
        %2591 = vmatpush1.bf16.msra.mxu0 %v1931
        %2592 = vmatprep.subr.bf16.mxu0 %v1925
        %2593 = vmatpush1.bf16.msra.mxu0 %v1924
        %2594 = vmatprep.subr.bf16.mxu0 %v1918
        %2595 = vmatpush1.bf16.msra.mxu0 %v1917
        %2596 = vmatprep.subr.bf16.mxu0 %v1911
        %2597 = vmatpush1.bf16.msra.mxu0 %v1910
        %2598 = vmatprep.subr.bf16.mxu0 %v1904
        %2599 = vmatpush1.bf16.msra.mxu0 %v1903
        %2600 = vmatprep.subr.bf16.mxu0 %v1897
        %2601 = vmatpush1.bf16.msra.mxu0 %v1896
        %2602 = vmatprep.subr.bf16.mxu0 %v2002
        %2603 = vmatpush2.bf16.msra.mxu0 %v2001
        %2604 = vmatprep.subr.bf16.mxu0 %v1995
        %2605 = vmatpush2.bf16.msra.mxu0 %v1994
        %2606 = vmatprep.subr.bf16.mxu0 %v1988
        %2607 = vmatpush2.bf16.msra.mxu0 %v1987
        %2608 = vmatprep.subr.bf16.mxu0 %v1981
        %2609 = vmatpush2.bf16.msra.mxu0 %v1980
        %2610 = vmatprep.subr.bf16.mxu0 %v1974
        %2611 = vmatpush2.bf16.msra.mxu0 %v1973
        %2612 = vmatprep.subr.bf16.mxu0 %v1967
        %2613 = vmatpush2.bf16.msra.mxu0 %v1966
        %2614 = vmatprep.subr.bf16.mxu0 %v1960
        %2615 = vmatpush2.bf16.msra.mxu0 %v1959
        %2616 = vmatprep.subr.bf16.mxu0 %v1953
        %2617 = vmatpush2.bf16.msra.mxu0 %v1952
        %2618 = vmatprep.mubr.bf16.mxu0 %v383
        %2619 = vmatmul.mubr.bf16.gmra.mxu0 %v382
        %v2620 = vpop.f32.mrf.mxu0
        %v2621 = vadd.f32 %v786, %v2620
        %v2622 = vpop.f32.mrf.mxu0
        %v2623 = vadd.f32 %v790, %v2622
        %v2624 = vpop.f32.mrf.mxu0
        %v2625 = vadd.f32 %v786, %v2624
        %v2626 = vpop.f32.mrf.mxu0
        %v2627 = vadd.f32 %v790, %v2626
        %2628 = vdwg.mxu0
        %2629 = vmatprep.subr.bf16.mxu0 %v2058
        %2630 = vmatpush1.bf16.msra.mxu0 %v2057
        %2631 = vmatprep.subr.bf16.mxu0 %v2051
        %2632 = vmatpush1.bf16.msra.mxu0 %v2050
        %2633 = vmatprep.subr.bf16.mxu0 %v2044
        %2634 = vmatpush1.bf16.msra.mxu0 %v2043
        %2635 = vmatprep.subr.bf16.mxu0 %v2037
        %2636 = vmatpush1.bf16.msra.mxu0 %v2036
        %2637 = vmatprep.subr.bf16.mxu0 %v2030
        %2638 = vmatpush1.bf16.msra.mxu0 %v2029
        %2639 = vmatprep.subr.bf16.mxu0 %v2023
        %2640 = vmatpush1.bf16.msra.mxu0 %v2022
        %2641 = vmatprep.subr.bf16.mxu0 %v2016
        %2642 = vmatpush1.bf16.msra.mxu0 %v2015
        %2643 = vmatprep.subr.bf16.mxu0 %v2009
        %2644 = vmatpush1.bf16.msra.mxu0 %v2008
        %2645 = vmatprep.subr.bf16.mxu0 %v2114
        %2646 = vmatpush2.bf16.msra.mxu0 %v2113
        %2647 = vmatprep.subr.bf16.mxu0 %v2107
        %2648 = vmatpush2.bf16.msra.mxu0 %v2106
        %2649 = vmatprep.subr.bf16.mxu0 %v2100
        %2650 = vmatpush2.bf16.msra.mxu0 %v2099
        %2651 = vmatprep.subr.bf16.mxu0 %v2093
        %2652 = vmatpush2.bf16.msra.mxu0 %v2092
        %2653 = vmatprep.subr.bf16.mxu0 %v2086
        %2654 = vmatpush2.bf16.msra.mxu0 %v2085
        %2655 = vmatprep.subr.bf16.mxu0 %v2079
        %2656 = vmatpush2.bf16.msra.mxu0 %v2078
        %2657 = vmatprep.subr.bf16.mxu0 %v2072
        %2658 = vmatpush2.bf16.msra.mxu0 %v2071
        %2659 = vmatprep.subr.bf16.mxu0 %v2065
        %2660 = vmatpush2.bf16.msra.mxu0 %v2064
        %2661 = vmatprep.mubr.bf16.mxu0 %v385
        %2662 = vmatmul.mubr.bf16.gmra.mxu0 %v384
        %v2663 = vpop.f32.mrf.mxu0
        %v2664 = vadd.f32 %v2621, %v2663
        %v2665 = vpop.f32.mrf.mxu0
        %v2666 = vadd.f32 %v2623, %v2665
        %v2667 = vpop.f32.mrf.mxu0
        %v2668 = vadd.f32 %v2625, %v2667
        %v2669 = vpop.f32.mrf.mxu0
        %v2670 = vadd.f32 %v2627, %v2669
        %2671 = vdwg.mxu0
        %2672 = vmatprep.subr.bf16.mxu0 %v2170
        %2673 = vmatpush1.bf16.msra.mxu0 %v2169
        %2674 = vmatprep.subr.bf16.mxu0 %v2163
        %2675 = vmatpush1.bf16.msra.mxu0 %v2162
        %2676 = vmatprep.subr.bf16.mxu0 %v2156
        %2677 = vmatpush1.bf16.msra.mxu0 %v2155
        %2678 = vmatprep.subr.bf16.mxu0 %v2149
        %2679 = vmatpush1.bf16.msra.mxu0 %v2148
        %2680 = vmatprep.subr.bf16.mxu0 %v2142
        %2681 = vmatpush1.bf16.msra.mxu0 %v2141
        %2682 = vmatprep.subr.bf16.mxu0 %v2135
        %2683 = vmatpush1.bf16.msra.mxu0 %v2134
        %2684 = vmatprep.subr.bf16.mxu0 %v2128
        %2685 = vmatpush1.bf16.msra.mxu0 %v2127
        %2686 = vmatprep.subr.bf16.mxu0 %v2121
        %2687 = vmatpush1.bf16.msra.mxu0 %v2120
        %2688 = vmatprep.subr.bf16.mxu0 %v2226
        %2689 = vmatpush2.bf16.msra.mxu0 %v2225
        %2690 = vmatprep.subr.bf16.mxu0 %v2219
        %2691 = vmatpush2.bf16.msra.mxu0 %v2218
        %2692 = vmatprep.subr.bf16.mxu0 %v2212
        %2693 = vmatpush2.bf16.msra.mxu0 %v2211
        %2694 = vmatprep.subr.bf16.mxu0 %v2205
        %2695 = vmatpush2.bf16.msra.mxu0 %v2204
        %2696 = vmatprep.subr.bf16.mxu0 %v2198
        %2697 = vmatpush2.bf16.msra.mxu0 %v2197
        %2698 = vmatprep.subr.bf16.mxu0 %v2191
        %2699 = vmatpush2.bf16.msra.mxu0 %v2190
        %2700 = vmatprep.subr.bf16.mxu0 %v2184
        %2701 = vmatpush2.bf16.msra.mxu0 %v2183
        %2702 = vmatprep.subr.bf16.mxu0 %v2177
        %2703 = vmatpush2.bf16.msra.mxu0 %v2176
        %2704 = vmatprep.mubr.bf16.mxu0 %v387
        %2705 = vmatmul.mubr.bf16.gmra.mxu0 %v386
        %v2706 = vpop.f32.mrf.mxu0
        %v2707 = vadd.f32 %v2664, %v2706
        %v2708 = vpop.f32.mrf.mxu0
        %v2709 = vadd.f32 %v2666, %v2708
        %v2710 = vpop.f32.mrf.mxu0
        %v2711 = vadd.f32 %v2668, %v2710
        %v2712 = vpop.f32.mrf.mxu0
        %v2713 = vadd.f32 %v2670, %v2712
        %2714 = vdwg.mxu0
        %2715 = vmatprep.subr.bf16.mxu0 0
        %2716 = vmatpush1.bf16.msra.mxu0 0
        %2717 = vmatprep.subr.bf16.mxu0 0
        %2718 = vmatpush1.bf16.msra.mxu0 0
        %2719 = vmatprep.subr.bf16.mxu0 0
        %2720 = vmatpush1.bf16.msra.mxu0 0
        %2721 = vmatprep.subr.bf16.mxu0 0
        %2722 = vmatpush1.bf16.msra.mxu0 0
        %2723 = vmatprep.subr.bf16.mxu0 0
        %2724 = vmatpush1.bf16.msra.mxu0 0
        %2725 = vmatprep.subr.bf16.mxu0 0
        %2726 = vmatpush1.bf16.msra.mxu0 0
        %2727 = vmatprep.subr.bf16.mxu0 0
        %2728 = vmatpush1.bf16.msra.mxu0 0
        %2729 = vmatprep.subr.bf16.mxu0 %v2233
        %2730 = vmatpush1.bf16.msra.mxu0 %v2232
        %2731 = vmatprep.subr.bf16.mxu0 0
        %2732 = vmatpush2.bf16.msra.mxu0 0
        %2733 = vmatprep.subr.bf16.mxu0 0
        %2734 = vmatpush2.bf16.msra.mxu0 0
        %2735 = vmatprep.subr.bf16.mxu0 0
        %2736 = vmatpush2.bf16.msra.mxu0 0
        %2737 = vmatprep.subr.bf16.mxu0 0
        %2738 = vmatpush2.bf16.msra.mxu0 0
        %2739 = vmatprep.subr.bf16.mxu0 0
        %2740 = vmatpush2.bf16.msra.mxu0 0
        %2741 = vmatprep.subr.bf16.mxu0 0
        %2742 = vmatpush2.bf16.msra.mxu0 0
        %2743 = vmatprep.subr.bf16.mxu0 0
        %2744 = vmatpush2.bf16.msra.mxu0 0
        %2745 = vmatprep.subr.bf16.mxu0 0
        %2746 = vmatpush2.bf16.msra.mxu0 0
        %2747 = vmatprep.mubr.bf16.mxu0 0
        %2748 = vmatmul.mubr.bf16.gmra.mxu0 %v2584
        %v2749 = vpop.f32.mrf.mxu0
        %v2750 = vadd.f32 %v2707, %v2749
        %v2751 = vpop.f32.mrf.mxu0
        %v2752 = vadd.f32 %v2709, %v2751
        %v2753 = vpop.f32.mrf.mxu0
        %v2754 = vadd.f32 %v2711, %v2753
        %v2755 = vpop.f32.mrf.mxu0
        %v2756 = vadd.f32 %v2713, %v2755
        %2757 = vdwg.mxu0
        %2758 = vmatprep.subr.bf16.mxu0 %v1948
        %2759 = vmatpush1.bf16.msra.mxu0 %v1947
        %2760 = vmatprep.subr.bf16.mxu0 %v1941
        %2761 = vmatpush1.bf16.msra.mxu0 %v1940
        %2762 = vmatprep.subr.bf16.mxu0 %v1934
        %2763 = vmatpush1.bf16.msra.mxu0 %v1933
        %2764 = vmatprep.subr.bf16.mxu0 %v1927
        %2765 = vmatpush1.bf16.msra.mxu0 %v1926
        %2766 = vmatprep.subr.bf16.mxu0 %v1920
        %2767 = vmatpush1.bf16.msra.mxu0 %v1919
        %2768 = vmatprep.subr.bf16.mxu0 %v1913
        %2769 = vmatpush1.bf16.msra.mxu0 %v1912
        %2770 = vmatprep.subr.bf16.mxu0 %v1906
        %2771 = vmatpush1.bf16.msra.mxu0 %v1905
        %2772 = vmatprep.subr.bf16.mxu0 %v1899
        %2773 = vmatpush1.bf16.msra.mxu0 %v1898
        %2774 = vmatprep.subr.bf16.mxu0 %v2004
        %2775 = vmatpush2.bf16.msra.mxu0 %v2003
        %2776 = vmatprep.subr.bf16.mxu0 %v1997
        %2777 = vmatpush2.bf16.msra.mxu0 %v1996
        %2778 = vmatprep.subr.bf16.mxu0 %v1990
        %2779 = vmatpush2.bf16.msra.mxu0 %v1989
        %2780 = vmatprep.subr.bf16.mxu0 %v1983
        %2781 = vmatpush2.bf16.msra.mxu0 %v1982
        %2782 = vmatprep.subr.bf16.mxu0 %v1976
        %2783 = vmatpush2.bf16.msra.mxu0 %v1975
        %2784 = vmatprep.subr.bf16.mxu0 %v1969
        %2785 = vmatpush2.bf16.msra.mxu0 %v1968
        %2786 = vmatprep.subr.bf16.mxu0 %v1962
        %2787 = vmatpush2.bf16.msra.mxu0 %v1961
        %2788 = vmatprep.subr.bf16.mxu0 %v1955
        %2789 = vmatpush2.bf16.msra.mxu0 %v1954
        %2790 = vmatprep.mubr.bf16.mxu0 %v383
        %2791 = vmatmul.mubr.bf16.gmra.mxu0 %v382
        %v2792 = vpop.f32.mrf.mxu0
        %v2793 = vadd.f32 %v794, %v2792
        %v2794 = vpop.f32.mrf.mxu0
        %v2795 = vadd.f32 %v798, %v2794
        %v2796 = vpop.f32.mrf.mxu0
        %v2797 = vadd.f32 %v794, %v2796
        %v2798 = vpop.f32.mrf.mxu0
        %v2799 = vadd.f32 %v798, %v2798
        %2800 = vdwg.mxu0
        %2801 = vmatprep.subr.bf16.mxu0 %v2060
        %2802 = vmatpush1.bf16.msra.mxu0 %v2059
        %2803 = vmatprep.subr.bf16.mxu0 %v2053
        %2804 = vmatpush1.bf16.msra.mxu0 %v2052
        %2805 = vmatprep.subr.bf16.mxu0 %v2046
        %2806 = vmatpush1.bf16.msra.mxu0 %v2045
        %2807 = vmatprep.subr.bf16.mxu0 %v2039
        %2808 = vmatpush1.bf16.msra.mxu0 %v2038
        %2809 = vmatprep.subr.bf16.mxu0 %v2032
        %2810 = vmatpush1.bf16.msra.mxu0 %v2031
        %2811 = vmatprep.subr.bf16.mxu0 %v2025
        %2812 = vmatpush1.bf16.msra.mxu0 %v2024
        %2813 = vmatprep.subr.bf16.mxu0 %v2018
        %2814 = vmatpush1.bf16.msra.mxu0 %v2017
        %2815 = vmatprep.subr.bf16.mxu0 %v2011
        %2816 = vmatpush1.bf16.msra.mxu0 %v2010
        %2817 = vmatprep.subr.bf16.mxu0 %v2116
        %2818 = vmatpush2.bf16.msra.mxu0 %v2115
        %2819 = vmatprep.subr.bf16.mxu0 %v2109
        %2820 = vmatpush2.bf16.msra.mxu0 %v2108
        %2821 = vmatprep.subr.bf16.mxu0 %v2102
        %2822 = vmatpush2.bf16.msra.mxu0 %v2101
        %2823 = vmatprep.subr.bf16.mxu0 %v2095
        %2824 = vmatpush2.bf16.msra.mxu0 %v2094
        %2825 = vmatprep.subr.bf16.mxu0 %v2088
        %2826 = vmatpush2.bf16.msra.mxu0 %v2087
        %2827 = vmatprep.subr.bf16.mxu0 %v2081
        %2828 = vmatpush2.bf16.msra.mxu0 %v2080
        %2829 = vmatprep.subr.bf16.mxu0 %v2074
        %2830 = vmatpush2.bf16.msra.mxu0 %v2073
        %2831 = vmatprep.subr.bf16.mxu0 %v2067
        %2832 = vmatpush2.bf16.msra.mxu0 %v2066
        %2833 = vmatprep.mubr.bf16.mxu0 %v385
        %2834 = vmatmul.mubr.bf16.gmra.mxu0 %v384
        %v2835 = vpop.f32.mrf.mxu0
        %v2836 = vadd.f32 %v2793, %v2835
        %v2837 = vpop.f32.mrf.mxu0
        %v2838 = vadd.f32 %v2795, %v2837
        %v2839 = vpop.f32.mrf.mxu0
        %v2840 = vadd.f32 %v2797, %v2839
        %v2841 = vpop.f32.mrf.mxu0
        %v2842 = vadd.f32 %v2799, %v2841
        %2843 = vdwg.mxu0
        %2844 = vmatprep.subr.bf16.mxu0 %v2172
        %2845 = vmatpush1.bf16.msra.mxu0 %v2171
        %2846 = vmatprep.subr.bf16.mxu0 %v2165
        %2847 = vmatpush1.bf16.msra.mxu0 %v2164
        %2848 = vmatprep.subr.bf16.mxu0 %v2158
        %2849 = vmatpush1.bf16.msra.mxu0 %v2157
        %2850 = vmatprep.subr.bf16.mxu0 %v2151
        %2851 = vmatpush1.bf16.msra.mxu0 %v2150
        %2852 = vmatprep.subr.bf16.mxu0 %v2144
        %2853 = vmatpush1.bf16.msra.mxu0 %v2143
        %2854 = vmatprep.subr.bf16.mxu0 %v2137
        %2855 = vmatpush1.bf16.msra.mxu0 %v2136
        %2856 = vmatprep.subr.bf16.mxu0 %v2130
        %2857 = vmatpush1.bf16.msra.mxu0 %v2129
        %2858 = vmatprep.subr.bf16.mxu0 %v2123
        %2859 = vmatpush1.bf16.msra.mxu0 %v2122
        %2860 = vmatprep.subr.bf16.mxu0 %v2228
        %2861 = vmatpush2.bf16.msra.mxu0 %v2227
        %2862 = vmatprep.subr.bf16.mxu0 %v2221
        %2863 = vmatpush2.bf16.msra.mxu0 %v2220
        %2864 = vmatprep.subr.bf16.mxu0 %v2214
        %2865 = vmatpush2.bf16.msra.mxu0 %v2213
        %2866 = vmatprep.subr.bf16.mxu0 %v2207
        %2867 = vmatpush2.bf16.msra.mxu0 %v2206
        %2868 = vmatprep.subr.bf16.mxu0 %v2200
        %2869 = vmatpush2.bf16.msra.mxu0 %v2199
        %2870 = vmatprep.subr.bf16.mxu0 %v2193
        %2871 = vmatpush2.bf16.msra.mxu0 %v2192
        %2872 = vmatprep.subr.bf16.mxu0 %v2186
        %2873 = vmatpush2.bf16.msra.mxu0 %v2185
        %2874 = vmatprep.subr.bf16.mxu0 %v2179
        %2875 = vmatpush2.bf16.msra.mxu0 %v2178
        %2876 = vmatprep.mubr.bf16.mxu0 %v387
        %2877 = vmatmul.mubr.bf16.gmra.mxu0 %v386
        %v2878 = vpop.f32.mrf.mxu0
        %v2879 = vadd.f32 %v2836, %v2878
        %v2880 = vpop.f32.mrf.mxu0
        %v2881 = vadd.f32 %v2838, %v2880
        %v2882 = vpop.f32.mrf.mxu0
        %v2883 = vadd.f32 %v2840, %v2882
        %v2884 = vpop.f32.mrf.mxu0
        %v2885 = vadd.f32 %v2842, %v2884
        %2886 = vdwg.mxu0
        %2887 = vmatprep.subr.bf16.mxu0 0
        %2888 = vmatpush1.bf16.msra.mxu0 0
        %2889 = vmatprep.subr.bf16.mxu0 0
        %2890 = vmatpush1.bf16.msra.mxu0 0
        %2891 = vmatprep.subr.bf16.mxu0 0
        %2892 = vmatpush1.bf16.msra.mxu0 0
        %2893 = vmatprep.subr.bf16.mxu0 0
        %2894 = vmatpush1.bf16.msra.mxu0 0
        %2895 = vmatprep.subr.bf16.mxu0 0
        %2896 = vmatpush1.bf16.msra.mxu0 0
        %2897 = vmatprep.subr.bf16.mxu0 0
        %2898 = vmatpush1.bf16.msra.mxu0 0
        %2899 = vmatprep.subr.bf16.mxu0 0
        %2900 = vmatpush1.bf16.msra.mxu0 0
        %2901 = vmatprep.subr.bf16.mxu0 %v2235
        %2902 = vmatpush1.bf16.msra.mxu0 %v2234
        %2903 = vmatprep.subr.bf16.mxu0 0
        %2904 = vmatpush2.bf16.msra.mxu0 0
        %2905 = vmatprep.subr.bf16.mxu0 0
        %2906 = vmatpush2.bf16.msra.mxu0 0
        %2907 = vmatprep.subr.bf16.mxu0 0
        %2908 = vmatpush2.bf16.msra.mxu0 0
        %2909 = vmatprep.subr.bf16.mxu0 0
        %2910 = vmatpush2.bf16.msra.mxu0 0
        %2911 = vmatprep.subr.bf16.mxu0 0
        %2912 = vmatpush2.bf16.msra.mxu0 0
        %2913 = vmatprep.subr.bf16.mxu0 0
        %2914 = vmatpush2.bf16.msra.mxu0 0
        %2915 = vmatprep.subr.bf16.mxu0 0
        %2916 = vmatpush2.bf16.msra.mxu0 0
        %2917 = vmatprep.subr.bf16.mxu0 0
        %2918 = vmatpush2.bf16.msra.mxu0 0
        %2919 = vmatprep.mubr.bf16.mxu0 0
        %2920 = vmatmul.mubr.bf16.gmra.mxu0 %v2584
        %v2921 = vpop.f32.mrf.mxu0
        %v2922 = vadd.f32 %v2879, %v2921
        %v2923 = vpop.f32.mrf.mxu0
        %v2924 = vadd.f32 %v2881, %v2923
        %v2925 = vpop.f32.mrf.mxu0
        %v2926 = vadd.f32 %v2883, %v2925
        %v2927 = vpop.f32.mrf.mxu0
        %v2928 = vadd.f32 %v2885, %v2927
        %2929 = vdwg.mxu0
        %2930 = vmatprep.subr.bf16.mxu0 %v1950
        %2931 = vmatpush1.bf16.msra.mxu0 %v1949
        %2932 = vmatprep.subr.bf16.mxu0 %v1943
        %2933 = vmatpush1.bf16.msra.mxu0 %v1942
        %2934 = vmatprep.subr.bf16.mxu0 %v1936
        %2935 = vmatpush1.bf16.msra.mxu0 %v1935
        %2936 = vmatprep.subr.bf16.mxu0 %v1929
        %2937 = vmatpush1.bf16.msra.mxu0 %v1928
        %2938 = vmatprep.subr.bf16.mxu0 %v1922
        %2939 = vmatpush1.bf16.msra.mxu0 %v1921
        %2940 = vmatprep.subr.bf16.mxu0 %v1915
        %2941 = vmatpush1.bf16.msra.mxu0 %v1914
        %2942 = vmatprep.subr.bf16.mxu0 %v1908
        %2943 = vmatpush1.bf16.msra.mxu0 %v1907
        %2944 = vmatprep.subr.bf16.mxu0 %v1901
        %2945 = vmatpush1.bf16.msra.mxu0 %v1900
        %2946 = vmatprep.subr.bf16.mxu0 %v2006
        %2947 = vmatpush2.bf16.msra.mxu0 %v2005
        %2948 = vmatprep.subr.bf16.mxu0 %v1999
        %2949 = vmatpush2.bf16.msra.mxu0 %v1998
        %2950 = vmatprep.subr.bf16.mxu0 %v1992
        %2951 = vmatpush2.bf16.msra.mxu0 %v1991
        %2952 = vmatprep.subr.bf16.mxu0 %v1985
        %2953 = vmatpush2.bf16.msra.mxu0 %v1984
        %2954 = vmatprep.subr.bf16.mxu0 %v1978
        %2955 = vmatpush2.bf16.msra.mxu0 %v1977
        %2956 = vmatprep.subr.bf16.mxu0 %v1971
        %2957 = vmatpush2.bf16.msra.mxu0 %v1970
        %2958 = vmatprep.subr.bf16.mxu0 %v1964
        %2959 = vmatpush2.bf16.msra.mxu0 %v1963
        %2960 = vmatprep.subr.bf16.mxu0 %v1957
        %2961 = vmatpush2.bf16.msra.mxu0 %v1956
        %2962 = vmatprep.mubr.bf16.mxu0 %v383
        %2963 = vmatmul.mubr.bf16.gmra.mxu0 %v382
        %v2964 = vpop.f32.mrf.mxu0
        %v2965 = vadd.f32 %v802, %v2964
        %v2966 = vpop.f32.mrf.mxu0
        %v2967 = vadd.f32 %v806, %v2966
        %v2968 = vpop.f32.mrf.mxu0
        %v2969 = vadd.f32 %v802, %v2968
        %v2970 = vpop.f32.mrf.mxu0
        %v2971 = vadd.f32 %v806, %v2970
        %2972 = vdwg.mxu0
        %2973 = vmatprep.subr.bf16.mxu0 %v2062
        %2974 = vmatpush1.bf16.msra.mxu0 %v2061
        %2975 = vmatprep.subr.bf16.mxu0 %v2055
        %2976 = vmatpush1.bf16.msra.mxu0 %v2054
        %2977 = vmatprep.subr.bf16.mxu0 %v2048
        %2978 = vmatpush1.bf16.msra.mxu0 %v2047
        %2979 = vmatprep.subr.bf16.mxu0 %v2041
        %2980 = vmatpush1.bf16.msra.mxu0 %v2040
        %2981 = vmatprep.subr.bf16.mxu0 %v2034
        %2982 = vmatpush1.bf16.msra.mxu0 %v2033
        %2983 = vmatprep.subr.bf16.mxu0 %v2027
        %2984 = vmatpush1.bf16.msra.mxu0 %v2026
        %2985 = vmatprep.subr.bf16.mxu0 %v2020
        %2986 = vmatpush1.bf16.msra.mxu0 %v2019
        %2987 = vmatprep.subr.bf16.mxu0 %v2013
        %2988 = vmatpush1.bf16.msra.mxu0 %v2012
        %2989 = vmatprep.subr.bf16.mxu0 %v2118
        %2990 = vmatpush2.bf16.msra.mxu0 %v2117
        %2991 = vmatprep.subr.bf16.mxu0 %v2111
        %2992 = vmatpush2.bf16.msra.mxu0 %v2110
        %2993 = vmatprep.subr.bf16.mxu0 %v2104
        %2994 = vmatpush2.bf16.msra.mxu0 %v2103
        %2995 = vmatprep.subr.bf16.mxu0 %v2097
        %2996 = vmatpush2.bf16.msra.mxu0 %v2096
        %2997 = vmatprep.subr.bf16.mxu0 %v2090
        %2998 = vmatpush2.bf16.msra.mxu0 %v2089
        %2999 = vmatprep.subr.bf16.mxu0 %v2083
        %3000 = vmatpush2.bf16.msra.mxu0 %v2082
        %3001 = vmatprep.subr.bf16.mxu0 %v2076
        %3002 = vmatpush2.bf16.msra.mxu0 %v2075
        %3003 = vmatprep.subr.bf16.mxu0 %v2069
        %3004 = vmatpush2.bf16.msra.mxu0 %v2068
        %3005 = vmatprep.mubr.bf16.mxu0 %v385
        %3006 = vmatmul.mubr.bf16.gmra.mxu0 %v384
        %v3007 = vpop.f32.mrf.mxu0
        %v3008 = vadd.f32 %v2965, %v3007
        %v3009 = vpop.f32.mrf.mxu0
        %v3010 = vadd.f32 %v2967, %v3009
        %v3011 = vpop.f32.mrf.mxu0
        %v3012 = vadd.f32 %v2969, %v3011
        %v3013 = vpop.f32.mrf.mxu0
        %v3014 = vadd.f32 %v2971, %v3013
        %3015 = vdwg.mxu0
        %3016 = vmatprep.subr.bf16.mxu0 %v2174
        %3017 = vmatpush1.bf16.msra.mxu0 %v2173
        %3018 = vmatprep.subr.bf16.mxu0 %v2167
        %3019 = vmatpush1.bf16.msra.mxu0 %v2166
        %3020 = vmatprep.subr.bf16.mxu0 %v2160
        %3021 = vmatpush1.bf16.msra.mxu0 %v2159
        %3022 = vmatprep.subr.bf16.mxu0 %v2153
        %3023 = vmatpush1.bf16.msra.mxu0 %v2152
        %3024 = vmatprep.subr.bf16.mxu0 %v2146
        %3025 = vmatpush1.bf16.msra.mxu0 %v2145
        %3026 = vmatprep.subr.bf16.mxu0 %v2139
        %3027 = vmatpush1.bf16.msra.mxu0 %v2138
        %3028 = vmatprep.subr.bf16.mxu0 %v2132
        %3029 = vmatpush1.bf16.msra.mxu0 %v2131
        %3030 = vmatprep.subr.bf16.mxu0 %v2125
        %3031 = vmatpush1.bf16.msra.mxu0 %v2124
        %3032 = vmatprep.subr.bf16.mxu0 %v2230
        %3033 = vmatpush2.bf16.msra.mxu0 %v2229
        %3034 = vmatprep.subr.bf16.mxu0 %v2223
        %3035 = vmatpush2.bf16.msra.mxu0 %v2222
        %3036 = vmatprep.subr.bf16.mxu0 %v2216
        %3037 = vmatpush2.bf16.msra.mxu0 %v2215
        %3038 = vmatprep.subr.bf16.mxu0 %v2209
        %3039 = vmatpush2.bf16.msra.mxu0 %v2208
        %3040 = vmatprep.subr.bf16.mxu0 %v2202
        %3041 = vmatpush2.bf16.msra.mxu0 %v2201
        %3042 = vmatprep.subr.bf16.mxu0 %v2195
        %3043 = vmatpush2.bf16.msra.mxu0 %v2194
        %3044 = vmatprep.subr.bf16.mxu0 %v2188
        %3045 = vmatpush2.bf16.msra.mxu0 %v2187
        %3046 = vmatprep.subr.bf16.mxu0 %v2181
        %3047 = vmatpush2.bf16.msra.mxu0 %v2180
        %3048 = vmatprep.mubr.bf16.mxu0 %v387
        %3049 = vmatmul.mubr.bf16.gmra.mxu0 %v386
        %v3050 = vpop.f32.mrf.mxu0
        %v3051 = vadd.f32 %v3008, %v3050
        %v3052 = vpop.f32.mrf.mxu0
        %v3053 = vadd.f32 %v3010, %v3052
        %v3054 = vpop.f32.mrf.mxu0
        %v3055 = vadd.f32 %v3012, %v3054
        %v3056 = vpop.f32.mrf.mxu0
        %v3057 = vadd.f32 %v3014, %v3056
        %3058 = vdwg.mxu0
        %3059 = vmatprep.subr.bf16.mxu0 0
        %3060 = vmatpush1.bf16.msra.mxu0 0
        %3061 = vmatprep.subr.bf16.mxu0 0
        %3062 = vmatpush1.bf16.msra.mxu0 0
        %3063 = vmatprep.subr.bf16.mxu0 0
        %3064 = vmatpush1.bf16.msra.mxu0 0
        %3065 = vmatprep.subr.bf16.mxu0 0
        %3066 = vmatpush1.bf16.msra.mxu0 0
        %3067 = vmatprep.subr.bf16.mxu0 0
        %3068 = vmatpush1.bf16.msra.mxu0 0
        %3069 = vmatprep.subr.bf16.mxu0 0
        %3070 = vmatpush1.bf16.msra.mxu0 0
        %3071 = vmatprep.subr.bf16.mxu0 0
        %3072 = vmatpush1.bf16.msra.mxu0 0
        %3073 = vmatprep.subr.bf16.mxu0 %v2237
        %3074 = vmatpush1.bf16.msra.mxu0 %v2236
        %3075 = vmatprep.subr.bf16.mxu0 0
        %3076 = vmatpush2.bf16.msra.mxu0 0
        %3077 = vmatprep.subr.bf16.mxu0 0
        %3078 = vmatpush2.bf16.msra.mxu0 0
        %3079 = vmatprep.subr.bf16.mxu0 0
        %3080 = vmatpush2.bf16.msra.mxu0 0
        %3081 = vmatprep.subr.bf16.mxu0 0
        %3082 = vmatpush2.bf16.msra.mxu0 0
        %3083 = vmatprep.subr.bf16.mxu0 0
        %3084 = vmatpush2.bf16.msra.mxu0 0
        %3085 = vmatprep.subr.bf16.mxu0 0
        %3086 = vmatpush2.bf16.msra.mxu0 0
        %3087 = vmatprep.subr.bf16.mxu0 0
        %3088 = vmatpush2.bf16.msra.mxu0 0
        %3089 = vmatprep.subr.bf16.mxu0 0
        %3090 = vmatpush2.bf16.msra.mxu0 0
        %3091 = vmatprep.mubr.bf16.mxu0 0
        %3092 = vmatmul.mubr.bf16.gmra.mxu0 %v2584
        %v3093 = vpop.f32.mrf.mxu0
        %v3094 = vadd.f32 %v3051, %v3093
        %v3095 = vpop.f32.mrf.mxu0
        %v3096 = vadd.f32 %v3053, %v3095
        %v3097 = vpop.f32.mrf.mxu0
        %v3098 = vadd.f32 %v3055, %v3097
        %v3099 = vpop.f32.mrf.mxu0
        %v3100 = vadd.f32 %v3057, %v3099
        %3101 = vdwg.mxu0
        %3102 = vmatprep.subr.bf16.mxu0 0
        %3103 = vmatpush1.bf16.msra.mxu0 %v1951
        %3104 = vmatprep.subr.bf16.mxu0 0
        %3105 = vmatpush1.bf16.msra.mxu0 %v1944
        %3106 = vmatprep.subr.bf16.mxu0 0
        %3107 = vmatpush1.bf16.msra.mxu0 %v1937
        %3108 = vmatprep.subr.bf16.mxu0 0
        %3109 = vmatpush1.bf16.msra.mxu0 %v1930
        %3110 = vmatprep.subr.bf16.mxu0 0
        %3111 = vmatpush1.bf16.msra.mxu0 %v1923
        %3112 = vmatprep.subr.bf16.mxu0 0
        %3113 = vmatpush1.bf16.msra.mxu0 %v1916
        %3114 = vmatprep.subr.bf16.mxu0 0
        %3115 = vmatpush1.bf16.msra.mxu0 %v1909
        %3116 = vmatprep.subr.bf16.mxu0 0
        %3117 = vmatpush1.bf16.msra.mxu0 %v1902
        %3118 = vmatprep.subr.bf16.mxu0 0
        %3119 = vmatpush2.bf16.msra.mxu0 %v2007
        %3120 = vmatprep.subr.bf16.mxu0 0
        %3121 = vmatpush2.bf16.msra.mxu0 %v2000
        %3122 = vmatprep.subr.bf16.mxu0 0
        %3123 = vmatpush2.bf16.msra.mxu0 %v1993
        %3124 = vmatprep.subr.bf16.mxu0 0
        %3125 = vmatpush2.bf16.msra.mxu0 %v1986
        %3126 = vmatprep.subr.bf16.mxu0 0
        %3127 = vmatpush2.bf16.msra.mxu0 %v1979
        %3128 = vmatprep.subr.bf16.mxu0 0
        %3129 = vmatpush2.bf16.msra.mxu0 %v1972
        %3130 = vmatprep.subr.bf16.mxu0 0
        %3131 = vmatpush2.bf16.msra.mxu0 %v1965
        %3132 = vmatprep.subr.bf16.mxu0 0
        %3133 = vmatpush2.bf16.msra.mxu0 %v1958
        %3134 = vmatprep.mubr.bf16.mxu0 %v383
        %3135 = vmatmul.mubr.bf16.gmra.mxu0 %v382
        %v3136 = vpop.f32.mrf.mxu0
        %v3137 = vadd.f32 %v810, %v3136
        %v3138 = vpop.f32.mrf.mxu0
        %v3139 = vpop.f32.mrf.mxu0
        %v3140 = vadd.f32 %v810, %v3139
        %v3141 = vpop.f32.mrf.mxu0
        %3142 = vdwg.mxu0
        %3143 = vmatprep.subr.bf16.mxu0 0
        %3144 = vmatpush1.bf16.msra.mxu0 %v2063
        %3145 = vmatprep.subr.bf16.mxu0 0
        %3146 = vmatpush1.bf16.msra.mxu0 %v2056
        %3147 = vmatprep.subr.bf16.mxu0 0
        %3148 = vmatpush1.bf16.msra.mxu0 %v2049
        %3149 = vmatprep.subr.bf16.mxu0 0
        %3150 = vmatpush1.bf16.msra.mxu0 %v2042
        %3151 = vmatprep.subr.bf16.mxu0 0
        %3152 = vmatpush1.bf16.msra.mxu0 %v2035
        %3153 = vmatprep.subr.bf16.mxu0 0
        %3154 = vmatpush1.bf16.msra.mxu0 %v2028
        %3155 = vmatprep.subr.bf16.mxu0 0
        %3156 = vmatpush1.bf16.msra.mxu0 %v2021
        %3157 = vmatprep.subr.bf16.mxu0 0
        %3158 = vmatpush1.bf16.msra.mxu0 %v2014
        %3159 = vmatprep.subr.bf16.mxu0 0
        %3160 = vmatpush2.bf16.msra.mxu0 %v2119
        %3161 = vmatprep.subr.bf16.mxu0 0
        %3162 = vmatpush2.bf16.msra.mxu0 %v2112
        %3163 = vmatprep.subr.bf16.mxu0 0
        %3164 = vmatpush2.bf16.msra.mxu0 %v2105
        %3165 = vmatprep.subr.bf16.mxu0 0
        %3166 = vmatpush2.bf16.msra.mxu0 %v2098
        %3167 = vmatprep.subr.bf16.mxu0 0
        %3168 = vmatpush2.bf16.msra.mxu0 %v2091
        %3169 = vmatprep.subr.bf16.mxu0 0
        %3170 = vmatpush2.bf16.msra.mxu0 %v2084
        %3171 = vmatprep.subr.bf16.mxu0 0
        %3172 = vmatpush2.bf16.msra.mxu0 %v2077
        %3173 = vmatprep.subr.bf16.mxu0 0
        %3174 = vmatpush2.bf16.msra.mxu0 %v2070
        %3175 = vmatprep.mubr.bf16.mxu0 %v385
        %3176 = vmatmul.mubr.bf16.gmra.mxu0 %v384
        %v3177 = vpop.f32.mrf.mxu0
        %v3178 = vadd.f32 %v3137, %v3177
        %v3179 = vpop.f32.mrf.mxu0
        %v3180 = vpop.f32.mrf.mxu0
        %v3181 = vadd.f32 %v3140, %v3180
        %v3182 = vpop.f32.mrf.mxu0
        %3183 = vdwg.mxu0
        %3184 = vmatprep.subr.bf16.mxu0 0
        %3185 = vmatpush1.bf16.msra.mxu0 %v2175
        %3186 = vmatprep.subr.bf16.mxu0 0
        %3187 = vmatpush1.bf16.msra.mxu0 %v2168
        %3188 = vmatprep.subr.bf16.mxu0 0
        %3189 = vmatpush1.bf16.msra.mxu0 %v2161
        %3190 = vmatprep.subr.bf16.mxu0 0
        %3191 = vmatpush1.bf16.msra.mxu0 %v2154
        %3192 = vmatprep.subr.bf16.mxu0 0
        %3193 = vmatpush1.bf16.msra.mxu0 %v2147
        %3194 = vmatprep.subr.bf16.mxu0 0
        %3195 = vmatpush1.bf16.msra.mxu0 %v2140
        %3196 = vmatprep.subr.bf16.mxu0 0
        %3197 = vmatpush1.bf16.msra.mxu0 %v2133
        %3198 = vmatprep.subr.bf16.mxu0 0
        %3199 = vmatpush1.bf16.msra.mxu0 %v2126
        %3200 = vmatprep.subr.bf16.mxu0 0
        %3201 = vmatpush2.bf16.msra.mxu0 %v2231
        %3202 = vmatprep.subr.bf16.mxu0 0
        %3203 = vmatpush2.bf16.msra.mxu0 %v2224
        %3204 = vmatprep.subr.bf16.mxu0 0
        %3205 = vmatpush2.bf16.msra.mxu0 %v2217
        %3206 = vmatprep.subr.bf16.mxu0 0
        %3207 = vmatpush2.bf16.msra.mxu0 %v2210
        %3208 = vmatprep.subr.bf16.mxu0 0
        %3209 = vmatpush2.bf16.msra.mxu0 %v2203
        %3210 = vmatprep.subr.bf16.mxu0 0
        %3211 = vmatpush2.bf16.msra.mxu0 %v2196
        %3212 = vmatprep.subr.bf16.mxu0 0
        %3213 = vmatpush2.bf16.msra.mxu0 %v2189
        %3214 = vmatprep.subr.bf16.mxu0 0
        %3215 = vmatpush2.bf16.msra.mxu0 %v2182
        %3216 = vmatprep.mubr.bf16.mxu0 %v387
        %3217 = vmatmul.mubr.bf16.gmra.mxu0 %v386
        %v3218 = vpop.f32.mrf.mxu0
        %v3219 = vadd.f32 %v3178, %v3218
        %v3220 = vpop.f32.mrf.mxu0
        %v3221 = vpop.f32.mrf.mxu0
        %v3222 = vadd.f32 %v3181, %v3221
        %v3223 = vpop.f32.mrf.mxu0
        %3224 = vdwg.mxu0
        %3225 = vmatprep.subr.bf16.mxu0 0
        %3226 = vmatpush1.bf16.msra.mxu0 0
        %3227 = vmatprep.subr.bf16.mxu0 0
        %3228 = vmatpush1.bf16.msra.mxu0 0
        %3229 = vmatprep.subr.bf16.mxu0 0
        %3230 = vmatpush1.bf16.msra.mxu0 0
        %3231 = vmatprep.subr.bf16.mxu0 0
        %3232 = vmatpush1.bf16.msra.mxu0 0
        %3233 = vmatprep.subr.bf16.mxu0 0
        %3234 = vmatpush1.bf16.msra.mxu0 0
        %3235 = vmatprep.subr.bf16.mxu0 0
        %3236 = vmatpush1.bf16.msra.mxu0 0
        %3237 = vmatprep.subr.bf16.mxu0 0
        %3238 = vmatpush1.bf16.msra.mxu0 0
        %3239 = vmatprep.subr.bf16.mxu0 0
        %3240 = vmatpush1.bf16.msra.mxu0 %v2238
        %3241 = vmatprep.subr.bf16.mxu0 0
        %3242 = vmatpush2.bf16.msra.mxu0 0
        %3243 = vmatprep.subr.bf16.mxu0 0
        %3244 = vmatpush2.bf16.msra.mxu0 0
        %3245 = vmatprep.subr.bf16.mxu0 0
        %3246 = vmatpush2.bf16.msra.mxu0 0
        %3247 = vmatprep.subr.bf16.mxu0 0
        %3248 = vmatpush2.bf16.msra.mxu0 0
        %3249 = vmatprep.subr.bf16.mxu0 0
        %3250 = vmatpush2.bf16.msra.mxu0 0
        %3251 = vmatprep.subr.bf16.mxu0 0
        %3252 = vmatpush2.bf16.msra.mxu0 0
        %3253 = vmatprep.subr.bf16.mxu0 0
        %3254 = vmatpush2.bf16.msra.mxu0 0
        %3255 = vmatprep.subr.bf16.mxu0 0
        %3256 = vmatpush2.bf16.msra.mxu0 0
        %3257 = vmatprep.mubr.bf16.mxu0 0
        %3258 = vmatmul.mubr.bf16.gmra.mxu0 %v2584
        %v3259 = vpop.f32.mrf.mxu0
        %v3260 = vadd.f32 %v3219, %v3259
        %v3261 = vpop.f32.mrf.mxu0
        %v3262 = vpop.f32.mrf.mxu0
        %v3263 = vadd.f32 %v3222, %v3262
        %v3264 = vpop.f32.mrf.mxu0
        %3265 = vdwg.mxu0
        %v3266 = vmax.f32 %v2750, 0.0
        %v3267 = vmax.f32 %v2752, 0.0
        %v3268 = vmax.f32 %v2922, 0.0
        %v3269 = vmax.f32 %v2924, 0.0
        %v3270 = vmax.f32 %v3094, 0.0
        %v3271 = vmax.f32 %v3096, 0.0
        %v3272 = vmax.f32 %v3260, 0.0
        %v3273 = vmax.f32 %v2754, 0.0
        %v3274 = vmax.f32 %v2756, 0.0
        %v3275 = vmax.f32 %v2926, 0.0
        %v3276 = vmax.f32 %v2928, 0.0
        %v3277 = vmax.f32 %v3098, 0.0
        %v3278 = vmax.f32 %v3100, 0.0
        %v3279 = vmax.f32 %v3263, 0.0
        %v3280 = vpack.c.bf16 %v3273, %v3266
        %v3281 = vpack.c.bf16 %v3274, %v3267
        %v3282 = vpack.c.bf16 %v3275, %v3268
        %v3283 = vpack.c.bf16 %v3276, %v3269
        %v3284 = vpack.c.bf16 %v3277, %v3270
        %v3285 = vpack.c.bf16 %v3278, %v3271
        %v3286 = vpack.c.bf16 %v3279, %v3272
        %v3287 = vld [vmem:[#allocation6] sm:$0xff]
        %v3288 = vld [vmem:[#allocation6 + $0x8] sm:$0xff]
        %v3289 = vld [vmem:[#allocation6 + $0x10] sm:$0xff]
        %v3290 = vld [vmem:[#allocation6 + $0x18] sm:$0xf]
        %v3291 = vld [vmem:[#allocation6 + $0x1c] sm:$0xff]
        %v3292 = vld [vmem:[#allocation6 + $0x24] sm:$0xff]
        %v3293 = vld [vmem:[#allocation6 + $0x2c] sm:$0xff]
        %v3294 = vld [vmem:[#allocation6 + $0x34] sm:$0xf]
        %v3295 = vld [vmem:[#allocation6 + $0x38] sm:$0xff]
        %v3296 = vld [vmem:[#allocation6 + $0x40] sm:$0xff]
        %v3297 = vld [vmem:[#allocation6 + $0x48] sm:$0xff]
        %v3298 = vld [vmem:[#allocation6 + $0x50] sm:$0xf]
        %v3299 = vld [vmem:[#allocation6 + $0x54] sm:$0xff]
        %v3300 = vld [vmem:[#allocation6 + $0x5c] sm:$0xff]
        %v3301 = vld [vmem:[#allocation6 + $0x64] sm:$0xff]
        %v3302 = vld [vmem:[#allocation6 + $0x6c] sm:$0xf]
        %v3303 = vld [vmem:[#allocation6 + $0x70] sm:$0xff]
        %v3304 = vld [vmem:[#allocation6 + $0x78] sm:$0xff]
        %v3305 = vld [vmem:[#allocation6 + $0x80] sm:$0xff]
        %v3306 = vld [vmem:[#allocation6 + $0x88] sm:$0xf]
        %v3307 = vld [vmem:[#allocation6 + $0x8c] sm:$0xff]
        %v3308 = vld [vmem:[#allocation6 + $0x94] sm:$0xff]
        %v3309 = vld [vmem:[#allocation6 + $0x9c] sm:$0xff]
        %v3310 = vld [vmem:[#allocation6 + $0xa4] sm:$0xf]
        %v3311 = vld [vmem:[#allocation6 + $0xa8] sm:$0xff]
        %v3312 = vld [vmem:[#allocation6 + $0xb0] sm:$0xff]
        %v3313 = vld [vmem:[#allocation6 + $0xb8] sm:$0xff]
        %v3314 = vld [vmem:[#allocation6 + $0xc0] sm:$0xf]
        %v3315 = vld [vmem:[#allocation6 + $0xc4] sm:$0xff]
        %v3316 = vld [vmem:[#allocation6 + $0xcc] sm:$0xff]
        %v3317 = vld [vmem:[#allocation6 + $0xd4] sm:$0xff]
        %v3318 = vld [vmem:[#allocation6 + $0xdc] sm:$0xf]
        %v3319 = vld [vmem:[#allocation6 + $0xe0] sm:$0xff]
        %v3320 = vld [vmem:[#allocation6 + $0xe8] sm:$0xff]
        %v3321 = vld [vmem:[#allocation6 + $0xf0] sm:$0xff]
        %v3322 = vld [vmem:[#allocation6 + $0xf8] sm:$0xf]
        %v3323 = vld [vmem:[#allocation6 + $0xfc] sm:$0xff]
        %v3324 = vld [vmem:[#allocation6 + $0x104] sm:$0xff]
        %v3325 = vld [vmem:[#allocation6 + $0x10c] sm:$0xff]
        %v3326 = vld [vmem:[#allocation6 + $0x114] sm:$0xf]
        %v3327 = vld [vmem:[#allocation6 + $0x118] sm:$0xff]
        %v3328 = vld [vmem:[#allocation6 + $0x120] sm:$0xff]
        %v3329 = vld [vmem:[#allocation6 + $0x128] sm:$0xff]
        %v3330 = vld [vmem:[#allocation6 + $0x130] sm:$0xf]
        %v3331 = vld [vmem:[#allocation6 + $0x134] sm:$0xff]
        %v3332 = vld [vmem:[#allocation6 + $0x13c] sm:$0xff]
        %v3333 = vld [vmem:[#allocation6 + $0x144] sm:$0xff]
        %v3334 = vld [vmem:[#allocation6 + $0x14c] sm:$0xf]
        %v3335 = vld [vmem:[#allocation6 + $0x150] sm:$0xff]
        %v3336 = vld [vmem:[#allocation6 + $0x158] sm:$0xff]
        %v3337 = vld [vmem:[#allocation6 + $0x160] sm:$0xff]
        %v3338 = vld [vmem:[#allocation6 + $0x168] sm:$0xf]
        %v3339 = vld [vmem:[#allocation6 + $0x16c] sm:$0xff]
        %v3340 = vld [vmem:[#allocation6 + $0x174] sm:$0xff]
        %v3341 = vld [vmem:[#allocation6 + $0x17c] sm:$0xff]
        %v3342 = vld [vmem:[#allocation6 + $0x184] sm:$0xf]
        %v3343 = vld [vmem:[#allocation6 + $0x188] sm:$0xff]
        %v3344 = vld [vmem:[#allocation6 + $0x190] sm:$0xff]
        %v3345 = vld [vmem:[#allocation6 + $0x198] sm:$0xff]
        %v3346 = vld [vmem:[#allocation6 + $0x1a0] sm:$0xf]
        %v3347 = vld [vmem:[#allocation6 + $0x1a4] sm:$0xff]
        %v3348 = vld [vmem:[#allocation6 + $0x1ac] sm:$0xff]
        %v3349 = vld [vmem:[#allocation6 + $0x1b4] sm:$0xff]
        %v3350 = vld [vmem:[#allocation6 + $0x1bc] sm:$0xf]
        %v3351 = vld [vmem:[#allocation6 + $0x1c0] sm:$0xff]
        %v3352 = vld [vmem:[#allocation6 + $0x1c8] sm:$0xff]
        %v3353 = vld [vmem:[#allocation6 + $0x1d0] sm:$0xff]
        %v3354 = vld [vmem:[#allocation6 + $0x1d8] sm:$0xf]
        %v3355 = vld [vmem:[#allocation6 + $0x1dc] sm:$0xff]
        %v3356 = vld [vmem:[#allocation6 + $0x1e4] sm:$0xff]
        %v3357 = vld [vmem:[#allocation6 + $0x1ec] sm:$0xff]
        %v3358 = vld [vmem:[#allocation6 + $0x1f4] sm:$0xf]
        %v3359 = vld [vmem:[#allocation6 + $0x1f8] sm:$0xff]
        %v3360 = vld [vmem:[#allocation6 + $0x200] sm:$0xff]
        %v3361 = vld [vmem:[#allocation6 + $0x208] sm:$0xff]
        %v3362 = vld [vmem:[#allocation6 + $0x210] sm:$0xf]
        %v3363 = vld [vmem:[#allocation6 + $0x214] sm:$0xff]
        %v3364 = vld [vmem:[#allocation6 + $0x21c] sm:$0xff]
        %v3365 = vld [vmem:[#allocation6 + $0x224] sm:$0xff]
        %v3366 = vld [vmem:[#allocation6 + $0x22c] sm:$0xf]
        %v3367 = vld [vmem:[#allocation6 + $0x230] sm:$0xff]
        %v3368 = vld [vmem:[#allocation6 + $0x238] sm:$0xff]
        %v3369 = vld [vmem:[#allocation6 + $0x240] sm:$0xff]
        %v3370 = vld [vmem:[#allocation6 + $0x248] sm:$0xf]
        %v3371 = vld [vmem:[#allocation6 + $0x24c] sm:$0xff]
        %v3372 = vld [vmem:[#allocation6 + $0x254] sm:$0xff]
        %v3373 = vld [vmem:[#allocation6 + $0x25c] sm:$0xff]
        %v3374 = vld [vmem:[#allocation6 + $0x264] sm:$0xf]
        %v3375 = vld [vmem:[#allocation6 + $0x268] sm:$0xff]
        %v3376 = vld [vmem:[#allocation6 + $0x270] sm:$0xff]
        %v3377 = vld [vmem:[#allocation6 + $0x278] sm:$0xff]
        %v3378 = vld [vmem:[#allocation6 + $0x280] sm:$0xf]
        %v3379 = vld [vmem:[#allocation6 + $0x284] sm:$0xff]
        %v3380 = vld [vmem:[#allocation6 + $0x28c] sm:$0xff]
        %v3381 = vld [vmem:[#allocation6 + $0x294] sm:$0xff]
        %v3382 = vld [vmem:[#allocation6 + $0x29c] sm:$0xf]
        %v3383 = vld [vmem:[#allocation6 + $0x2a0] sm:$0xff]
        %v3384 = vld [vmem:[#allocation6 + $0x2a8] sm:$0xff]
        %v3385 = vld [vmem:[#allocation6 + $0x2b0] sm:$0xff]
        %v3386 = vld [vmem:[#allocation6 + $0x2b8] sm:$0xf]
        %v3387 = vld [vmem:[#allocation6 + $0x2bc] sm:$0xff]
        %v3388 = vld [vmem:[#allocation6 + $0x2c4] sm:$0xff]
        %v3389 = vld [vmem:[#allocation6 + $0x2cc] sm:$0xff]
        %v3390 = vld [vmem:[#allocation6 + $0x2d4] sm:$0xf]
        %v3391 = vld [vmem:[#allocation6 + $0x2d8] sm:$0xff]
        %v3392 = vld [vmem:[#allocation6 + $0x2e0] sm:$0xff]
        %v3393 = vld [vmem:[#allocation6 + $0x2e8] sm:$0xff]
        %v3394 = vld [vmem:[#allocation6 + $0x2f0] sm:$0xf]
        %v3395 = vld [vmem:[#allocation6 + $0x2f4] sm:$0xff]
        %v3396 = vld [vmem:[#allocation6 + $0x2fc] sm:$0xff]
        %v3397 = vld [vmem:[#allocation6 + $0x304] sm:$0xff]
        %v3398 = vld [vmem:[#allocation6 + $0x30c] sm:$0xf]
        %v3399 = vld [vmem:[#allocation6 + $0x310] sm:$0xff]
        %v3400 = vld [vmem:[#allocation6 + $0x318] sm:$0xff]
        %v3401 = vld [vmem:[#allocation6 + $0x320] sm:$0xff]
        %v3402 = vld [vmem:[#allocation6 + $0x328] sm:$0xf]
        %v3403 = vld [vmem:[#allocation6 + $0x32c] sm:$0xff]
        %v3404 = vld [vmem:[#allocation6 + $0x334] sm:$0xff]
        %v3405 = vld [vmem:[#allocation6 + $0x33c] sm:$0xff]
        %v3406 = vld [vmem:[#allocation6 + $0x344] sm:$0xf]
        %v3407 = vld [vmem:[#allocation6 + $0x348] sm:$0xff]
        %v3408 = vld [vmem:[#allocation6 + $0x350] sm:$0xff]
        %v3409 = vld [vmem:[#allocation6 + $0x358] sm:$0xff]
        %v3410 = vld [vmem:[#allocation6 + $0x360] sm:$0xf]
        %v3411 = vld [vmem:[#allocation6 + $0x364] sm:$0xff]
        %v3412 = vld [vmem:[#allocation6 + $0x36c] sm:$0xff]
        %v3413 = vld [vmem:[#allocation6 + $0x374] sm:$0xff]
        %v3414 = vld [vmem:[#allocation6 + $0x37c] sm:$0xf]
        %v3415 = vld [vmem:[#allocation6 + $0x380] sm:$0xff]
        %v3416 = vld [vmem:[#allocation6 + $0x388] sm:$0xff]
        %v3417 = vld [vmem:[#allocation6 + $0x390] sm:$0xff]
        %v3418 = vld [vmem:[#allocation6 + $0x398] sm:$0xf]
        %v3419 = vld [vmem:[#allocation6 + $0x39c] sm:$0xff]
        %v3420 = vld [vmem:[#allocation6 + $0x3a4] sm:$0xff]
        %v3421 = vld [vmem:[#allocation6 + $0x3ac] sm:$0xff]
        %v3422 = vld [vmem:[#allocation6 + $0x3b4] sm:$0xf]
        %v3423 = vld [vmem:[#allocation6 + $0x3b8] sm:$0xff]
        %v3424 = vld [vmem:[#allocation6 + $0x3c0] sm:$0xff]
        %v3425 = vld [vmem:[#allocation6 + $0x3c8] sm:$0xff]
        %v3426 = vld [vmem:[#allocation6 + $0x3d0] sm:$0xf]
        %v3427 = vld [vmem:[#allocation6 + $0x3d4] sm:$0xff]
        %v3428 = vld [vmem:[#allocation6 + $0x3dc] sm:$0xff]
        %v3429 = vld [vmem:[#allocation6 + $0x3e4] sm:$0xff]
        %v3430 = vld [vmem:[#allocation6 + $0x3ec] sm:$0xf]
        %v3431 = vld [vmem:[#allocation6 + $0x3f0] sm:$0xff]
        %v3432 = vld [vmem:[#allocation6 + $0x3f8] sm:$0xff]
        %v3433 = vld [vmem:[#allocation6 + $0x400] sm:$0xff]
        %v3434 = vld [vmem:[#allocation6 + $0x408] sm:$0xf]
        %v3435 = vld [vmem:[#allocation6 + $0x40c] sm:$0xff]
        %v3436 = vld [vmem:[#allocation6 + $0x414] sm:$0xff]
        %v3437 = vld [vmem:[#allocation6 + $0x41c] sm:$0xff]
        %v3438 = vld [vmem:[#allocation6 + $0x424] sm:$0xf]
        %v3439 = vld [vmem:[#allocation6 + $0x428] sm:$0xff]
        %v3440 = vld [vmem:[#allocation6 + $0x430] sm:$0xff]
        %v3441 = vld [vmem:[#allocation6 + $0x438] sm:$0xff]
        %v3442 = vld [vmem:[#allocation6 + $0x440] sm:$0xf]
        %v3443 = vld [vmem:[#allocation6 + $0x444] sm:$0xff]
        %v3444 = vld [vmem:[#allocation6 + $0x44c] sm:$0xff]
        %v3445 = vld [vmem:[#allocation6 + $0x454] sm:$0xff]
        %v3446 = vld [vmem:[#allocation6 + $0x45c] sm:$0xf]
        %v3447 = vld [vmem:[#allocation6 + $0x460] sm:$0xff]
        %v3448 = vld [vmem:[#allocation6 + $0x468] sm:$0xff]
        %v3449 = vld [vmem:[#allocation6 + $0x470] sm:$0xff]
        %v3450 = vld [vmem:[#allocation6 + $0x478] sm:$0xf]
        %v3451 = vld [vmem:[#allocation6 + $0x47c] sm:$0xff]
        %v3452 = vld [vmem:[#allocation6 + $0x484] sm:$0xff]
        %v3453 = vld [vmem:[#allocation6 + $0x48c] sm:$0xff]
        %v3454 = vld [vmem:[#allocation6 + $0x494] sm:$0xf]
        %v3455 = vld [vmem:[#allocation6 + $0x498] sm:$0xff]
        %v3456 = vld [vmem:[#allocation6 + $0x4a0] sm:$0xff]
        %v3457 = vld [vmem:[#allocation6 + $0x4a8] sm:$0xff]
        %v3458 = vld [vmem:[#allocation6 + $0x4b0] sm:$0xf]
        %v3459 = vld [vmem:[#allocation6 + $0x4b4] sm:$0xff]
        %v3460 = vld [vmem:[#allocation6 + $0x4bc] sm:$0xff]
        %v3461 = vld [vmem:[#allocation6 + $0x4c4] sm:$0xff]
        %v3462 = vld [vmem:[#allocation6 + $0x4cc] sm:$0xf]
        %v3463 = vld [vmem:[#allocation6 + $0x4d0] sm:$0xff]
        %v3464 = vld [vmem:[#allocation6 + $0x4d8] sm:$0xff]
        %v3465 = vld [vmem:[#allocation6 + $0x4e0] sm:$0xff]
        %v3466 = vld [vmem:[#allocation6 + $0x4e8] sm:$0xf]
        %v3467 = vld [vmem:[#allocation6 + $0x4ec] sm:$0xff]
        %v3468 = vld [vmem:[#allocation6 + $0x4f4] sm:$0xff]
        %v3469 = vld [vmem:[#allocation6 + $0x4fc] sm:$0xff]
        %v3470 = vld [vmem:[#allocation6 + $0x504] sm:$0xf]
        %v3471 = vld [vmem:[#allocation6 + $0x508] sm:$0xff]
        %v3472 = vld [vmem:[#allocation6 + $0x510] sm:$0xff]
        %v3473 = vld [vmem:[#allocation6 + $0x518] sm:$0xff]
        %v3474 = vld [vmem:[#allocation6 + $0x520] sm:$0xf]
        %v3475 = vld [vmem:[#allocation6 + $0x524] sm:$0xff]
        %v3476 = vld [vmem:[#allocation6 + $0x52c] sm:$0xff]
        %v3477 = vld [vmem:[#allocation6 + $0x534] sm:$0xff]
        %v3478 = vld [vmem:[#allocation6 + $0x53c] sm:$0xf]
        %v3479 = vld [vmem:[#allocation6 + $0x540] sm:$0xff]
        %v3480 = vld [vmem:[#allocation6 + $0x548] sm:$0xff]
        %v3481 = vld [vmem:[#allocation6 + $0x550] sm:$0xff]
        %v3482 = vld [vmem:[#allocation6 + $0x558] sm:$0xf]
        %v3483 = vld [vmem:[#allocation6 + $0x55c] sm:$0xff]
        %v3484 = vld [vmem:[#allocation6 + $0x564] sm:$0xff]
        %v3485 = vld [vmem:[#allocation6 + $0x56c] sm:$0xff]
        %v3486 = vld [vmem:[#allocation6 + $0x574] sm:$0xf]
        %v3487 = vld [vmem:[#allocation6 + $0x578] sm:$0xff]
        %v3488 = vld [vmem:[#allocation6 + $0x580] sm:$0xff]
        %v3489 = vld [vmem:[#allocation6 + $0x588] sm:$0xff]
        %v3490 = vld [vmem:[#allocation6 + $0x590] sm:$0xf]
        %v3491 = vld [vmem:[#allocation6 + $0x594] sm:$0xff]
        %v3492 = vld [vmem:[#allocation6 + $0x59c] sm:$0xff]
        %v3493 = vld [vmem:[#allocation6 + $0x5a4] sm:$0xff]
        %v3494 = vld [vmem:[#allocation6 + $0x5ac] sm:$0xf]
        %v3495 = vld [vmem:[#allocation6 + $0x5b0] sm:$0xff]
        %v3496 = vld [vmem:[#allocation6 + $0x5b8] sm:$0xff]
        %v3497 = vld [vmem:[#allocation6 + $0x5c0] sm:$0xff]
        %v3498 = vld [vmem:[#allocation6 + $0x5c8] sm:$0xf]
        %v3499 = vld [vmem:[#allocation6 + $0x5cc] sm:$0xff]
        %v3500 = vld [vmem:[#allocation6 + $0x5d4] sm:$0xff]
        %v3501 = vld [vmem:[#allocation6 + $0x5dc] sm:$0xff]
        %v3502 = vld [vmem:[#allocation6 + $0x5e4] sm:$0xf]
        %v3503 = vld [vmem:[#allocation6 + $0x5e8] sm:$0xff]
        %v3504 = vld [vmem:[#allocation6 + $0x5f0] sm:$0xff]
        %v3505 = vld [vmem:[#allocation6 + $0x5f8] sm:$0xff]
        %v3506 = vld [vmem:[#allocation6 + $0x600] sm:$0xf]
        %v3507 = vld [vmem:[#allocation6 + $0x604] sm:$0xff]
        %v3508 = vld [vmem:[#allocation6 + $0x60c] sm:$0xff]
        %v3509 = vld [vmem:[#allocation6 + $0x614] sm:$0xff]
        %v3510 = vld [vmem:[#allocation6 + $0x61c] sm:$0xf]
        %v3511 = vld [vmem:[#allocation6 + $0x620] sm:$0xff]
        %v3512 = vld [vmem:[#allocation6 + $0x628] sm:$0xff]
        %v3513 = vld [vmem:[#allocation6 + $0x630] sm:$0xff]
        %v3514 = vld [vmem:[#allocation6 + $0x638] sm:$0xf]
        %v3515 = vld [vmem:[#allocation6 + $0x63c] sm:$0xff]
        %v3516 = vld [vmem:[#allocation6 + $0x644] sm:$0xff]
        %v3517 = vld [vmem:[#allocation6 + $0x64c] sm:$0xff]
        %v3518 = vld [vmem:[#allocation6 + $0x654] sm:$0xf]
        %v3519 = vld [vmem:[#allocation6 + $0x658] sm:$0xff]
        %v3520 = vld [vmem:[#allocation6 + $0x660] sm:$0xff]
        %v3521 = vld [vmem:[#allocation6 + $0x668] sm:$0xff]
        %v3522 = vld [vmem:[#allocation6 + $0x670] sm:$0xf]
        %v3523 = vld [vmem:[#allocation6 + $0x674] sm:$0xff]
        %v3524 = vld [vmem:[#allocation6 + $0x67c] sm:$0xff]
        %v3525 = vld [vmem:[#allocation6 + $0x684] sm:$0xff]
        %v3526 = vld [vmem:[#allocation6 + $0x68c] sm:$0xf]
        %v3527 = vld [vmem:[#allocation6 + $0x690] sm:$0xff]
        %v3528 = vld [vmem:[#allocation6 + $0x698] sm:$0xff]
        %v3529 = vld [vmem:[#allocation6 + $0x6a0] sm:$0xff]
        %v3530 = vld [vmem:[#allocation6 + $0x6a8] sm:$0xf]
        %v3531 = vld [vmem:[#allocation6 + $0x6ac] sm:$0xff]
        %v3532 = vld [vmem:[#allocation6 + $0x6b4] sm:$0xff]
        %v3533 = vld [vmem:[#allocation6 + $0x6bc] sm:$0xff]
        %v3534 = vld [vmem:[#allocation6 + $0x6c4] sm:$0xf]
        %v3535 = vld [vmem:[#allocation6 + $0x6c8] sm:$0xff]
        %v3536 = vld [vmem:[#allocation6 + $0x6d0] sm:$0xff]
        %v3537 = vld [vmem:[#allocation6 + $0x6d8] sm:$0xff]
        %v3538 = vld [vmem:[#allocation6 + $0x6e0] sm:$0xf]
        %v3539 = vld [vmem:[#allocation6 + $0x6e4] sm:$0xff]
        %v3540 = vld [vmem:[#allocation6 + $0x6ec] sm:$0xff]
        %v3541 = vld [vmem:[#allocation6 + $0x6f4] sm:$0xff]
        %v3542 = vld [vmem:[#allocation6 + $0x6fc] sm:$0xf]
        %v3543 = vld [vmem:[#allocation6 + $0x700] sm:$0xff]
        %v3544 = vld [vmem:[#allocation6 + $0x708] sm:$0xff]
        %v3545 = vld [vmem:[#allocation6 + $0x710] sm:$0xff]
        %v3546 = vld [vmem:[#allocation6 + $0x718] sm:$0xf]
        %v3547 = vld [vmem:[#allocation6 + $0x71c] sm:$0xff]
        %v3548 = vld [vmem:[#allocation6 + $0x724] sm:$0xff]
        %v3549 = vld [vmem:[#allocation6 + $0x72c] sm:$0xff]
        %v3550 = vld [vmem:[#allocation6 + $0x734] sm:$0xf]
        %v3551 = vld [vmem:[#allocation6 + $0x738] sm:$0xff]
        %v3552 = vld [vmem:[#allocation6 + $0x740] sm:$0xff]
        %v3553 = vld [vmem:[#allocation6 + $0x748] sm:$0xff]
        %v3554 = vld [vmem:[#allocation6 + $0x750] sm:$0xf]
        %v3555 = vld [vmem:[#allocation6 + $0x754] sm:$0xff]
        %v3556 = vld [vmem:[#allocation6 + $0x75c] sm:$0xff]
        %v3557 = vld [vmem:[#allocation6 + $0x764] sm:$0xff]
        %v3558 = vld [vmem:[#allocation6 + $0x76c] sm:$0xf]
        %v3559 = vld [vmem:[#allocation6 + $0x770] sm:$0xff]
        %v3560 = vld [vmem:[#allocation6 + $0x778] sm:$0xff]
        %v3561 = vld [vmem:[#allocation6 + $0x780] sm:$0xff]
        %v3562 = vld [vmem:[#allocation6 + $0x788] sm:$0xf]
        %v3563 = vld [vmem:[#allocation6 + $0x78c] sm:$0xff]
        %v3564 = vld [vmem:[#allocation6 + $0x794] sm:$0xff]
        %v3565 = vld [vmem:[#allocation6 + $0x79c] sm:$0xff]
        %v3566 = vld [vmem:[#allocation6 + $0x7a4] sm:$0xf]
        %v3567 = vld [vmem:[#allocation6 + $0x7a8] sm:$0xff]
        %v3568 = vld [vmem:[#allocation6 + $0x7b0] sm:$0xff]
        %v3569 = vld [vmem:[#allocation6 + $0x7b8] sm:$0xff]
        %v3570 = vld [vmem:[#allocation6 + $0x7c0] sm:$0xf]
        %v3571 = vld [vmem:[#allocation6 + $0x7c4] sm:$0xff]
        %v3572 = vld [vmem:[#allocation6 + $0x7cc] sm:$0xff]
        %v3573 = vld [vmem:[#allocation6 + $0x7d4] sm:$0xff]
        %v3574 = vld [vmem:[#allocation6 + $0x7dc] sm:$0xf]
        %v3575 = vld [vmem:[#allocation6 + $0x7e0] sm:$0xff]
        %v3576 = vld [vmem:[#allocation6 + $0x7e8] sm:$0xff]
        %v3577 = vld [vmem:[#allocation6 + $0x7f0] sm:$0xff]
        %v3578 = vld [vmem:[#allocation6 + $0x7f8] sm:$0xf]
        %v3579 = vld [vmem:[#allocation6 + $0x7fc] sm:$0xff]
        %v3580 = vld [vmem:[#allocation6 + $0x804] sm:$0xff]
        %v3581 = vld [vmem:[#allocation6 + $0x80c] sm:$0xff]
        %v3582 = vld [vmem:[#allocation6 + $0x814] sm:$0xf]
        %v3583 = vld [vmem:[#allocation6 + $0x818] sm:$0xff]
        %v3584 = vld [vmem:[#allocation6 + $0x820] sm:$0xff]
        %v3585 = vld [vmem:[#allocation6 + $0x828] sm:$0xff]
        %v3586 = vld [vmem:[#allocation6 + $0x830] sm:$0xf]
        %v3587 = vld [vmem:[#allocation6 + $0x834] sm:$0xff]
        %v3588 = vld [vmem:[#allocation6 + $0x83c] sm:$0xff]
        %v3589 = vld [vmem:[#allocation6 + $0x844] sm:$0xff]
        %v3590 = vld [vmem:[#allocation6 + $0x84c] sm:$0xf]
        %v3591 = vld [vmem:[#allocation6 + $0x850] sm:$0xff]
        %v3592 = vld [vmem:[#allocation6 + $0x858] sm:$0xff]
        %v3593 = vld [vmem:[#allocation6 + $0x860] sm:$0xff]
        %v3594 = vld [vmem:[#allocation6 + $0x868] sm:$0xf]
        %v3595 = vld [vmem:[#allocation6 + $0x86c] sm:$0xff]
        %v3596 = vld [vmem:[#allocation6 + $0x874] sm:$0xff]
        %v3597 = vld [vmem:[#allocation6 + $0x87c] sm:$0xff]
        %v3598 = vld [vmem:[#allocation6 + $0x884] sm:$0xf]
        %v3599 = vld [vmem:[#allocation6 + $0x888] sm:$0xff]
        %v3600 = vld [vmem:[#allocation6 + $0x890] sm:$0xff]
        %v3601 = vld [vmem:[#allocation6 + $0x898] sm:$0xff]
        %v3602 = vld [vmem:[#allocation6 + $0x8a0] sm:$0xf]
        %v3603 = vld [vmem:[#allocation6 + $0x8a4] sm:$0xff]
        %v3604 = vld [vmem:[#allocation6 + $0x8ac] sm:$0xff]
        %v3605 = vld [vmem:[#allocation6 + $0x8b4] sm:$0xff]
        %v3606 = vld [vmem:[#allocation6 + $0x8bc] sm:$0xf]
        %v3607 = vld [vmem:[#allocation6 + $0x8c0] sm:$0xff]
        %v3608 = vld [vmem:[#allocation6 + $0x8c8] sm:$0xff]
        %v3609 = vld [vmem:[#allocation6 + $0x8d0] sm:$0xff]
        %v3610 = vld [vmem:[#allocation6 + $0x8d8] sm:$0xf]
        %v3611 = vld [vmem:[#allocation6 + $0x8dc] sm:$0xff]
        %v3612 = vld [vmem:[#allocation6 + $0x8e4] sm:$0xff]
        %v3613 = vld [vmem:[#allocation6 + $0x8ec] sm:$0xff]
        %v3614 = vld [vmem:[#allocation6 + $0x8f4] sm:$0xf]
        %v3615 = vld [vmem:[#allocation6 + $0x8f8] sm:$0xff]
        %v3616 = vld [vmem:[#allocation6 + $0x900] sm:$0xff]
        %v3617 = vld [vmem:[#allocation6 + $0x908] sm:$0xff]
        %v3618 = vld [vmem:[#allocation6 + $0x910] sm:$0xf]
        %v3619 = vld [vmem:[#allocation6 + $0x914] sm:$0xff]
        %v3620 = vld [vmem:[#allocation6 + $0x91c] sm:$0xff]
        %v3621 = vld [vmem:[#allocation6 + $0x924] sm:$0xff]
        %v3622 = vld [vmem:[#allocation6 + $0x92c] sm:$0xf]
        %v3623 = vld [vmem:[#allocation6 + $0x930] sm:$0xff]
        %v3624 = vld [vmem:[#allocation6 + $0x938] sm:$0xff]
        %v3625 = vld [vmem:[#allocation6 + $0x940] sm:$0xff]
        %v3626 = vld [vmem:[#allocation6 + $0x948] sm:$0xf]
        %v3627 = vld [vmem:[#allocation6 + $0x94c] sm:$0xff]
        %v3628 = vld [vmem:[#allocation6 + $0x954] sm:$0xff]
        %v3629 = vld [vmem:[#allocation6 + $0x95c] sm:$0xff]
        %v3630 = vld [vmem:[#allocation6 + $0x964] sm:$0xf]
        %v3631 = vld [vmem:[#allocation6 + $0x968] sm:$0xff]
        %v3632 = vld [vmem:[#allocation6 + $0x970] sm:$0xff]
        %v3633 = vld [vmem:[#allocation6 + $0x978] sm:$0xff]
        %v3634 = vld [vmem:[#allocation6 + $0x980] sm:$0xf]
        %v3635 = vld [vmem:[#allocation6 + $0x984] sm:$0xff]
        %v3636 = vld [vmem:[#allocation6 + $0x98c] sm:$0xff]
        %v3637 = vld [vmem:[#allocation6 + $0x994] sm:$0xff]
        %v3638 = vld [vmem:[#allocation6 + $0x99c] sm:$0xf]
        %v3639 = vld [vmem:[#allocation6 + $0x9a0] sm:$0xff]
        %v3640 = vld [vmem:[#allocation6 + $0x9a8] sm:$0xff]
        %v3641 = vld [vmem:[#allocation6 + $0x9b0] sm:$0xff]
        %v3642 = vld [vmem:[#allocation6 + $0x9b8] sm:$0xf]
        %v3643 = vld [vmem:[#allocation6 + $0x9bc] sm:$0xff]
        %v3644 = vld [vmem:[#allocation6 + $0x9c4] sm:$0xff]
        %v3645 = vld [vmem:[#allocation6 + $0x9cc] sm:$0xff]
        %v3646 = vld [vmem:[#allocation6 + $0x9d4] sm:$0xf]
        %v3647 = vld [vmem:[#allocation6 + $0x9d8] sm:$0xff]
        %v3648 = vld [vmem:[#allocation6 + $0x9e0] sm:$0xff]
        %v3649 = vld [vmem:[#allocation6 + $0x9e8] sm:$0xff]
        %v3650 = vld [vmem:[#allocation6 + $0x9f0] sm:$0xf]
        %v3651 = vld [vmem:[#allocation6 + $0x9f4] sm:$0xff]
        %v3652 = vld [vmem:[#allocation6 + $0x9fc] sm:$0xff]
        %v3653 = vld [vmem:[#allocation6 + $0xa04] sm:$0xff]
        %v3654 = vld [vmem:[#allocation6 + $0xa0c] sm:$0xf]
        %v3655 = vld [vmem:[#allocation6 + $0xa10] sm:$0xff]
        %v3656 = vld [vmem:[#allocation6 + $0xa18] sm:$0xff]
        %v3657 = vld [vmem:[#allocation6 + $0xa20] sm:$0xff]
        %v3658 = vld [vmem:[#allocation6 + $0xa28] sm:$0xf]
        %v3659 = vld [vmem:[#allocation6 + $0xa2c] sm:$0xff]
        %v3660 = vld [vmem:[#allocation6 + $0xa34] sm:$0xff]
        %v3661 = vld [vmem:[#allocation6 + $0xa3c] sm:$0xff]
        %v3662 = vld [vmem:[#allocation6 + $0xa44] sm:$0xf]
        %v3663 = vld [vmem:[#allocation6 + $0xa48] sm:$0xff]
        %v3664 = vld [vmem:[#allocation6 + $0xa50] sm:$0xff]
        %v3665 = vld [vmem:[#allocation6 + $0xa58] sm:$0xff]
        %v3666 = vld [vmem:[#allocation6 + $0xa60] sm:$0xf]
        %v3667 = vld [vmem:[#allocation6 + $0xa64] sm:$0xff]
        %v3668 = vld [vmem:[#allocation6 + $0xa6c] sm:$0xff]
        %v3669 = vld [vmem:[#allocation6 + $0xa74] sm:$0xff]
        %v3670 = vld [vmem:[#allocation6 + $0xa7c] sm:$0xf]
        %v3671 = vld [vmem:[#allocation6 + $0xa80] sm:$0xff]
        %v3672 = vld [vmem:[#allocation6 + $0xa88] sm:$0xff]
        %v3673 = vld [vmem:[#allocation6 + $0xa90] sm:$0xff]
        %v3674 = vld [vmem:[#allocation6 + $0xa98] sm:$0xf]
        %v3675 = vld [vmem:[#allocation6 + $0xa9c] sm:$0xff]
        %v3676 = vld [vmem:[#allocation6 + $0xaa4] sm:$0xff]
        %v3677 = vld [vmem:[#allocation6 + $0xaac] sm:$0xff]
        %v3678 = vld [vmem:[#allocation6 + $0xab4] sm:$0xf]
        %v3679 = vld [vmem:[#allocation6 + $0xab8] sm:$0xff]
        %v3680 = vld [vmem:[#allocation6 + $0xac0] sm:$0xff]
        %v3681 = vld [vmem:[#allocation6 + $0xac8] sm:$0xff]
        %v3682 = vld [vmem:[#allocation6 + $0xad0] sm:$0xf]
        %v3683 = vld [vmem:[#allocation6 + $0xad4] sm:$0xff]
        %v3684 = vld [vmem:[#allocation6 + $0xadc] sm:$0xff]
        %v3685 = vld [vmem:[#allocation6 + $0xae4] sm:$0xff]
        %v3686 = vld [vmem:[#allocation6 + $0xaec] sm:$0xf]
        %v3687 = vld [vmem:[#allocation6 + $0xaf0] sm:$0xff]
        %v3688 = vld [vmem:[#allocation6 + $0xaf8] sm:$0xff]
        %v3689 = vld [vmem:[#allocation6 + $0xb00] sm:$0xff]
        %v3690 = vld [vmem:[#allocation6 + $0xb08] sm:$0xf]
        %v3691 = vld [vmem:[#allocation6 + $0xb0c] sm:$0xff]
        %v3692 = vld [vmem:[#allocation6 + $0xb14] sm:$0xff]
        %v3693 = vld [vmem:[#allocation6 + $0xb1c] sm:$0xff]
        %v3694 = vld [vmem:[#allocation6 + $0xb24] sm:$0xf]
        %v3695 = vld [vmem:[#allocation6 + $0xb28] sm:$0xff]
        %v3696 = vld [vmem:[#allocation6 + $0xb30] sm:$0xff]
        %v3697 = vld [vmem:[#allocation6 + $0xb38] sm:$0xff]
        %v3698 = vld [vmem:[#allocation6 + $0xb40] sm:$0xf]
        %v3699 = vld [vmem:[#allocation6 + $0xb44] sm:$0xff]
        %v3700 = vld [vmem:[#allocation6 + $0xb4c] sm:$0xff]
        %v3701 = vld [vmem:[#allocation6 + $0xb54] sm:$0xff]
        %v3702 = vld [vmem:[#allocation6 + $0xb5c] sm:$0xf]
        %v3703 = vld [vmem:[#allocation6 + $0xb60] sm:$0xff]
        %v3704 = vld [vmem:[#allocation6 + $0xb68] sm:$0xff]
        %v3705 = vld [vmem:[#allocation6 + $0xb70] sm:$0xff]
        %v3706 = vld [vmem:[#allocation6 + $0xb78] sm:$0xf]
        %v3707 = vld [vmem:[#allocation6 + $0xb7c] sm:$0xff]
        %v3708 = vld [vmem:[#allocation6 + $0xb84] sm:$0xff]
        %v3709 = vld [vmem:[#allocation6 + $0xb8c] sm:$0xff]
        %v3710 = vld [vmem:[#allocation6 + $0xb94] sm:$0xf]
        %v3711 = vld [vmem:[#allocation6 + $0xb98] sm:$0xff]
        %v3712 = vld [vmem:[#allocation6 + $0xba0] sm:$0xff]
        %v3713 = vld [vmem:[#allocation6 + $0xba8] sm:$0xff]
        %v3714 = vld [vmem:[#allocation6 + $0xbb0] sm:$0xf]
        %v3715 = vld [vmem:[#allocation6 + $0xbb4] sm:$0xff]
        %v3716 = vld [vmem:[#allocation6 + $0xbbc] sm:$0xff]
        %v3717 = vld [vmem:[#allocation6 + $0xbc4] sm:$0xff]
        %v3718 = vld [vmem:[#allocation6 + $0xbcc] sm:$0xf]
        %v3719 = vld [vmem:[#allocation6 + $0xbd0] sm:$0xff]
        %v3720 = vld [vmem:[#allocation6 + $0xbd8] sm:$0xff]
        %v3721 = vld [vmem:[#allocation6 + $0xbe0] sm:$0xff]
        %v3722 = vld [vmem:[#allocation6 + $0xbe8] sm:$0xf]
        %v3723 = vld [vmem:[#allocation6 + $0xbec] sm:$0xff]
        %v3724 = vld [vmem:[#allocation6 + $0xbf4] sm:$0xff]
        %v3725 = vld [vmem:[#allocation6 + $0xbfc] sm:$0xff]
        %v3726 = vld [vmem:[#allocation6 + $0xc04] sm:$0xf]
        %v3727 = vld [vmem:[#allocation6 + $0xc08] sm:$0xff]
        %v3728 = vld [vmem:[#allocation6 + $0xc10] sm:$0xff]
        %v3729 = vld [vmem:[#allocation6 + $0xc18] sm:$0xff]
        %v3730 = vld [vmem:[#allocation6 + $0xc20] sm:$0xf]
        %v3731 = vld [vmem:[#allocation6 + $0xc24] sm:$0xff]
        %v3732 = vld [vmem:[#allocation6 + $0xc2c] sm:$0xff]
        %v3733 = vld [vmem:[#allocation6 + $0xc34] sm:$0xff]
        %v3734 = vld [vmem:[#allocation6 + $0xc3c] sm:$0xf]
        %v3735 = vld [vmem:[#allocation7] sm:$0xff]
        %v3737 = vlaneseq
        %v3738 = vshrl.u32 %v3737, 7
        %v3739 = vsub.s32 0, %v3738
        %v3740 = vrot.slane %v3735, %v3739
        %v3741 = vlaneseq
        %v3742 = vshrl.u32 %v3741, 7
        %v3743 = vsub.s32 1, %v3742
        %v3744 = vrot.slane %v3735, %v3743
        %v3745 = vlaneseq
        %v3746 = vshrl.u32 %v3745, 7
        %v3747 = vsub.s32 2, %v3746
        %v3748 = vrot.slane %v3735, %v3747
        %v3749 = vlaneseq
        %v3750 = vshrl.u32 %v3749, 7
        %v3751 = vsub.s32 3, %v3750
        %v3752 = vrot.slane %v3735, %v3751
        %v3753 = vlaneseq
        %v3754 = vshrl.u32 %v3753, 7
        %v3755 = vsub.s32 4, %v3754
        %v3756 = vrot.slane %v3735, %v3755
        %v3757 = vlaneseq
        %v3758 = vshrl.u32 %v3757, 7
        %v3759 = vsub.s32 5, %v3758
        %v3760 = vrot.slane %v3735, %v3759
        %v3761 = vlaneseq
        %v3762 = vshrl.u32 %v3761, 7
        %v3763 = vsub.s32 6, %v3762
        %v3764 = vrot.slane %v3735, %v3763
        %v4220 = vunpack.c.l.b16 %v3287
        %v4221 = vunpack.c.h.b16 %v3287
        %v4222 = vunpack.c.l.b16 %v3288
        %v4223 = vunpack.c.h.b16 %v3288
        %v4224 = vunpack.c.l.b16 %v3289
        %v4225 = vunpack.c.h.b16 %v3289
        %v4226 = vunpack.c.l.b16 %v3290
        %v4227 = vunpack.c.l.b16 %v3291
        %v4228 = vunpack.c.h.b16 %v3291
        %v4229 = vunpack.c.l.b16 %v3292
        %v4230 = vunpack.c.h.b16 %v3292
        %v4231 = vunpack.c.l.b16 %v3293
        %v4232 = vunpack.c.h.b16 %v3293
        %v4233 = vunpack.c.l.b16 %v3294
        %v4234 = vunpack.c.l.b16 %v3295
        %v4235 = vunpack.c.h.b16 %v3295
        %v4236 = vunpack.c.l.b16 %v3296
        %v4237 = vunpack.c.h.b16 %v3296
        %v4238 = vunpack.c.l.b16 %v3297
        %v4239 = vunpack.c.h.b16 %v3297
        %v4240 = vunpack.c.l.b16 %v3298
        %v4241 = vunpack.c.l.b16 %v3299
        %v4242 = vunpack.c.h.b16 %v3299
        %v4243 = vunpack.c.l.b16 %v3300
        %v4244 = vunpack.c.h.b16 %v3300
        %v4245 = vunpack.c.l.b16 %v3301
        %v4246 = vunpack.c.h.b16 %v3301
        %v4247 = vunpack.c.l.b16 %v3302
        %v4248 = vunpack.c.l.b16 %v3303
        %v4249 = vunpack.c.h.b16 %v3303
        %v4250 = vunpack.c.l.b16 %v3304
        %v4251 = vunpack.c.h.b16 %v3304
        %v4252 = vunpack.c.l.b16 %v3305
        %v4253 = vunpack.c.h.b16 %v3305
        %v4254 = vunpack.c.l.b16 %v3306
        %v4255 = vunpack.c.l.b16 %v3307
        %v4256 = vunpack.c.h.b16 %v3307
        %v4257 = vunpack.c.l.b16 %v3308
        %v4258 = vunpack.c.h.b16 %v3308
        %v4259 = vunpack.c.l.b16 %v3309
        %v4260 = vunpack.c.h.b16 %v3309
        %v4261 = vunpack.c.l.b16 %v3310
        %v4262 = vunpack.c.l.b16 %v3311
        %v4263 = vunpack.c.h.b16 %v3311
        %v4264 = vunpack.c.l.b16 %v3312
        %v4265 = vunpack.c.h.b16 %v3312
        %v4266 = vunpack.c.l.b16 %v3313
        %v4267 = vunpack.c.h.b16 %v3313
        %v4268 = vunpack.c.l.b16 %v3314
        %v4269 = vunpack.c.l.b16 %v3315
        %v4270 = vunpack.c.h.b16 %v3315
        %v4271 = vunpack.c.l.b16 %v3316
        %v4272 = vunpack.c.h.b16 %v3316
        %v4273 = vunpack.c.l.b16 %v3317
        %v4274 = vunpack.c.h.b16 %v3317
        %v4275 = vunpack.c.l.b16 %v3318
        %v4276 = vunpack.c.l.b16 %v3319
        %v4277 = vunpack.c.h.b16 %v3319
        %v4278 = vunpack.c.l.b16 %v3320
        %v4279 = vunpack.c.h.b16 %v3320
        %v4280 = vunpack.c.l.b16 %v3321
        %v4281 = vunpack.c.h.b16 %v3321
        %v4282 = vunpack.c.l.b16 %v3322
        %v4283 = vunpack.c.l.b16 %v3323
        %v4284 = vunpack.c.h.b16 %v3323
        %v4285 = vunpack.c.l.b16 %v3324
        %v4286 = vunpack.c.h.b16 %v3324
        %v4287 = vunpack.c.l.b16 %v3325
        %v4288 = vunpack.c.h.b16 %v3325
        %v4289 = vunpack.c.l.b16 %v3326
        %v4290 = vunpack.c.l.b16 %v3327
        %v4291 = vunpack.c.h.b16 %v3327
        %v4292 = vunpack.c.l.b16 %v3328
        %v4293 = vunpack.c.h.b16 %v3328
        %v4294 = vunpack.c.l.b16 %v3329
        %v4295 = vunpack.c.h.b16 %v3329
        %v4296 = vunpack.c.l.b16 %v3330
        %v4297 = vunpack.c.l.b16 %v3331
        %v4298 = vunpack.c.h.b16 %v3331
        %v4299 = vunpack.c.l.b16 %v3332
        %v4300 = vunpack.c.h.b16 %v3332
        %v4301 = vunpack.c.l.b16 %v3333
        %v4302 = vunpack.c.h.b16 %v3333
        %v4303 = vunpack.c.l.b16 %v3334
        %v4304 = vunpack.c.l.b16 %v3335
        %v4305 = vunpack.c.h.b16 %v3335
        %v4306 = vunpack.c.l.b16 %v3336
        %v4307 = vunpack.c.h.b16 %v3336
        %v4308 = vunpack.c.l.b16 %v3337
        %v4309 = vunpack.c.h.b16 %v3337
        %v4310 = vunpack.c.l.b16 %v3338
        %v4311 = vunpack.c.l.b16 %v3339
        %v4312 = vunpack.c.h.b16 %v3339
        %v4313 = vunpack.c.l.b16 %v3340
        %v4314 = vunpack.c.h.b16 %v3340
        %v4315 = vunpack.c.l.b16 %v3341
        %v4316 = vunpack.c.h.b16 %v3341
        %v4317 = vunpack.c.l.b16 %v3342
        %v4318 = vunpack.c.l.b16 %v3343
        %v4319 = vunpack.c.h.b16 %v3343
        %v4320 = vunpack.c.l.b16 %v3344
        %v4321 = vunpack.c.h.b16 %v3344
        %v4322 = vunpack.c.l.b16 %v3345
        %v4323 = vunpack.c.h.b16 %v3345
        %v4324 = vunpack.c.l.b16 %v3346
        %v4325 = vunpack.c.l.b16 %v3347
        %v4326 = vunpack.c.h.b16 %v3347
        %v4327 = vunpack.c.l.b16 %v3348
        %v4328 = vunpack.c.h.b16 %v3348
        %v4329 = vunpack.c.l.b16 %v3349
        %v4330 = vunpack.c.h.b16 %v3349
        %v4331 = vunpack.c.l.b16 %v3350
        %v4332 = vunpack.c.l.b16 %v3351
        %v4333 = vunpack.c.h.b16 %v3351
        %v4334 = vunpack.c.l.b16 %v3352
        %v4335 = vunpack.c.h.b16 %v3352
        %v4336 = vunpack.c.l.b16 %v3353
        %v4337 = vunpack.c.h.b16 %v3353
        %v4338 = vunpack.c.l.b16 %v3354
        %v4339 = vunpack.c.l.b16 %v3355
        %v4340 = vunpack.c.h.b16 %v3355
        %v4341 = vunpack.c.l.b16 %v3356
        %v4342 = vunpack.c.h.b16 %v3356
        %v4343 = vunpack.c.l.b16 %v3357
        %v4344 = vunpack.c.h.b16 %v3357
        %v4345 = vunpack.c.l.b16 %v3358
        %v4346 = vunpack.c.l.b16 %v3359
        %v4347 = vunpack.c.h.b16 %v3359
        %v4348 = vunpack.c.l.b16 %v3360
        %v4349 = vunpack.c.h.b16 %v3360
        %v4350 = vunpack.c.l.b16 %v3361
        %v4351 = vunpack.c.h.b16 %v3361
        %v4352 = vunpack.c.l.b16 %v3362
        %v4353 = vunpack.c.l.b16 %v3363
        %v4354 = vunpack.c.h.b16 %v3363
        %v4355 = vunpack.c.l.b16 %v3364
        %v4356 = vunpack.c.h.b16 %v3364
        %v4357 = vunpack.c.l.b16 %v3365
        %v4358 = vunpack.c.h.b16 %v3365
        %v4359 = vunpack.c.l.b16 %v3366
        %v4360 = vunpack.c.l.b16 %v3367
        %v4361 = vunpack.c.h.b16 %v3367
        %v4362 = vunpack.c.l.b16 %v3368
        %v4363 = vunpack.c.h.b16 %v3368
        %v4364 = vunpack.c.l.b16 %v3369
        %v4365 = vunpack.c.h.b16 %v3369
        %v4366 = vunpack.c.l.b16 %v3370
        %v4367 = vunpack.c.l.b16 %v3371
        %v4368 = vunpack.c.h.b16 %v3371
        %v4369 = vunpack.c.l.b16 %v3372
        %v4370 = vunpack.c.h.b16 %v3372
        %v4371 = vunpack.c.l.b16 %v3373
        %v4372 = vunpack.c.h.b16 %v3373
        %v4373 = vunpack.c.l.b16 %v3374
        %v4374 = vunpack.c.l.b16 %v3375
        %v4375 = vunpack.c.h.b16 %v3375
        %v4376 = vunpack.c.l.b16 %v3376
        %v4377 = vunpack.c.h.b16 %v3376
        %v4378 = vunpack.c.l.b16 %v3377
        %v4379 = vunpack.c.h.b16 %v3377
        %v4380 = vunpack.c.l.b16 %v3378
        %v4381 = vunpack.c.l.b16 %v3379
        %v4382 = vunpack.c.h.b16 %v3379
        %v4383 = vunpack.c.l.b16 %v3380
        %v4384 = vunpack.c.h.b16 %v3380
        %v4385 = vunpack.c.l.b16 %v3381
        %v4386 = vunpack.c.h.b16 %v3381
        %v4387 = vunpack.c.l.b16 %v3382
        %v4388 = vunpack.c.l.b16 %v3383
        %v4389 = vunpack.c.h.b16 %v3383
        %v4390 = vunpack.c.l.b16 %v3384
        %v4391 = vunpack.c.h.b16 %v3384
        %v4392 = vunpack.c.l.b16 %v3385
        %v4393 = vunpack.c.h.b16 %v3385
        %v4394 = vunpack.c.l.b16 %v3386
        %v4395 = vunpack.c.l.b16 %v3387
        %v4396 = vunpack.c.h.b16 %v3387
        %v4397 = vunpack.c.l.b16 %v3388
        %v4398 = vunpack.c.h.b16 %v3388
        %v4399 = vunpack.c.l.b16 %v3389
        %v4400 = vunpack.c.h.b16 %v3389
        %v4401 = vunpack.c.l.b16 %v3390
        %v4402 = vunpack.c.l.b16 %v3391
        %v4403 = vunpack.c.h.b16 %v3391
        %v4404 = vunpack.c.l.b16 %v3392
        %v4405 = vunpack.c.h.b16 %v3392
        %v4406 = vunpack.c.l.b16 %v3393
        %v4407 = vunpack.c.h.b16 %v3393
        %v4408 = vunpack.c.l.b16 %v3394
        %v4409 = vunpack.c.l.b16 %v3395
        %v4410 = vunpack.c.h.b16 %v3395
        %v4411 = vunpack.c.l.b16 %v3396
        %v4412 = vunpack.c.h.b16 %v3396
        %v4413 = vunpack.c.l.b16 %v3397
        %v4414 = vunpack.c.h.b16 %v3397
        %v4415 = vunpack.c.l.b16 %v3398
        %v4416 = vunpack.c.l.b16 %v3399
        %v4417 = vunpack.c.h.b16 %v3399
        %v4418 = vunpack.c.l.b16 %v3400
        %v4419 = vunpack.c.h.b16 %v3400
        %v4420 = vunpack.c.l.b16 %v3401
        %v4421 = vunpack.c.h.b16 %v3401
        %v4422 = vunpack.c.l.b16 %v3402
        %v4423 = vunpack.c.l.b16 %v3403
        %v4424 = vunpack.c.h.b16 %v3403
        %v4425 = vunpack.c.l.b16 %v3404
        %v4426 = vunpack.c.h.b16 %v3404
        %v4427 = vunpack.c.l.b16 %v3405
        %v4428 = vunpack.c.h.b16 %v3405
        %v4429 = vunpack.c.l.b16 %v3406
        %v4430 = vunpack.c.l.b16 %v3407
        %v4431 = vunpack.c.h.b16 %v3407
        %v4432 = vunpack.c.l.b16 %v3408
        %v4433 = vunpack.c.h.b16 %v3408
        %v4434 = vunpack.c.l.b16 %v3409
        %v4435 = vunpack.c.h.b16 %v3409
        %v4436 = vunpack.c.l.b16 %v3410
        %v4437 = vunpack.c.l.b16 %v3411
        %v4438 = vunpack.c.h.b16 %v3411
        %v4439 = vunpack.c.l.b16 %v3412
        %v4440 = vunpack.c.h.b16 %v3412
        %v4441 = vunpack.c.l.b16 %v3413
        %v4442 = vunpack.c.h.b16 %v3413
        %v4443 = vunpack.c.l.b16 %v3414
        %v4444 = vunpack.c.l.b16 %v3415
        %v4445 = vunpack.c.h.b16 %v3415
        %v4446 = vunpack.c.l.b16 %v3416
        %v4447 = vunpack.c.h.b16 %v3416
        %v4448 = vunpack.c.l.b16 %v3417
        %v4449 = vunpack.c.h.b16 %v3417
        %v4450 = vunpack.c.l.b16 %v3418
        %v4451 = vunpack.c.l.b16 %v3419
        %v4452 = vunpack.c.h.b16 %v3419
        %v4453 = vunpack.c.l.b16 %v3420
        %v4454 = vunpack.c.h.b16 %v3420
        %v4455 = vunpack.c.l.b16 %v3421
        %v4456 = vunpack.c.h.b16 %v3421
        %v4457 = vunpack.c.l.b16 %v3422
        %v4458 = vunpack.c.l.b16 %v3423
        %v4459 = vunpack.c.h.b16 %v3423
        %v4460 = vunpack.c.l.b16 %v3424
        %v4461 = vunpack.c.h.b16 %v3424
        %v4462 = vunpack.c.l.b16 %v3425
        %v4463 = vunpack.c.h.b16 %v3425
        %v4464 = vunpack.c.l.b16 %v3426
        %v4465 = vunpack.c.l.b16 %v3427
        %v4466 = vunpack.c.h.b16 %v3427
        %v4467 = vunpack.c.l.b16 %v3428
        %v4468 = vunpack.c.h.b16 %v3428
        %v4469 = vunpack.c.l.b16 %v3429
        %v4470 = vunpack.c.h.b16 %v3429
        %v4471 = vunpack.c.l.b16 %v3430
        %v4472 = vunpack.c.l.b16 %v3431
        %v4473 = vunpack.c.h.b16 %v3431
        %v4474 = vunpack.c.l.b16 %v3432
        %v4475 = vunpack.c.h.b16 %v3432
        %v4476 = vunpack.c.l.b16 %v3433
        %v4477 = vunpack.c.h.b16 %v3433
        %v4478 = vunpack.c.l.b16 %v3434
        %v4479 = vunpack.c.l.b16 %v3435
        %v4480 = vunpack.c.h.b16 %v3435
        %v4481 = vunpack.c.l.b16 %v3436
        %v4482 = vunpack.c.h.b16 %v3436
        %v4483 = vunpack.c.l.b16 %v3437
        %v4484 = vunpack.c.h.b16 %v3437
        %v4485 = vunpack.c.l.b16 %v3438
        %v4486 = vunpack.c.l.b16 %v3439
        %v4487 = vunpack.c.h.b16 %v3439
        %v4488 = vunpack.c.l.b16 %v3440
        %v4489 = vunpack.c.h.b16 %v3440
        %v4490 = vunpack.c.l.b16 %v3441
        %v4491 = vunpack.c.h.b16 %v3441
        %v4492 = vunpack.c.l.b16 %v3442
        %v4493 = vunpack.c.l.b16 %v3443
        %v4494 = vunpack.c.h.b16 %v3443
        %v4495 = vunpack.c.l.b16 %v3444
        %v4496 = vunpack.c.h.b16 %v3444
        %v4497 = vunpack.c.l.b16 %v3445
        %v4498 = vunpack.c.h.b16 %v3445
        %v4499 = vunpack.c.l.b16 %v3446
        %v4500 = vunpack.c.l.b16 %v3447
        %v4501 = vunpack.c.h.b16 %v3447
        %v4502 = vunpack.c.l.b16 %v3448
        %v4503 = vunpack.c.h.b16 %v3448
        %v4504 = vunpack.c.l.b16 %v3449
        %v4505 = vunpack.c.h.b16 %v3449
        %v4506 = vunpack.c.l.b16 %v3450
        %v4507 = vunpack.c.l.b16 %v3451
        %v4508 = vunpack.c.h.b16 %v3451
        %v4509 = vunpack.c.l.b16 %v3452
        %v4510 = vunpack.c.h.b16 %v3452
        %v4511 = vunpack.c.l.b16 %v3453
        %v4512 = vunpack.c.h.b16 %v3453
        %v4513 = vunpack.c.l.b16 %v3454
        %v4514 = vunpack.c.l.b16 %v3455
        %v4515 = vunpack.c.h.b16 %v3455
        %v4516 = vunpack.c.l.b16 %v3456
        %v4517 = vunpack.c.h.b16 %v3456
        %v4518 = vunpack.c.l.b16 %v3457
        %v4519 = vunpack.c.h.b16 %v3457
        %v4520 = vunpack.c.l.b16 %v3458
        %v4521 = vunpack.c.l.b16 %v3459
        %v4522 = vunpack.c.h.b16 %v3459
        %v4523 = vunpack.c.l.b16 %v3460
        %v4524 = vunpack.c.h.b16 %v3460
        %v4525 = vunpack.c.l.b16 %v3461
        %v4526 = vunpack.c.h.b16 %v3461
        %v4527 = vunpack.c.l.b16 %v3462
        %v4528 = vunpack.c.l.b16 %v3463
        %v4529 = vunpack.c.h.b16 %v3463
        %v4530 = vunpack.c.l.b16 %v3464
        %v4531 = vunpack.c.h.b16 %v3464
        %v4532 = vunpack.c.l.b16 %v3465
        %v4533 = vunpack.c.h.b16 %v3465
        %v4534 = vunpack.c.l.b16 %v3466
        %v4535 = vunpack.c.l.b16 %v3467
        %v4536 = vunpack.c.h.b16 %v3467
        %v4537 = vunpack.c.l.b16 %v3468
        %v4538 = vunpack.c.h.b16 %v3468
        %v4539 = vunpack.c.l.b16 %v3469
        %v4540 = vunpack.c.h.b16 %v3469
        %v4541 = vunpack.c.l.b16 %v3470
        %v4542 = vunpack.c.l.b16 %v3471
        %v4543 = vunpack.c.h.b16 %v3471
        %v4544 = vunpack.c.l.b16 %v3472
        %v4545 = vunpack.c.h.b16 %v3472
        %v4546 = vunpack.c.l.b16 %v3473
        %v4547 = vunpack.c.h.b16 %v3473
        %v4548 = vunpack.c.l.b16 %v3474
        %v4549 = vunpack.c.l.b16 %v3475
        %v4550 = vunpack.c.h.b16 %v3475
        %v4551 = vunpack.c.l.b16 %v3476
        %v4552 = vunpack.c.h.b16 %v3476
        %v4553 = vunpack.c.l.b16 %v3477
        %v4554 = vunpack.c.h.b16 %v3477
        %v4555 = vunpack.c.l.b16 %v3478
        %v4556 = vunpack.c.l.b16 %v3479
        %v4557 = vunpack.c.h.b16 %v3479
        %v4558 = vunpack.c.l.b16 %v3480
        %v4559 = vunpack.c.h.b16 %v3480
        %v4560 = vunpack.c.l.b16 %v3481
        %v4561 = vunpack.c.h.b16 %v3481
        %v4562 = vunpack.c.l.b16 %v3482
        %v4563 = vunpack.c.l.b16 %v3483
        %v4564 = vunpack.c.h.b16 %v3483
        %v4565 = vunpack.c.l.b16 %v3484
        %v4566 = vunpack.c.h.b16 %v3484
        %v4567 = vunpack.c.l.b16 %v3485
        %v4568 = vunpack.c.h.b16 %v3485
        %v4569 = vunpack.c.l.b16 %v3486
        %v4570 = vunpack.c.l.b16 %v3487
        %v4571 = vunpack.c.h.b16 %v3487
        %v4572 = vunpack.c.l.b16 %v3488
        %v4573 = vunpack.c.h.b16 %v3488
        %v4574 = vunpack.c.l.b16 %v3489
        %v4575 = vunpack.c.h.b16 %v3489
        %v4576 = vunpack.c.l.b16 %v3490
        %v4577 = vunpack.c.l.b16 %v3491
        %v4578 = vunpack.c.h.b16 %v3491
        %v4579 = vunpack.c.l.b16 %v3492
        %v4580 = vunpack.c.h.b16 %v3492
        %v4581 = vunpack.c.l.b16 %v3493
        %v4582 = vunpack.c.h.b16 %v3493
        %v4583 = vunpack.c.l.b16 %v3494
        %v4584 = vunpack.c.l.b16 %v3495
        %v4585 = vunpack.c.h.b16 %v3495
        %v4586 = vunpack.c.l.b16 %v3496
        %v4587 = vunpack.c.h.b16 %v3496
        %v4588 = vunpack.c.l.b16 %v3497
        %v4589 = vunpack.c.h.b16 %v3497
        %v4590 = vunpack.c.l.b16 %v3498
        %v4591 = vunpack.c.l.b16 %v3499
        %v4592 = vunpack.c.h.b16 %v3499
        %v4593 = vunpack.c.l.b16 %v3500
        %v4594 = vunpack.c.h.b16 %v3500
        %v4595 = vunpack.c.l.b16 %v3501
        %v4596 = vunpack.c.h.b16 %v3501
        %v4597 = vunpack.c.l.b16 %v3502
        %v4598 = vunpack.c.l.b16 %v3503
        %v4599 = vunpack.c.h.b16 %v3503
        %v4600 = vunpack.c.l.b16 %v3504
        %v4601 = vunpack.c.h.b16 %v3504
        %v4602 = vunpack.c.l.b16 %v3505
        %v4603 = vunpack.c.h.b16 %v3505
        %v4604 = vunpack.c.l.b16 %v3506
        %v4605 = vunpack.c.l.b16 %v3507
        %v4606 = vunpack.c.h.b16 %v3507
        %v4607 = vunpack.c.l.b16 %v3508
        %v4608 = vunpack.c.h.b16 %v3508
        %v4609 = vunpack.c.l.b16 %v3509
        %v4610 = vunpack.c.h.b16 %v3509
        %v4611 = vunpack.c.l.b16 %v3510
        %v4612 = vunpack.c.l.b16 %v3511
        %v4613 = vunpack.c.h.b16 %v3511
        %v4614 = vunpack.c.l.b16 %v3512
        %v4615 = vunpack.c.h.b16 %v3512
        %v4616 = vunpack.c.l.b16 %v3513
        %v4617 = vunpack.c.h.b16 %v3513
        %v4618 = vunpack.c.l.b16 %v3514
        %v4619 = vunpack.c.l.b16 %v3515
        %v4620 = vunpack.c.h.b16 %v3515
        %v4621 = vunpack.c.l.b16 %v3516
        %v4622 = vunpack.c.h.b16 %v3516
        %v4623 = vunpack.c.l.b16 %v3517
        %v4624 = vunpack.c.h.b16 %v3517
        %v4625 = vunpack.c.l.b16 %v3518
        %v4626 = vunpack.c.l.b16 %v3519
        %v4627 = vunpack.c.h.b16 %v3519
        %v4628 = vunpack.c.l.b16 %v3520
        %v4629 = vunpack.c.h.b16 %v3520
        %v4630 = vunpack.c.l.b16 %v3521
        %v4631 = vunpack.c.h.b16 %v3521
        %v4632 = vunpack.c.l.b16 %v3522
        %v4633 = vunpack.c.l.b16 %v3523
        %v4634 = vunpack.c.h.b16 %v3523
        %v4635 = vunpack.c.l.b16 %v3524
        %v4636 = vunpack.c.h.b16 %v3524
        %v4637 = vunpack.c.l.b16 %v3525
        %v4638 = vunpack.c.h.b16 %v3525
        %v4639 = vunpack.c.l.b16 %v3526
        %v4640 = vunpack.c.l.b16 %v3527
        %v4641 = vunpack.c.h.b16 %v3527
        %v4642 = vunpack.c.l.b16 %v3528
        %v4643 = vunpack.c.h.b16 %v3528
        %v4644 = vunpack.c.l.b16 %v3529
        %v4645 = vunpack.c.h.b16 %v3529
        %v4646 = vunpack.c.l.b16 %v3530
        %v4647 = vunpack.c.l.b16 %v3531
        %v4648 = vunpack.c.h.b16 %v3531
        %v4649 = vunpack.c.l.b16 %v3532
        %v4650 = vunpack.c.h.b16 %v3532
        %v4651 = vunpack.c.l.b16 %v3533
        %v4652 = vunpack.c.h.b16 %v3533
        %v4653 = vunpack.c.l.b16 %v3534
        %v4654 = vunpack.c.l.b16 %v3535
        %v4655 = vunpack.c.h.b16 %v3535
        %v4656 = vunpack.c.l.b16 %v3536
        %v4657 = vunpack.c.h.b16 %v3536
        %v4658 = vunpack.c.l.b16 %v3537
        %v4659 = vunpack.c.h.b16 %v3537
        %v4660 = vunpack.c.l.b16 %v3538
        %v4661 = vunpack.c.l.b16 %v3539
        %v4662 = vunpack.c.h.b16 %v3539
        %v4663 = vunpack.c.l.b16 %v3540
        %v4664 = vunpack.c.h.b16 %v3540
        %v4665 = vunpack.c.l.b16 %v3541
        %v4666 = vunpack.c.h.b16 %v3541
        %v4667 = vunpack.c.l.b16 %v3542
        %v4668 = vunpack.c.l.b16 %v3543
        %v4669 = vunpack.c.h.b16 %v3543
        %v4670 = vunpack.c.l.b16 %v3544
        %v4671 = vunpack.c.h.b16 %v3544
        %v4672 = vunpack.c.l.b16 %v3545
        %v4673 = vunpack.c.h.b16 %v3545
        %v4674 = vunpack.c.l.b16 %v3546
        %v4675 = vunpack.c.l.b16 %v3547
        %v4676 = vunpack.c.h.b16 %v3547
        %v4677 = vunpack.c.l.b16 %v3548
        %v4678 = vunpack.c.h.b16 %v3548
        %v4679 = vunpack.c.l.b16 %v3549
        %v4680 = vunpack.c.h.b16 %v3549
        %v4681 = vunpack.c.l.b16 %v3550
        %v4682 = vunpack.c.l.b16 %v3551
        %v4683 = vunpack.c.h.b16 %v3551
        %v4684 = vunpack.c.l.b16 %v3552
        %v4685 = vunpack.c.h.b16 %v3552
        %v4686 = vunpack.c.l.b16 %v3553
        %v4687 = vunpack.c.h.b16 %v3553
        %v4688 = vunpack.c.l.b16 %v3554
        %v4689 = vunpack.c.l.b16 %v3555
        %v4690 = vunpack.c.h.b16 %v3555
        %v4691 = vunpack.c.l.b16 %v3556
        %v4692 = vunpack.c.h.b16 %v3556
        %v4693 = vunpack.c.l.b16 %v3557
        %v4694 = vunpack.c.h.b16 %v3557
        %v4695 = vunpack.c.l.b16 %v3558
        %v4696 = vunpack.c.l.b16 %v3559
        %v4697 = vunpack.c.h.b16 %v3559
        %v4698 = vunpack.c.l.b16 %v3560
        %v4699 = vunpack.c.h.b16 %v3560
        %v4700 = vunpack.c.l.b16 %v3561
        %v4701 = vunpack.c.h.b16 %v3561
        %v4702 = vunpack.c.l.b16 %v3562
        %v4703 = vunpack.c.l.b16 %v3563
        %v4704 = vunpack.c.h.b16 %v3563
        %v4705 = vunpack.c.l.b16 %v3564
        %v4706 = vunpack.c.h.b16 %v3564
        %v4707 = vunpack.c.l.b16 %v3565
        %v4708 = vunpack.c.h.b16 %v3565
        %v4709 = vunpack.c.l.b16 %v3566
        %v4710 = vunpack.c.l.b16 %v3567
        %v4711 = vunpack.c.h.b16 %v3567
        %v4712 = vunpack.c.l.b16 %v3568
        %v4713 = vunpack.c.h.b16 %v3568
        %v4714 = vunpack.c.l.b16 %v3569
        %v4715 = vunpack.c.h.b16 %v3569
        %v4716 = vunpack.c.l.b16 %v3570
        %v4717 = vunpack.c.l.b16 %v3571
        %v4718 = vunpack.c.h.b16 %v3571
        %v4719 = vunpack.c.l.b16 %v3572
        %v4720 = vunpack.c.h.b16 %v3572
        %v4721 = vunpack.c.l.b16 %v3573
        %v4722 = vunpack.c.h.b16 %v3573
        %v4723 = vunpack.c.l.b16 %v3574
        %v4724 = vunpack.c.l.b16 %v3575
        %v4725 = vunpack.c.h.b16 %v3575
        %v4726 = vunpack.c.l.b16 %v3576
        %v4727 = vunpack.c.h.b16 %v3576
        %v4728 = vunpack.c.l.b16 %v3577
        %v4729 = vunpack.c.h.b16 %v3577
        %v4730 = vunpack.c.l.b16 %v3578
        %v4731 = vunpack.c.l.b16 %v3579
        %v4732 = vunpack.c.h.b16 %v3579
        %v4733 = vunpack.c.l.b16 %v3580
        %v4734 = vunpack.c.h.b16 %v3580
        %v4735 = vunpack.c.l.b16 %v3581
        %v4736 = vunpack.c.h.b16 %v3581
        %v4737 = vunpack.c.l.b16 %v3582
        %v4738 = vunpack.c.l.b16 %v3583
        %v4739 = vunpack.c.h.b16 %v3583
        %v4740 = vunpack.c.l.b16 %v3584
        %v4741 = vunpack.c.h.b16 %v3584
        %v4742 = vunpack.c.l.b16 %v3585
        %v4743 = vunpack.c.h.b16 %v3585
        %v4744 = vunpack.c.l.b16 %v3586
        %v4745 = vunpack.c.l.b16 %v3587
        %v4746 = vunpack.c.h.b16 %v3587
        %v4747 = vunpack.c.l.b16 %v3588
        %v4748 = vunpack.c.h.b16 %v3588
        %v4749 = vunpack.c.l.b16 %v3589
        %v4750 = vunpack.c.h.b16 %v3589
        %v4751 = vunpack.c.l.b16 %v3590
        %v4752 = vunpack.c.l.b16 %v3591
        %v4753 = vunpack.c.h.b16 %v3591
        %v4754 = vunpack.c.l.b16 %v3592
        %v4755 = vunpack.c.h.b16 %v3592
        %v4756 = vunpack.c.l.b16 %v3593
        %v4757 = vunpack.c.h.b16 %v3593
        %v4758 = vunpack.c.l.b16 %v3594
        %v4759 = vunpack.c.l.b16 %v3595
        %v4760 = vunpack.c.h.b16 %v3595
        %v4761 = vunpack.c.l.b16 %v3596
        %v4762 = vunpack.c.h.b16 %v3596
        %v4763 = vunpack.c.l.b16 %v3597
        %v4764 = vunpack.c.h.b16 %v3597
        %v4765 = vunpack.c.l.b16 %v3598
        %v4766 = vunpack.c.l.b16 %v3599
        %v4767 = vunpack.c.h.b16 %v3599
        %v4768 = vunpack.c.l.b16 %v3600
        %v4769 = vunpack.c.h.b16 %v3600
        %v4770 = vunpack.c.l.b16 %v3601
        %v4771 = vunpack.c.h.b16 %v3601
        %v4772 = vunpack.c.l.b16 %v3602
        %v4773 = vunpack.c.l.b16 %v3603
        %v4774 = vunpack.c.h.b16 %v3603
        %v4775 = vunpack.c.l.b16 %v3604
        %v4776 = vunpack.c.h.b16 %v3604
        %v4777 = vunpack.c.l.b16 %v3605
        %v4778 = vunpack.c.h.b16 %v3605
        %v4779 = vunpack.c.l.b16 %v3606
        %v4780 = vunpack.c.l.b16 %v3607
        %v4781 = vunpack.c.h.b16 %v3607
        %v4782 = vunpack.c.l.b16 %v3608
        %v4783 = vunpack.c.h.b16 %v3608
        %v4784 = vunpack.c.l.b16 %v3609
        %v4785 = vunpack.c.h.b16 %v3609
        %v4786 = vunpack.c.l.b16 %v3610
        %v4787 = vunpack.c.l.b16 %v3611
        %v4788 = vunpack.c.h.b16 %v3611
        %v4789 = vunpack.c.l.b16 %v3612
        %v4790 = vunpack.c.h.b16 %v3612
        %v4791 = vunpack.c.l.b16 %v3613
        %v4792 = vunpack.c.h.b16 %v3613
        %v4793 = vunpack.c.l.b16 %v3614
        %v4794 = vunpack.c.l.b16 %v3615
        %v4795 = vunpack.c.h.b16 %v3615
        %v4796 = vunpack.c.l.b16 %v3616
        %v4797 = vunpack.c.h.b16 %v3616
        %v4798 = vunpack.c.l.b16 %v3617
        %v4799 = vunpack.c.h.b16 %v3617
        %v4800 = vunpack.c.l.b16 %v3618
        %v4801 = vunpack.c.l.b16 %v3619
        %v4802 = vunpack.c.h.b16 %v3619
        %v4803 = vunpack.c.l.b16 %v3620
        %v4804 = vunpack.c.h.b16 %v3620
        %v4805 = vunpack.c.l.b16 %v3621
        %v4806 = vunpack.c.h.b16 %v3621
        %v4807 = vunpack.c.l.b16 %v3622
        %v4808 = vunpack.c.l.b16 %v3623
        %v4809 = vunpack.c.h.b16 %v3623
        %v4810 = vunpack.c.l.b16 %v3624
        %v4811 = vunpack.c.h.b16 %v3624
        %v4812 = vunpack.c.l.b16 %v3625
        %v4813 = vunpack.c.h.b16 %v3625
        %v4814 = vunpack.c.l.b16 %v3626
        %v4815 = vunpack.c.l.b16 %v3627
        %v4816 = vunpack.c.h.b16 %v3627
        %v4817 = vunpack.c.l.b16 %v3628
        %v4818 = vunpack.c.h.b16 %v3628
        %v4819 = vunpack.c.l.b16 %v3629
        %v4820 = vunpack.c.h.b16 %v3629
        %v4821 = vunpack.c.l.b16 %v3630
        %v4822 = vunpack.c.l.b16 %v3631
        %v4823 = vunpack.c.h.b16 %v3631
        %v4824 = vunpack.c.l.b16 %v3632
        %v4825 = vunpack.c.h.b16 %v3632
        %v4826 = vunpack.c.l.b16 %v3633
        %v4827 = vunpack.c.h.b16 %v3633
        %v4828 = vunpack.c.l.b16 %v3634
        %v4829 = vunpack.c.l.b16 %v3635
        %v4830 = vunpack.c.h.b16 %v3635
        %v4831 = vunpack.c.l.b16 %v3636
        %v4832 = vunpack.c.h.b16 %v3636
        %v4833 = vunpack.c.l.b16 %v3637
        %v4834 = vunpack.c.h.b16 %v3637
        %v4835 = vunpack.c.l.b16 %v3638
        %v4836 = vunpack.c.l.b16 %v3639
        %v4837 = vunpack.c.h.b16 %v3639
        %v4838 = vunpack.c.l.b16 %v3640
        %v4839 = vunpack.c.h.b16 %v3640
        %v4840 = vunpack.c.l.b16 %v3641
        %v4841 = vunpack.c.h.b16 %v3641
        %v4842 = vunpack.c.l.b16 %v3642
        %v4843 = vunpack.c.l.b16 %v3643
        %v4844 = vunpack.c.h.b16 %v3643
        %v4845 = vunpack.c.l.b16 %v3644
        %v4846 = vunpack.c.h.b16 %v3644
        %v4847 = vunpack.c.l.b16 %v3645
        %v4848 = vunpack.c.h.b16 %v3645
        %v4849 = vunpack.c.l.b16 %v3646
        %v4850 = vunpack.c.l.b16 %v3647
        %v4851 = vunpack.c.h.b16 %v3647
        %v4852 = vunpack.c.l.b16 %v3648
        %v4853 = vunpack.c.h.b16 %v3648
        %v4854 = vunpack.c.l.b16 %v3649
        %v4855 = vunpack.c.h.b16 %v3649
        %v4856 = vunpack.c.l.b16 %v3650
        %v4857 = vunpack.c.l.b16 %v3651
        %v4858 = vunpack.c.h.b16 %v3651
        %v4859 = vunpack.c.l.b16 %v3652
        %v4860 = vunpack.c.h.b16 %v3652
        %v4861 = vunpack.c.l.b16 %v3653
        %v4862 = vunpack.c.h.b16 %v3653
        %v4863 = vunpack.c.l.b16 %v3654
        %v4864 = vunpack.c.l.b16 %v3655
        %v4865 = vunpack.c.h.b16 %v3655
        %v4866 = vunpack.c.l.b16 %v3656
        %v4867 = vunpack.c.h.b16 %v3656
        %v4868 = vunpack.c.l.b16 %v3657
        %v4869 = vunpack.c.h.b16 %v3657
        %v4870 = vunpack.c.l.b16 %v3658
        %v4871 = vunpack.c.l.b16 %v3659
        %v4872 = vunpack.c.h.b16 %v3659
        %v4873 = vunpack.c.l.b16 %v3660
        %v4874 = vunpack.c.h.b16 %v3660
        %v4875 = vunpack.c.l.b16 %v3661
        %v4876 = vunpack.c.h.b16 %v3661
        %v4877 = vunpack.c.l.b16 %v3662
        %v4878 = vunpack.c.l.b16 %v3663
        %v4879 = vunpack.c.h.b16 %v3663
        %v4880 = vunpack.c.l.b16 %v3664
        %v4881 = vunpack.c.h.b16 %v3664
        %v4882 = vunpack.c.l.b16 %v3665
        %v4883 = vunpack.c.h.b16 %v3665
        %v4884 = vunpack.c.l.b16 %v3666
        %v4885 = vunpack.c.l.b16 %v3667
        %v4886 = vunpack.c.h.b16 %v3667
        %v4887 = vunpack.c.l.b16 %v3668
        %v4888 = vunpack.c.h.b16 %v3668
        %v4889 = vunpack.c.l.b16 %v3669
        %v4890 = vunpack.c.h.b16 %v3669
        %v4891 = vunpack.c.l.b16 %v3670
        %v4892 = vunpack.c.l.b16 %v3671
        %v4893 = vunpack.c.h.b16 %v3671
        %v4894 = vunpack.c.l.b16 %v3672
        %v4895 = vunpack.c.h.b16 %v3672
        %v4896 = vunpack.c.l.b16 %v3673
        %v4897 = vunpack.c.h.b16 %v3673
        %v4898 = vunpack.c.l.b16 %v3674
        %v4899 = vunpack.c.l.b16 %v3675
        %v4900 = vunpack.c.h.b16 %v3675
        %v4901 = vunpack.c.l.b16 %v3676
        %v4902 = vunpack.c.h.b16 %v3676
        %v4903 = vunpack.c.l.b16 %v3677
        %v4904 = vunpack.c.h.b16 %v3677
        %v4905 = vunpack.c.l.b16 %v3678
        %v4906 = vunpack.c.l.b16 %v3679
        %v4907 = vunpack.c.h.b16 %v3679
        %v4908 = vunpack.c.l.b16 %v3680
        %v4909 = vunpack.c.h.b16 %v3680
        %v4910 = vunpack.c.l.b16 %v3681
        %v4911 = vunpack.c.h.b16 %v3681
        %v4912 = vunpack.c.l.b16 %v3682
        %v4913 = vunpack.c.l.b16 %v3683
        %v4914 = vunpack.c.h.b16 %v3683
        %v4915 = vunpack.c.l.b16 %v3684
        %v4916 = vunpack.c.h.b16 %v3684
        %v4917 = vunpack.c.l.b16 %v3685
        %v4918 = vunpack.c.h.b16 %v3685
        %v4919 = vunpack.c.l.b16 %v3686
        %v4920 = vunpack.c.l.b16 %v3687
        %v4921 = vunpack.c.h.b16 %v3687
        %v4922 = vunpack.c.l.b16 %v3688
        %v4923 = vunpack.c.h.b16 %v3688
        %v4924 = vunpack.c.l.b16 %v3689
        %v4925 = vunpack.c.h.b16 %v3689
        %v4926 = vunpack.c.l.b16 %v3690
        %v4927 = vunpack.c.l.b16 %v3691
        %v4928 = vunpack.c.h.b16 %v3691
        %v4929 = vunpack.c.l.b16 %v3692
        %v4930 = vunpack.c.h.b16 %v3692
        %v4931 = vunpack.c.l.b16 %v3693
        %v4932 = vunpack.c.h.b16 %v3693
        %v4933 = vunpack.c.l.b16 %v3694
        %v4934 = vunpack.c.l.b16 %v3695
        %v4935 = vunpack.c.h.b16 %v3695
        %v4936 = vunpack.c.l.b16 %v3696
        %v4937 = vunpack.c.h.b16 %v3696
        %v4938 = vunpack.c.l.b16 %v3697
        %v4939 = vunpack.c.h.b16 %v3697
        %v4940 = vunpack.c.l.b16 %v3698
        %v4941 = vunpack.c.l.b16 %v3699
        %v4942 = vunpack.c.h.b16 %v3699
        %v4943 = vunpack.c.l.b16 %v3700
        %v4944 = vunpack.c.h.b16 %v3700
        %v4945 = vunpack.c.l.b16 %v3701
        %v4946 = vunpack.c.h.b16 %v3701
        %v4947 = vunpack.c.l.b16 %v3702
        %v4948 = vunpack.c.l.b16 %v3703
        %v4949 = vunpack.c.h.b16 %v3703
        %v4950 = vunpack.c.l.b16 %v3704
        %v4951 = vunpack.c.h.b16 %v3704
        %v4952 = vunpack.c.l.b16 %v3705
        %v4953 = vunpack.c.h.b16 %v3705
        %v4954 = vunpack.c.l.b16 %v3706
        %v4955 = vunpack.c.l.b16 %v3707
        %v4956 = vunpack.c.h.b16 %v3707
        %v4957 = vunpack.c.l.b16 %v3708
        %v4958 = vunpack.c.h.b16 %v3708
        %v4959 = vunpack.c.l.b16 %v3709
        %v4960 = vunpack.c.h.b16 %v3709
        %v4961 = vunpack.c.l.b16 %v3710
        %v4962 = vunpack.c.l.b16 %v3711
        %v4963 = vunpack.c.h.b16 %v3711
        %v4964 = vunpack.c.l.b16 %v3712
        %v4965 = vunpack.c.h.b16 %v3712
        %v4966 = vunpack.c.l.b16 %v3713
        %v4967 = vunpack.c.h.b16 %v3713
        %v4968 = vunpack.c.l.b16 %v3714
        %v4969 = vunpack.c.l.b16 %v3715
        %v4970 = vunpack.c.h.b16 %v3715
        %v4971 = vunpack.c.l.b16 %v3716
        %v4972 = vunpack.c.h.b16 %v3716
        %v4973 = vunpack.c.l.b16 %v3717
        %v4974 = vunpack.c.h.b16 %v3717
        %v4975 = vunpack.c.l.b16 %v3718
        %v4976 = vunpack.c.l.b16 %v3719
        %v4977 = vunpack.c.h.b16 %v3719
        %v4978 = vunpack.c.l.b16 %v3720
        %v4979 = vunpack.c.h.b16 %v3720
        %v4980 = vunpack.c.l.b16 %v3721
        %v4981 = vunpack.c.h.b16 %v3721
        %v4982 = vunpack.c.l.b16 %v3722
        %v4983 = vunpack.c.l.b16 %v3723
        %v4984 = vunpack.c.h.b16 %v3723
        %v4985 = vunpack.c.l.b16 %v3724
        %v4986 = vunpack.c.h.b16 %v3724
        %v4987 = vunpack.c.l.b16 %v3725
        %v4988 = vunpack.c.h.b16 %v3725
        %v4989 = vunpack.c.l.b16 %v3726
        %v4990 = vunpack.c.l.b16 %v3727
        %v4991 = vunpack.c.h.b16 %v3727
        %v4992 = vunpack.c.l.b16 %v3728
        %v4993 = vunpack.c.h.b16 %v3728
        %v4994 = vunpack.c.l.b16 %v3729
        %v4995 = vunpack.c.h.b16 %v3729
        %v4996 = vunpack.c.l.b16 %v3730
        %v4997 = vunpack.c.l.b16 %v3731
        %v4998 = vunpack.c.h.b16 %v3731
        %v4999 = vunpack.c.l.b16 %v3732
        %v5000 = vunpack.c.h.b16 %v3732
        %v5001 = vunpack.c.l.b16 %v3733
        %v5002 = vunpack.c.h.b16 %v3733
        %v5003 = vunpack.c.l.b16 %v3734
        %v5004 = vpack.c.b16 %v4227, %v4220
        %v5005 = vpack.c.b16 %v4228, %v4221
        %v5006 = vpack.c.b16 %v4229, %v4222
        %v5007 = vpack.c.b16 %v4230, %v4223
        %v5008 = vpack.c.b16 %v4231, %v4224
        %v5009 = vpack.c.b16 %v4232, %v4225
        %v5010 = vpack.c.b16 %v4233, %v4226
        %v5011 = vpack.c.b16 %v4241, %v4234
        %v5012 = vpack.c.b16 %v4242, %v4235
        %v5013 = vpack.c.b16 %v4243, %v4236
        %v5014 = vpack.c.b16 %v4244, %v4237
        %v5015 = vpack.c.b16 %v4245, %v4238
        %v5016 = vpack.c.b16 %v4246, %v4239
        %v5017 = vpack.c.b16 %v4247, %v4240
        %v5018 = vpack.c.b16 %v4255, %v4248
        %v5019 = vpack.c.b16 %v4256, %v4249
        %v5020 = vpack.c.b16 %v4257, %v4250
        %v5021 = vpack.c.b16 %v4258, %v4251
        %v5022 = vpack.c.b16 %v4259, %v4252
        %v5023 = vpack.c.b16 %v4260, %v4253
        %v5024 = vpack.c.b16 %v4261, %v4254
        %v5025 = vpack.c.b16 %v4269, %v4262
        %v5026 = vpack.c.b16 %v4270, %v4263
        %v5027 = vpack.c.b16 %v4271, %v4264
        %v5028 = vpack.c.b16 %v4272, %v4265
        %v5029 = vpack.c.b16 %v4273, %v4266
        %v5030 = vpack.c.b16 %v4274, %v4267
        %v5031 = vpack.c.b16 %v4275, %v4268
        %v5032 = vpack.c.b16 %v4283, %v4276
        %v5033 = vpack.c.b16 %v4284, %v4277
        %v5034 = vpack.c.b16 %v4285, %v4278
        %v5035 = vpack.c.b16 %v4286, %v4279
        %v5036 = vpack.c.b16 %v4287, %v4280
        %v5037 = vpack.c.b16 %v4288, %v4281
        %v5038 = vpack.c.b16 %v4289, %v4282
        %v5039 = vpack.c.b16 %v4297, %v4290
        %v5040 = vpack.c.b16 %v4298, %v4291
        %v5041 = vpack.c.b16 %v4299, %v4292
        %v5042 = vpack.c.b16 %v4300, %v4293
        %v5043 = vpack.c.b16 %v4301, %v4294
        %v5044 = vpack.c.b16 %v4302, %v4295
        %v5045 = vpack.c.b16 %v4303, %v4296
        %v5046 = vpack.c.b16 %v4311, %v4304
        %v5047 = vpack.c.b16 %v4312, %v4305
        %v5048 = vpack.c.b16 %v4313, %v4306
        %v5049 = vpack.c.b16 %v4314, %v4307
        %v5050 = vpack.c.b16 %v4315, %v4308
        %v5051 = vpack.c.b16 %v4316, %v4309
        %v5052 = vpack.c.b16 %v4317, %v4310
        %v5053 = vpack.c.b16 %v4325, %v4318
        %v5054 = vpack.c.b16 %v4326, %v4319
        %v5055 = vpack.c.b16 %v4327, %v4320
        %v5056 = vpack.c.b16 %v4328, %v4321
        %v5057 = vpack.c.b16 %v4329, %v4322
        %v5058 = vpack.c.b16 %v4330, %v4323
        %v5059 = vpack.c.b16 %v4331, %v4324
        %v5060 = vpack.c.b16 %v4339, %v4332
        %v5061 = vpack.c.b16 %v4340, %v4333
        %v5062 = vpack.c.b16 %v4341, %v4334
        %v5063 = vpack.c.b16 %v4342, %v4335
        %v5064 = vpack.c.b16 %v4343, %v4336
        %v5065 = vpack.c.b16 %v4344, %v4337
        %v5066 = vpack.c.b16 %v4345, %v4338
        %v5067 = vpack.c.b16 %v4353, %v4346
        %v5068 = vpack.c.b16 %v4354, %v4347
        %v5069 = vpack.c.b16 %v4355, %v4348
        %v5070 = vpack.c.b16 %v4356, %v4349
        %v5071 = vpack.c.b16 %v4357, %v4350
        %v5072 = vpack.c.b16 %v4358, %v4351
        %v5073 = vpack.c.b16 %v4359, %v4352
        %v5074 = vpack.c.b16 %v4367, %v4360
        %v5075 = vpack.c.b16 %v4368, %v4361
        %v5076 = vpack.c.b16 %v4369, %v4362
        %v5077 = vpack.c.b16 %v4370, %v4363
        %v5078 = vpack.c.b16 %v4371, %v4364
        %v5079 = vpack.c.b16 %v4372, %v4365
        %v5080 = vpack.c.b16 %v4373, %v4366
        %v5081 = vpack.c.b16 %v4381, %v4374
        %v5082 = vpack.c.b16 %v4382, %v4375
        %v5083 = vpack.c.b16 %v4383, %v4376
        %v5084 = vpack.c.b16 %v4384, %v4377
        %v5085 = vpack.c.b16 %v4385, %v4378
        %v5086 = vpack.c.b16 %v4386, %v4379
        %v5087 = vpack.c.b16 %v4387, %v4380
        %v5088 = vpack.c.b16 %v4395, %v4388
        %v5089 = vpack.c.b16 %v4396, %v4389
        %v5090 = vpack.c.b16 %v4397, %v4390
        %v5091 = vpack.c.b16 %v4398, %v4391
        %v5092 = vpack.c.b16 %v4399, %v4392
        %v5093 = vpack.c.b16 %v4400, %v4393
        %v5094 = vpack.c.b16 %v4401, %v4394
        %v5095 = vpack.c.b16 %v4409, %v4402
        %v5096 = vpack.c.b16 %v4410, %v4403
        %v5097 = vpack.c.b16 %v4411, %v4404
        %v5098 = vpack.c.b16 %v4412, %v4405
        %v5099 = vpack.c.b16 %v4413, %v4406
        %v5100 = vpack.c.b16 %v4414, %v4407
        %v5101 = vpack.c.b16 %v4415, %v4408
        %v5102 = vpack.c.b16 %v4423, %v4416
        %v5103 = vpack.c.b16 %v4424, %v4417
        %v5104 = vpack.c.b16 %v4425, %v4418
        %v5105 = vpack.c.b16 %v4426, %v4419
        %v5106 = vpack.c.b16 %v4427, %v4420
        %v5107 = vpack.c.b16 %v4428, %v4421
        %v5108 = vpack.c.b16 %v4429, %v4422
        %v5109 = vpack.c.b16 %v4437, %v4430
        %v5110 = vpack.c.b16 %v4438, %v4431
        %v5111 = vpack.c.b16 %v4439, %v4432
        %v5112 = vpack.c.b16 %v4440, %v4433
        %v5113 = vpack.c.b16 %v4441, %v4434
        %v5114 = vpack.c.b16 %v4442, %v4435
        %v5115 = vpack.c.b16 %v4443, %v4436
        %v5116 = vpack.c.b16 %v4451, %v4444
        %v5117 = vpack.c.b16 %v4452, %v4445
        %v5118 = vpack.c.b16 %v4453, %v4446
        %v5119 = vpack.c.b16 %v4454, %v4447
        %v5120 = vpack.c.b16 %v4455, %v4448
        %v5121 = vpack.c.b16 %v4456, %v4449
        %v5122 = vpack.c.b16 %v4457, %v4450
        %v5123 = vpack.c.b16 %v4465, %v4458
        %v5124 = vpack.c.b16 %v4466, %v4459
        %v5125 = vpack.c.b16 %v4467, %v4460
        %v5126 = vpack.c.b16 %v4468, %v4461
        %v5127 = vpack.c.b16 %v4469, %v4462
        %v5128 = vpack.c.b16 %v4470, %v4463
        %v5129 = vpack.c.b16 %v4471, %v4464
        %v5130 = vpack.c.b16 %v4479, %v4472
        %v5131 = vpack.c.b16 %v4480, %v4473
        %v5132 = vpack.c.b16 %v4481, %v4474
        %v5133 = vpack.c.b16 %v4482, %v4475
        %v5134 = vpack.c.b16 %v4483, %v4476
        %v5135 = vpack.c.b16 %v4484, %v4477
        %v5136 = vpack.c.b16 %v4485, %v4478
        %v5137 = vpack.c.b16 %v4493, %v4486
        %v5138 = vpack.c.b16 %v4494, %v4487
        %v5139 = vpack.c.b16 %v4495, %v4488
        %v5140 = vpack.c.b16 %v4496, %v4489
        %v5141 = vpack.c.b16 %v4497, %v4490
        %v5142 = vpack.c.b16 %v4498, %v4491
        %v5143 = vpack.c.b16 %v4499, %v4492
        %v5144 = vpack.c.b16 %v4507, %v4500
        %v5145 = vpack.c.b16 %v4508, %v4501
        %v5146 = vpack.c.b16 %v4509, %v4502
        %v5147 = vpack.c.b16 %v4510, %v4503
        %v5148 = vpack.c.b16 %v4511, %v4504
        %v5149 = vpack.c.b16 %v4512, %v4505
        %v5150 = vpack.c.b16 %v4513, %v4506
        %v5151 = vpack.c.b16 %v4521, %v4514
        %v5152 = vpack.c.b16 %v4522, %v4515
        %v5153 = vpack.c.b16 %v4523, %v4516
        %v5154 = vpack.c.b16 %v4524, %v4517
        %v5155 = vpack.c.b16 %v4525, %v4518
        %v5156 = vpack.c.b16 %v4526, %v4519
        %v5157 = vpack.c.b16 %v4527, %v4520
        %v5158 = vpack.c.b16 %v4535, %v4528
        %v5159 = vpack.c.b16 %v4536, %v4529
        %v5160 = vpack.c.b16 %v4537, %v4530
        %v5161 = vpack.c.b16 %v4538, %v4531
        %v5162 = vpack.c.b16 %v4539, %v4532
        %v5163 = vpack.c.b16 %v4540, %v4533
        %v5164 = vpack.c.b16 %v4541, %v4534
        %v5165 = vpack.c.b16 %v4549, %v4542
        %v5166 = vpack.c.b16 %v4550, %v4543
        %v5167 = vpack.c.b16 %v4551, %v4544
        %v5168 = vpack.c.b16 %v4552, %v4545
        %v5169 = vpack.c.b16 %v4553, %v4546
        %v5170 = vpack.c.b16 %v4554, %v4547
        %v5171 = vpack.c.b16 %v4555, %v4548
        %v5172 = vpack.c.b16 %v4563, %v4556
        %v5173 = vpack.c.b16 %v4564, %v4557
        %v5174 = vpack.c.b16 %v4565, %v4558
        %v5175 = vpack.c.b16 %v4566, %v4559
        %v5176 = vpack.c.b16 %v4567, %v4560
        %v5177 = vpack.c.b16 %v4568, %v4561
        %v5178 = vpack.c.b16 %v4569, %v4562
        %v5179 = vpack.c.b16 %v4577, %v4570
        %v5180 = vpack.c.b16 %v4578, %v4571
        %v5181 = vpack.c.b16 %v4579, %v4572
        %v5182 = vpack.c.b16 %v4580, %v4573
        %v5183 = vpack.c.b16 %v4581, %v4574
        %v5184 = vpack.c.b16 %v4582, %v4575
        %v5185 = vpack.c.b16 %v4583, %v4576
        %v5186 = vpack.c.b16 %v4591, %v4584
        %v5187 = vpack.c.b16 %v4592, %v4585
        %v5188 = vpack.c.b16 %v4593, %v4586
        %v5189 = vpack.c.b16 %v4594, %v4587
        %v5190 = vpack.c.b16 %v4595, %v4588
        %v5191 = vpack.c.b16 %v4596, %v4589
        %v5192 = vpack.c.b16 %v4597, %v4590
        %v5193 = vpack.c.b16 %v4605, %v4598
        %v5194 = vpack.c.b16 %v4606, %v4599
        %v5195 = vpack.c.b16 %v4607, %v4600
        %v5196 = vpack.c.b16 %v4608, %v4601
        %v5197 = vpack.c.b16 %v4609, %v4602
        %v5198 = vpack.c.b16 %v4610, %v4603
        %v5199 = vpack.c.b16 %v4611, %v4604
        %v5200 = vpack.c.b16 %v4619, %v4612
        %v5201 = vpack.c.b16 %v4620, %v4613
        %v5202 = vpack.c.b16 %v4621, %v4614
        %v5203 = vpack.c.b16 %v4622, %v4615
        %v5204 = vpack.c.b16 %v4623, %v4616
        %v5205 = vpack.c.b16 %v4624, %v4617
        %v5206 = vpack.c.b16 %v4625, %v4618
        %v5207 = vpack.c.b16 %v4633, %v4626
        %v5208 = vpack.c.b16 %v4634, %v4627
        %v5209 = vpack.c.b16 %v4635, %v4628
        %v5210 = vpack.c.b16 %v4636, %v4629
        %v5211 = vpack.c.b16 %v4637, %v4630
        %v5212 = vpack.c.b16 %v4638, %v4631
        %v5213 = vpack.c.b16 %v4639, %v4632
        %v5214 = vpack.c.b16 %v4647, %v4640
        %v5215 = vpack.c.b16 %v4648, %v4641
        %v5216 = vpack.c.b16 %v4649, %v4642
        %v5217 = vpack.c.b16 %v4650, %v4643
        %v5218 = vpack.c.b16 %v4651, %v4644
        %v5219 = vpack.c.b16 %v4652, %v4645
        %v5220 = vpack.c.b16 %v4653, %v4646
        %v5221 = vpack.c.b16 %v4661, %v4654
        %v5222 = vpack.c.b16 %v4662, %v4655
        %v5223 = vpack.c.b16 %v4663, %v4656
        %v5224 = vpack.c.b16 %v4664, %v4657
        %v5225 = vpack.c.b16 %v4665, %v4658
        %v5226 = vpack.c.b16 %v4666, %v4659
        %v5227 = vpack.c.b16 %v4667, %v4660
        %v5228 = vpack.c.b16 %v4675, %v4668
        %v5229 = vpack.c.b16 %v4676, %v4669
        %v5230 = vpack.c.b16 %v4677, %v4670
        %v5231 = vpack.c.b16 %v4678, %v4671
        %v5232 = vpack.c.b16 %v4679, %v4672
        %v5233 = vpack.c.b16 %v4680, %v4673
        %v5234 = vpack.c.b16 %v4681, %v4674
        %v5235 = vpack.c.b16 %v4689, %v4682
        %v5236 = vpack.c.b16 %v4690, %v4683
        %v5237 = vpack.c.b16 %v4691, %v4684
        %v5238 = vpack.c.b16 %v4692, %v4685
        %v5239 = vpack.c.b16 %v4693, %v4686
        %v5240 = vpack.c.b16 %v4694, %v4687
        %v5241 = vpack.c.b16 %v4695, %v4688
        %v5242 = vpack.c.b16 %v4703, %v4696
        %v5243 = vpack.c.b16 %v4704, %v4697
        %v5244 = vpack.c.b16 %v4705, %v4698
        %v5245 = vpack.c.b16 %v4706, %v4699
        %v5246 = vpack.c.b16 %v4707, %v4700
        %v5247 = vpack.c.b16 %v4708, %v4701
        %v5248 = vpack.c.b16 %v4709, %v4702
        %v5249 = vpack.c.b16 %v4717, %v4710
        %v5250 = vpack.c.b16 %v4718, %v4711
        %v5251 = vpack.c.b16 %v4719, %v4712
        %v5252 = vpack.c.b16 %v4720, %v4713
        %v5253 = vpack.c.b16 %v4721, %v4714
        %v5254 = vpack.c.b16 %v4722, %v4715
        %v5255 = vpack.c.b16 %v4723, %v4716
        %v5256 = vpack.c.b16 %v4731, %v4724
        %v5257 = vpack.c.b16 %v4732, %v4725
        %v5258 = vpack.c.b16 %v4733, %v4726
        %v5259 = vpack.c.b16 %v4734, %v4727
        %v5260 = vpack.c.b16 %v4735, %v4728
        %v5261 = vpack.c.b16 %v4736, %v4729
        %v5262 = vpack.c.b16 %v4737, %v4730
        %v5263 = vpack.c.b16 %v4745, %v4738
        %v5264 = vpack.c.b16 %v4746, %v4739
        %v5265 = vpack.c.b16 %v4747, %v4740
        %v5266 = vpack.c.b16 %v4748, %v4741
        %v5267 = vpack.c.b16 %v4749, %v4742
        %v5268 = vpack.c.b16 %v4750, %v4743
        %v5269 = vpack.c.b16 %v4751, %v4744
        %v5270 = vpack.c.b16 %v4759, %v4752
        %v5271 = vpack.c.b16 %v4760, %v4753
        %v5272 = vpack.c.b16 %v4761, %v4754
        %v5273 = vpack.c.b16 %v4762, %v4755
        %v5274 = vpack.c.b16 %v4763, %v4756
        %v5275 = vpack.c.b16 %v4764, %v4757
        %v5276 = vpack.c.b16 %v4765, %v4758
        %v5277 = vpack.c.b16 %v4773, %v4766
        %v5278 = vpack.c.b16 %v4774, %v4767
        %v5279 = vpack.c.b16 %v4775, %v4768
        %v5280 = vpack.c.b16 %v4776, %v4769
        %v5281 = vpack.c.b16 %v4777, %v4770
        %v5282 = vpack.c.b16 %v4778, %v4771
        %v5283 = vpack.c.b16 %v4779, %v4772
        %v5284 = vpack.c.b16 %v4787, %v4780
        %v5285 = vpack.c.b16 %v4788, %v4781
        %v5286 = vpack.c.b16 %v4789, %v4782
        %v5287 = vpack.c.b16 %v4790, %v4783
        %v5288 = vpack.c.b16 %v4791, %v4784
        %v5289 = vpack.c.b16 %v4792, %v4785
        %v5290 = vpack.c.b16 %v4793, %v4786
        %v5291 = vpack.c.b16 %v4801, %v4794
        %v5292 = vpack.c.b16 %v4802, %v4795
        %v5293 = vpack.c.b16 %v4803, %v4796
        %v5294 = vpack.c.b16 %v4804, %v4797
        %v5295 = vpack.c.b16 %v4805, %v4798
        %v5296 = vpack.c.b16 %v4806, %v4799
        %v5297 = vpack.c.b16 %v4807, %v4800
        %v5298 = vpack.c.b16 %v4815, %v4808
        %v5299 = vpack.c.b16 %v4816, %v4809
        %v5300 = vpack.c.b16 %v4817, %v4810
        %v5301 = vpack.c.b16 %v4818, %v4811
        %v5302 = vpack.c.b16 %v4819, %v4812
        %v5303 = vpack.c.b16 %v4820, %v4813
        %v5304 = vpack.c.b16 %v4821, %v4814
        %v5305 = vpack.c.b16 %v4829, %v4822
        %v5306 = vpack.c.b16 %v4830, %v4823
        %v5307 = vpack.c.b16 %v4831, %v4824
        %v5308 = vpack.c.b16 %v4832, %v4825
        %v5309 = vpack.c.b16 %v4833, %v4826
        %v5310 = vpack.c.b16 %v4834, %v4827
        %v5311 = vpack.c.b16 %v4835, %v4828
        %v5312 = vpack.c.b16 %v4843, %v4836
        %v5313 = vpack.c.b16 %v4844, %v4837
        %v5314 = vpack.c.b16 %v4845, %v4838
        %v5315 = vpack.c.b16 %v4846, %v4839
        %v5316 = vpack.c.b16 %v4847, %v4840
        %v5317 = vpack.c.b16 %v4848, %v4841
        %v5318 = vpack.c.b16 %v4849, %v4842
        %v5319 = vpack.c.b16 %v4857, %v4850
        %v5320 = vpack.c.b16 %v4858, %v4851
        %v5321 = vpack.c.b16 %v4859, %v4852
        %v5322 = vpack.c.b16 %v4860, %v4853
        %v5323 = vpack.c.b16 %v4861, %v4854
        %v5324 = vpack.c.b16 %v4862, %v4855
        %v5325 = vpack.c.b16 %v4863, %v4856
        %v5326 = vpack.c.b16 %v4871, %v4864
        %v5327 = vpack.c.b16 %v4872, %v4865
        %v5328 = vpack.c.b16 %v4873, %v4866
        %v5329 = vpack.c.b16 %v4874, %v4867
        %v5330 = vpack.c.b16 %v4875, %v4868
        %v5331 = vpack.c.b16 %v4876, %v4869
        %v5332 = vpack.c.b16 %v4877, %v4870
        %v5333 = vpack.c.b16 %v4885, %v4878
        %v5334 = vpack.c.b16 %v4886, %v4879
        %v5335 = vpack.c.b16 %v4887, %v4880
        %v5336 = vpack.c.b16 %v4888, %v4881
        %v5337 = vpack.c.b16 %v4889, %v4882
        %v5338 = vpack.c.b16 %v4890, %v4883
        %v5339 = vpack.c.b16 %v4891, %v4884
        %v5340 = vpack.c.b16 %v4899, %v4892
        %v5341 = vpack.c.b16 %v4900, %v4893
        %v5342 = vpack.c.b16 %v4901, %v4894
        %v5343 = vpack.c.b16 %v4902, %v4895
        %v5344 = vpack.c.b16 %v4903, %v4896
        %v5345 = vpack.c.b16 %v4904, %v4897
        %v5346 = vpack.c.b16 %v4905, %v4898
        %v5347 = vpack.c.b16 %v4913, %v4906
        %v5348 = vpack.c.b16 %v4914, %v4907
        %v5349 = vpack.c.b16 %v4915, %v4908
        %v5350 = vpack.c.b16 %v4916, %v4909
        %v5351 = vpack.c.b16 %v4917, %v4910
        %v5352 = vpack.c.b16 %v4918, %v4911
        %v5353 = vpack.c.b16 %v4919, %v4912
        %v5354 = vpack.c.b16 %v4927, %v4920
        %v5355 = vpack.c.b16 %v4928, %v4921
        %v5356 = vpack.c.b16 %v4929, %v4922
        %v5357 = vpack.c.b16 %v4930, %v4923
        %v5358 = vpack.c.b16 %v4931, %v4924
        %v5359 = vpack.c.b16 %v4932, %v4925
        %v5360 = vpack.c.b16 %v4933, %v4926
        %v5361 = vpack.c.b16 %v4941, %v4934
        %v5362 = vpack.c.b16 %v4942, %v4935
        %v5363 = vpack.c.b16 %v4943, %v4936
        %v5364 = vpack.c.b16 %v4944, %v4937
        %v5365 = vpack.c.b16 %v4945, %v4938
        %v5366 = vpack.c.b16 %v4946, %v4939
        %v5367 = vpack.c.b16 %v4947, %v4940
        %v5368 = vpack.c.b16 %v4955, %v4948
        %v5369 = vpack.c.b16 %v4956, %v4949
        %v5370 = vpack.c.b16 %v4957, %v4950
        %v5371 = vpack.c.b16 %v4958, %v4951
        %v5372 = vpack.c.b16 %v4959, %v4952
        %v5373 = vpack.c.b16 %v4960, %v4953
        %v5374 = vpack.c.b16 %v4961, %v4954
        %v5375 = vpack.c.b16 %v4969, %v4962
        %v5376 = vpack.c.b16 %v4970, %v4963
        %v5377 = vpack.c.b16 %v4971, %v4964
        %v5378 = vpack.c.b16 %v4972, %v4965
        %v5379 = vpack.c.b16 %v4973, %v4966
        %v5380 = vpack.c.b16 %v4974, %v4967
        %v5381 = vpack.c.b16 %v4975, %v4968
        %v5382 = vpack.c.b16 %v4983, %v4976
        %v5383 = vpack.c.b16 %v4984, %v4977
        %v5384 = vpack.c.b16 %v4985, %v4978
        %v5385 = vpack.c.b16 %v4986, %v4979
        %v5386 = vpack.c.b16 %v4987, %v4980
        %v5387 = vpack.c.b16 %v4988, %v4981
        %v5388 = vpack.c.b16 %v4989, %v4982
        %v5389 = vpack.c.b16 %v4997, %v4990
        %v5390 = vpack.c.b16 %v4998, %v4991
        %v5391 = vpack.c.b16 %v4999, %v4992
        %v5392 = vpack.c.b16 %v5000, %v4993
        %v5393 = vpack.c.b16 %v5001, %v4994
        %v5394 = vpack.c.b16 %v5002, %v4995
        %v5395 = vpack.c.b16 %v5003, %v4996
        %5788 = vmatprep.subr.bf16.mxu0 %v5054
        %5789 = vmatpush1.bf16.msra.mxu0 %v5053
        %5790 = vmatprep.subr.bf16.mxu0 %v5047
        %5791 = vmatpush1.bf16.msra.mxu0 %v5046
        %5792 = vmatprep.subr.bf16.mxu0 %v5040
        %5793 = vmatpush1.bf16.msra.mxu0 %v5039
        %5794 = vmatprep.subr.bf16.mxu0 %v5033
        %5795 = vmatpush1.bf16.msra.mxu0 %v5032
        %5796 = vmatprep.subr.bf16.mxu0 %v5026
        %5797 = vmatpush1.bf16.msra.mxu0 %v5025
        %5798 = vmatprep.subr.bf16.mxu0 %v5019
        %5799 = vmatpush1.bf16.msra.mxu0 %v5018
        %5800 = vmatprep.subr.bf16.mxu0 %v5012
        %5801 = vmatpush1.bf16.msra.mxu0 %v5011
        %5802 = vmatprep.subr.bf16.mxu0 %v5005
        %5803 = vmatpush1.bf16.msra.mxu0 %v5004
        %5804 = vmatprep.subr.bf16.mxu0 %v5110
        %5805 = vmatpush2.bf16.msra.mxu0 %v5109
        %5806 = vmatprep.subr.bf16.mxu0 %v5103
        %5807 = vmatpush2.bf16.msra.mxu0 %v5102
        %5808 = vmatprep.subr.bf16.mxu0 %v5096
        %5809 = vmatpush2.bf16.msra.mxu0 %v5095
        %5810 = vmatprep.subr.bf16.mxu0 %v5089
        %5811 = vmatpush2.bf16.msra.mxu0 %v5088
        %5812 = vmatprep.subr.bf16.mxu0 %v5082
        %5813 = vmatpush2.bf16.msra.mxu0 %v5081
        %5814 = vmatprep.subr.bf16.mxu0 %v5075
        %5815 = vmatpush2.bf16.msra.mxu0 %v5074
        %5816 = vmatprep.subr.bf16.mxu0 %v5068
        %5817 = vmatpush2.bf16.msra.mxu0 %v5067
        %5818 = vmatprep.subr.bf16.mxu0 %v5061
        %5819 = vmatpush2.bf16.msra.mxu0 %v5060
        %5820 = vmatprep.mubr.bf16.mxu0 %v3281
        %5821 = vmatmul.mubr.bf16.gmra.mxu0 %v3280
        %v5822 = vpop.f32.mrf.mxu0
        %v5823 = vadd.f32 %v3740, %v5822
        %v5824 = vpop.f32.mrf.mxu0
        %v5825 = vadd.f32 %v3744, %v5824
        %v5826 = vpop.f32.mrf.mxu0
        %v5827 = vadd.f32 %v3740, %v5826
        %v5828 = vpop.f32.mrf.mxu0
        %v5829 = vadd.f32 %v3744, %v5828
        %5830 = vdwg.mxu0
        %5831 = vmatprep.subr.bf16.mxu0 %v5166
        %5832 = vmatpush1.bf16.msra.mxu0 %v5165
        %5833 = vmatprep.subr.bf16.mxu0 %v5159
        %5834 = vmatpush1.bf16.msra.mxu0 %v5158
        %5835 = vmatprep.subr.bf16.mxu0 %v5152
        %5836 = vmatpush1.bf16.msra.mxu0 %v5151
        %5837 = vmatprep.subr.bf16.mxu0 %v5145
        %5838 = vmatpush1.bf16.msra.mxu0 %v5144
        %5839 = vmatprep.subr.bf16.mxu0 %v5138
        %5840 = vmatpush1.bf16.msra.mxu0 %v5137
        %5841 = vmatprep.subr.bf16.mxu0 %v5131
        %5842 = vmatpush1.bf16.msra.mxu0 %v5130
        %5843 = vmatprep.subr.bf16.mxu0 %v5124
        %5844 = vmatpush1.bf16.msra.mxu0 %v5123
        %5845 = vmatprep.subr.bf16.mxu0 %v5117
        %5846 = vmatpush1.bf16.msra.mxu0 %v5116
        %5847 = vmatprep.subr.bf16.mxu0 %v5222
        %5848 = vmatpush2.bf16.msra.mxu0 %v5221
        %5849 = vmatprep.subr.bf16.mxu0 %v5215
        %5850 = vmatpush2.bf16.msra.mxu0 %v5214
        %5851 = vmatprep.subr.bf16.mxu0 %v5208
        %5852 = vmatpush2.bf16.msra.mxu0 %v5207
        %5853 = vmatprep.subr.bf16.mxu0 %v5201
        %5854 = vmatpush2.bf16.msra.mxu0 %v5200
        %5855 = vmatprep.subr.bf16.mxu0 %v5194
        %5856 = vmatpush2.bf16.msra.mxu0 %v5193
        %5857 = vmatprep.subr.bf16.mxu0 %v5187
        %5858 = vmatpush2.bf16.msra.mxu0 %v5186
        %5859 = vmatprep.subr.bf16.mxu0 %v5180
        %5860 = vmatpush2.bf16.msra.mxu0 %v5179
        %5861 = vmatprep.subr.bf16.mxu0 %v5173
        %5862 = vmatpush2.bf16.msra.mxu0 %v5172
        %5863 = vmatprep.mubr.bf16.mxu0 %v3283
        %5864 = vmatmul.mubr.bf16.gmra.mxu0 %v3282
        %v5865 = vpop.f32.mrf.mxu0
        %v5866 = vadd.f32 %v5823, %v5865
        %v5867 = vpop.f32.mrf.mxu0
        %v5868 = vadd.f32 %v5825, %v5867
        %v5869 = vpop.f32.mrf.mxu0
        %v5870 = vadd.f32 %v5827, %v5869
        %v5871 = vpop.f32.mrf.mxu0
        %v5872 = vadd.f32 %v5829, %v5871
        %5873 = vdwg.mxu0
        %5874 = vmatprep.subr.bf16.mxu0 %v5278
        %5875 = vmatpush1.bf16.msra.mxu0 %v5277
        %5876 = vmatprep.subr.bf16.mxu0 %v5271
        %5877 = vmatpush1.bf16.msra.mxu0 %v5270
        %5878 = vmatprep.subr.bf16.mxu0 %v5264
        %5879 = vmatpush1.bf16.msra.mxu0 %v5263
        %5880 = vmatprep.subr.bf16.mxu0 %v5257
        %5881 = vmatpush1.bf16.msra.mxu0 %v5256
        %5882 = vmatprep.subr.bf16.mxu0 %v5250
        %5883 = vmatpush1.bf16.msra.mxu0 %v5249
        %5884 = vmatprep.subr.bf16.mxu0 %v5243
        %5885 = vmatpush1.bf16.msra.mxu0 %v5242
        %5886 = vmatprep.subr.bf16.mxu0 %v5236
        %5887 = vmatpush1.bf16.msra.mxu0 %v5235
        %5888 = vmatprep.subr.bf16.mxu0 %v5229
        %5889 = vmatpush1.bf16.msra.mxu0 %v5228
        %5890 = vmatprep.subr.bf16.mxu0 %v5334
        %5891 = vmatpush2.bf16.msra.mxu0 %v5333
        %5892 = vmatprep.subr.bf16.mxu0 %v5327
        %5893 = vmatpush2.bf16.msra.mxu0 %v5326
        %5894 = vmatprep.subr.bf16.mxu0 %v5320
        %5895 = vmatpush2.bf16.msra.mxu0 %v5319
        %5896 = vmatprep.subr.bf16.mxu0 %v5313
        %5897 = vmatpush2.bf16.msra.mxu0 %v5312
        %5898 = vmatprep.subr.bf16.mxu0 %v5306
        %5899 = vmatpush2.bf16.msra.mxu0 %v5305
        %5900 = vmatprep.subr.bf16.mxu0 %v5299
        %5901 = vmatpush2.bf16.msra.mxu0 %v5298
        %5902 = vmatprep.subr.bf16.mxu0 %v5292
        %5903 = vmatpush2.bf16.msra.mxu0 %v5291
        %5904 = vmatprep.subr.bf16.mxu0 %v5285
        %5905 = vmatpush2.bf16.msra.mxu0 %v5284
        %5906 = vmatprep.mubr.bf16.mxu0 %v3285
        %5907 = vmatmul.mubr.bf16.gmra.mxu0 %v3284
        %v5908 = vpop.f32.mrf.mxu0
        %v5909 = vadd.f32 %v5866, %v5908
        %v5910 = vpop.f32.mrf.mxu0
        %v5911 = vadd.f32 %v5868, %v5910
        %v5912 = vpop.f32.mrf.mxu0
        %v5913 = vadd.f32 %v5870, %v5912
        %v5914 = vpop.f32.mrf.mxu0
        %v5915 = vadd.f32 %v5872, %v5914
        %5916 = vdwg.mxu0
        %5917 = vmatprep.subr.bf16.mxu0 %v5390
        %5918 = vmatpush1.bf16.msra.mxu0 %v5389
        %5919 = vmatprep.subr.bf16.mxu0 %v5383
        %5920 = vmatpush1.bf16.msra.mxu0 %v5382
        %5921 = vmatprep.subr.bf16.mxu0 %v5376
        %5922 = vmatpush1.bf16.msra.mxu0 %v5375
        %5923 = vmatprep.subr.bf16.mxu0 %v5369
        %5924 = vmatpush1.bf16.msra.mxu0 %v5368
        %5925 = vmatprep.subr.bf16.mxu0 %v5362
        %5926 = vmatpush1.bf16.msra.mxu0 %v5361
        %5927 = vmatprep.subr.bf16.mxu0 %v5355
        %5928 = vmatpush1.bf16.msra.mxu0 %v5354
        %5929 = vmatprep.subr.bf16.mxu0 %v5348
        %5930 = vmatpush1.bf16.msra.mxu0 %v5347
        %5931 = vmatprep.subr.bf16.mxu0 %v5341
        %5932 = vmatpush1.bf16.msra.mxu0 %v5340
        %5933 = vmatprep.subr.bf16.mxu0 0
        %5934 = vmatpush2.bf16.msra.mxu0 0
        %5935 = vmatprep.subr.bf16.mxu0 0
        %5936 = vmatpush2.bf16.msra.mxu0 0
        %5937 = vmatprep.subr.bf16.mxu0 0
        %5938 = vmatpush2.bf16.msra.mxu0 0
        %5939 = vmatprep.subr.bf16.mxu0 0
        %5940 = vmatpush2.bf16.msra.mxu0 0
        %5941 = vmatprep.subr.bf16.mxu0 0
        %5942 = vmatpush2.bf16.msra.mxu0 0
        %5943 = vmatprep.subr.bf16.mxu0 0
        %5944 = vmatpush2.bf16.msra.mxu0 0
        %5945 = vmatprep.subr.bf16.mxu0 0
        %5946 = vmatpush2.bf16.msra.mxu0 0
        %5947 = vmatprep.subr.bf16.mxu0 0
        %5948 = vmatpush2.bf16.msra.mxu0 0
        %5949 = vmatprep.mubr.bf16.mxu0 0
        %5950 = vmatmul.mubr.bf16.gmra.mxu0 %v3286
        %v5951 = vpop.f32.mrf.mxu0
        %v5952 = vadd.f32 %v5909, %v5951
        %v5953 = vpop.f32.mrf.mxu0
        %v5954 = vadd.f32 %v5911, %v5953
        %v5955 = vpop.f32.mrf.mxu0
        %v5956 = vadd.f32 %v5913, %v5955
        %v5957 = vpop.f32.mrf.mxu0
        %v5958 = vadd.f32 %v5915, %v5957
        %5959 = vdwg.mxu0
        %5960 = vmatprep.subr.bf16.mxu0 %v5056
        %5961 = vmatpush1.bf16.msra.mxu0 %v5055
        %5962 = vmatprep.subr.bf16.mxu0 %v5049
        %5963 = vmatpush1.bf16.msra.mxu0 %v5048
        %5964 = vmatprep.subr.bf16.mxu0 %v5042
        %5965 = vmatpush1.bf16.msra.mxu0 %v5041
        %5966 = vmatprep.subr.bf16.mxu0 %v5035
        %5967 = vmatpush1.bf16.msra.mxu0 %v5034
        %5968 = vmatprep.subr.bf16.mxu0 %v5028
        %5969 = vmatpush1.bf16.msra.mxu0 %v5027
        %5970 = vmatprep.subr.bf16.mxu0 %v5021
        %5971 = vmatpush1.bf16.msra.mxu0 %v5020
        %5972 = vmatprep.subr.bf16.mxu0 %v5014
        %5973 = vmatpush1.bf16.msra.mxu0 %v5013
        %5974 = vmatprep.subr.bf16.mxu0 %v5007
        %5975 = vmatpush1.bf16.msra.mxu0 %v5006
        %5976 = vmatprep.subr.bf16.mxu0 %v5112
        %5977 = vmatpush2.bf16.msra.mxu0 %v5111
        %5978 = vmatprep.subr.bf16.mxu0 %v5105
        %5979 = vmatpush2.bf16.msra.mxu0 %v5104
        %5980 = vmatprep.subr.bf16.mxu0 %v5098
        %5981 = vmatpush2.bf16.msra.mxu0 %v5097
        %5982 = vmatprep.subr.bf16.mxu0 %v5091
        %5983 = vmatpush2.bf16.msra.mxu0 %v5090
        %5984 = vmatprep.subr.bf16.mxu0 %v5084
        %5985 = vmatpush2.bf16.msra.mxu0 %v5083
        %5986 = vmatprep.subr.bf16.mxu0 %v5077
        %5987 = vmatpush2.bf16.msra.mxu0 %v5076
        %5988 = vmatprep.subr.bf16.mxu0 %v5070
        %5989 = vmatpush2.bf16.msra.mxu0 %v5069
        %5990 = vmatprep.subr.bf16.mxu0 %v5063
        %5991 = vmatpush2.bf16.msra.mxu0 %v5062
        %5992 = vmatprep.mubr.bf16.mxu0 %v3281
        %5993 = vmatmul.mubr.bf16.gmra.mxu0 %v3280
        %v5994 = vpop.f32.mrf.mxu0
        %v5995 = vadd.f32 %v3748, %v5994
        %v5996 = vpop.f32.mrf.mxu0
        %v5997 = vadd.f32 %v3752, %v5996
        %v5998 = vpop.f32.mrf.mxu0
        %v5999 = vadd.f32 %v3748, %v5998
        %v6000 = vpop.f32.mrf.mxu0
        %v6001 = vadd.f32 %v3752, %v6000
        %6002 = vdwg.mxu0
        %6003 = vmatprep.subr.bf16.mxu0 %v5168
        %6004 = vmatpush1.bf16.msra.mxu0 %v5167
        %6005 = vmatprep.subr.bf16.mxu0 %v5161
        %6006 = vmatpush1.bf16.msra.mxu0 %v5160
        %6007 = vmatprep.subr.bf16.mxu0 %v5154
        %6008 = vmatpush1.bf16.msra.mxu0 %v5153
        %6009 = vmatprep.subr.bf16.mxu0 %v5147
        %6010 = vmatpush1.bf16.msra.mxu0 %v5146
        %6011 = vmatprep.subr.bf16.mxu0 %v5140
        %6012 = vmatpush1.bf16.msra.mxu0 %v5139
        %6013 = vmatprep.subr.bf16.mxu0 %v5133
        %6014 = vmatpush1.bf16.msra.mxu0 %v5132
        %6015 = vmatprep.subr.bf16.mxu0 %v5126
        %6016 = vmatpush1.bf16.msra.mxu0 %v5125
        %6017 = vmatprep.subr.bf16.mxu0 %v5119
        %6018 = vmatpush1.bf16.msra.mxu0 %v5118
        %6019 = vmatprep.subr.bf16.mxu0 %v5224
        %6020 = vmatpush2.bf16.msra.mxu0 %v5223
        %6021 = vmatprep.subr.bf16.mxu0 %v5217
        %6022 = vmatpush2.bf16.msra.mxu0 %v5216
        %6023 = vmatprep.subr.bf16.mxu0 %v5210
        %6024 = vmatpush2.bf16.msra.mxu0 %v5209
        %6025 = vmatprep.subr.bf16.mxu0 %v5203
        %6026 = vmatpush2.bf16.msra.mxu0 %v5202
        %6027 = vmatprep.subr.bf16.mxu0 %v5196
        %6028 = vmatpush2.bf16.msra.mxu0 %v5195
        %6029 = vmatprep.subr.bf16.mxu0 %v5189
        %6030 = vmatpush2.bf16.msra.mxu0 %v5188
        %6031 = vmatprep.subr.bf16.mxu0 %v5182
        %6032 = vmatpush2.bf16.msra.mxu0 %v5181
        %6033 = vmatprep.subr.bf16.mxu0 %v5175
        %6034 = vmatpush2.bf16.msra.mxu0 %v5174
        %6035 = vmatprep.mubr.bf16.mxu0 %v3283
        %6036 = vmatmul.mubr.bf16.gmra.mxu0 %v3282
        %v6037 = vpop.f32.mrf.mxu0
        %v6038 = vadd.f32 %v5995, %v6037
        %v6039 = vpop.f32.mrf.mxu0
        %v6040 = vadd.f32 %v5997, %v6039
        %v6041 = vpop.f32.mrf.mxu0
        %v6042 = vadd.f32 %v5999, %v6041
        %v6043 = vpop.f32.mrf.mxu0
        %v6044 = vadd.f32 %v6001, %v6043
        %6045 = vdwg.mxu0
        %6046 = vmatprep.subr.bf16.mxu0 %v5280
        %6047 = vmatpush1.bf16.msra.mxu0 %v5279
        %6048 = vmatprep.subr.bf16.mxu0 %v5273
        %6049 = vmatpush1.bf16.msra.mxu0 %v5272
        %6050 = vmatprep.subr.bf16.mxu0 %v5266
        %6051 = vmatpush1.bf16.msra.mxu0 %v5265
        %6052 = vmatprep.subr.bf16.mxu0 %v5259
        %6053 = vmatpush1.bf16.msra.mxu0 %v5258
        %6054 = vmatprep.subr.bf16.mxu0 %v5252
        %6055 = vmatpush1.bf16.msra.mxu0 %v5251
        %6056 = vmatprep.subr.bf16.mxu0 %v5245
        %6057 = vmatpush1.bf16.msra.mxu0 %v5244
        %6058 = vmatprep.subr.bf16.mxu0 %v5238
        %6059 = vmatpush1.bf16.msra.mxu0 %v5237
        %6060 = vmatprep.subr.bf16.mxu0 %v5231
        %6061 = vmatpush1.bf16.msra.mxu0 %v5230
        %6062 = vmatprep.subr.bf16.mxu0 %v5336
        %6063 = vmatpush2.bf16.msra.mxu0 %v5335
        %6064 = vmatprep.subr.bf16.mxu0 %v5329
        %6065 = vmatpush2.bf16.msra.mxu0 %v5328
        %6066 = vmatprep.subr.bf16.mxu0 %v5322
        %6067 = vmatpush2.bf16.msra.mxu0 %v5321
        %6068 = vmatprep.subr.bf16.mxu0 %v5315
        %6069 = vmatpush2.bf16.msra.mxu0 %v5314
        %6070 = vmatprep.subr.bf16.mxu0 %v5308
        %6071 = vmatpush2.bf16.msra.mxu0 %v5307
        %6072 = vmatprep.subr.bf16.mxu0 %v5301
        %6073 = vmatpush2.bf16.msra.mxu0 %v5300
        %6074 = vmatprep.subr.bf16.mxu0 %v5294
        %6075 = vmatpush2.bf16.msra.mxu0 %v5293
        %6076 = vmatprep.subr.bf16.mxu0 %v5287
        %6077 = vmatpush2.bf16.msra.mxu0 %v5286
        %6078 = vmatprep.mubr.bf16.mxu0 %v3285
        %6079 = vmatmul.mubr.bf16.gmra.mxu0 %v3284
        %v6080 = vpop.f32.mrf.mxu0
        %v6081 = vadd.f32 %v6038, %v6080
        %v6082 = vpop.f32.mrf.mxu0
        %v6083 = vadd.f32 %v6040, %v6082
        %v6084 = vpop.f32.mrf.mxu0
        %v6085 = vadd.f32 %v6042, %v6084
        %v6086 = vpop.f32.mrf.mxu0
        %v6087 = vadd.f32 %v6044, %v6086
        %6088 = vdwg.mxu0
        %6089 = vmatprep.subr.bf16.mxu0 %v5392
        %6090 = vmatpush1.bf16.msra.mxu0 %v5391
        %6091 = vmatprep.subr.bf16.mxu0 %v5385
        %6092 = vmatpush1.bf16.msra.mxu0 %v5384
        %6093 = vmatprep.subr.bf16.mxu0 %v5378
        %6094 = vmatpush1.bf16.msra.mxu0 %v5377
        %6095 = vmatprep.subr.bf16.mxu0 %v5371
        %6096 = vmatpush1.bf16.msra.mxu0 %v5370
        %6097 = vmatprep.subr.bf16.mxu0 %v5364
        %6098 = vmatpush1.bf16.msra.mxu0 %v5363
        %6099 = vmatprep.subr.bf16.mxu0 %v5357
        %6100 = vmatpush1.bf16.msra.mxu0 %v5356
        %6101 = vmatprep.subr.bf16.mxu0 %v5350
        %6102 = vmatpush1.bf16.msra.mxu0 %v5349
        %6103 = vmatprep.subr.bf16.mxu0 %v5343
        %6104 = vmatpush1.bf16.msra.mxu0 %v5342
        %6105 = vmatprep.subr.bf16.mxu0 0
        %6106 = vmatpush2.bf16.msra.mxu0 0
        %6107 = vmatprep.subr.bf16.mxu0 0
        %6108 = vmatpush2.bf16.msra.mxu0 0
        %6109 = vmatprep.subr.bf16.mxu0 0
        %6110 = vmatpush2.bf16.msra.mxu0 0
        %6111 = vmatprep.subr.bf16.mxu0 0
        %6112 = vmatpush2.bf16.msra.mxu0 0
        %6113 = vmatprep.subr.bf16.mxu0 0
        %6114 = vmatpush2.bf16.msra.mxu0 0
        %6115 = vmatprep.subr.bf16.mxu0 0
        %6116 = vmatpush2.bf16.msra.mxu0 0
        %6117 = vmatprep.subr.bf16.mxu0 0
        %6118 = vmatpush2.bf16.msra.mxu0 0
        %6119 = vmatprep.subr.bf16.mxu0 0
        %6120 = vmatpush2.bf16.msra.mxu0 0
        %6121 = vmatprep.mubr.bf16.mxu0 0
        %6122 = vmatmul.mubr.bf16.gmra.mxu0 %v3286
        %v6123 = vpop.f32.mrf.mxu0
        %v6124 = vadd.f32 %v6081, %v6123
        %v6125 = vpop.f32.mrf.mxu0
        %v6126 = vadd.f32 %v6083, %v6125
        %v6127 = vpop.f32.mrf.mxu0
        %v6128 = vadd.f32 %v6085, %v6127
        %v6129 = vpop.f32.mrf.mxu0
        %v6130 = vadd.f32 %v6087, %v6129
        %6131 = vdwg.mxu0
        %6132 = vmatprep.subr.bf16.mxu0 %v5058
        %6133 = vmatpush1.bf16.msra.mxu0 %v5057
        %6134 = vmatprep.subr.bf16.mxu0 %v5051
        %6135 = vmatpush1.bf16.msra.mxu0 %v5050
        %6136 = vmatprep.subr.bf16.mxu0 %v5044
        %6137 = vmatpush1.bf16.msra.mxu0 %v5043
        %6138 = vmatprep.subr.bf16.mxu0 %v5037
        %6139 = vmatpush1.bf16.msra.mxu0 %v5036
        %6140 = vmatprep.subr.bf16.mxu0 %v5030
        %6141 = vmatpush1.bf16.msra.mxu0 %v5029
        %6142 = vmatprep.subr.bf16.mxu0 %v5023
        %6143 = vmatpush1.bf16.msra.mxu0 %v5022
        %6144 = vmatprep.subr.bf16.mxu0 %v5016
        %6145 = vmatpush1.bf16.msra.mxu0 %v5015
        %6146 = vmatprep.subr.bf16.mxu0 %v5009
        %6147 = vmatpush1.bf16.msra.mxu0 %v5008
        %6148 = vmatprep.subr.bf16.mxu0 %v5114
        %6149 = vmatpush2.bf16.msra.mxu0 %v5113
        %6150 = vmatprep.subr.bf16.mxu0 %v5107
        %6151 = vmatpush2.bf16.msra.mxu0 %v5106
        %6152 = vmatprep.subr.bf16.mxu0 %v5100
        %6153 = vmatpush2.bf16.msra.mxu0 %v5099
        %6154 = vmatprep.subr.bf16.mxu0 %v5093
        %6155 = vmatpush2.bf16.msra.mxu0 %v5092
        %6156 = vmatprep.subr.bf16.mxu0 %v5086
        %6157 = vmatpush2.bf16.msra.mxu0 %v5085
        %6158 = vmatprep.subr.bf16.mxu0 %v5079
        %6159 = vmatpush2.bf16.msra.mxu0 %v5078
        %6160 = vmatprep.subr.bf16.mxu0 %v5072
        %6161 = vmatpush2.bf16.msra.mxu0 %v5071
        %6162 = vmatprep.subr.bf16.mxu0 %v5065
        %6163 = vmatpush2.bf16.msra.mxu0 %v5064
        %6164 = vmatprep.mubr.bf16.mxu0 %v3281
        %6165 = vmatmul.mubr.bf16.gmra.mxu0 %v3280
        %v6166 = vpop.f32.mrf.mxu0
        %v6167 = vadd.f32 %v3756, %v6166
        %v6168 = vpop.f32.mrf.mxu0
        %v6169 = vadd.f32 %v3760, %v6168
        %v6170 = vpop.f32.mrf.mxu0
        %v6171 = vadd.f32 %v3756, %v6170
        %v6172 = vpop.f32.mrf.mxu0
        %v6173 = vadd.f32 %v3760, %v6172
        %6174 = vdwg.mxu0
        %6175 = vmatprep.subr.bf16.mxu0 %v5170
        %6176 = vmatpush1.bf16.msra.mxu0 %v5169
        %6177 = vmatprep.subr.bf16.mxu0 %v5163
        %6178 = vmatpush1.bf16.msra.mxu0 %v5162
        %6179 = vmatprep.subr.bf16.mxu0 %v5156
        %6180 = vmatpush1.bf16.msra.mxu0 %v5155
        %6181 = vmatprep.subr.bf16.mxu0 %v5149
        %6182 = vmatpush1.bf16.msra.mxu0 %v5148
        %6183 = vmatprep.subr.bf16.mxu0 %v5142
        %6184 = vmatpush1.bf16.msra.mxu0 %v5141
        %6185 = vmatprep.subr.bf16.mxu0 %v5135
        %6186 = vmatpush1.bf16.msra.mxu0 %v5134
        %6187 = vmatprep.subr.bf16.mxu0 %v5128
        %6188 = vmatpush1.bf16.msra.mxu0 %v5127
        %6189 = vmatprep.subr.bf16.mxu0 %v5121
        %6190 = vmatpush1.bf16.msra.mxu0 %v5120
        %6191 = vmatprep.subr.bf16.mxu0 %v5226
        %6192 = vmatpush2.bf16.msra.mxu0 %v5225
        %6193 = vmatprep.subr.bf16.mxu0 %v5219
        %6194 = vmatpush2.bf16.msra.mxu0 %v5218
        %6195 = vmatprep.subr.bf16.mxu0 %v5212
        %6196 = vmatpush2.bf16.msra.mxu0 %v5211
        %6197 = vmatprep.subr.bf16.mxu0 %v5205
        %6198 = vmatpush2.bf16.msra.mxu0 %v5204
        %6199 = vmatprep.subr.bf16.mxu0 %v5198
        %6200 = vmatpush2.bf16.msra.mxu0 %v5197
        %6201 = vmatprep.subr.bf16.mxu0 %v5191
        %6202 = vmatpush2.bf16.msra.mxu0 %v5190
        %6203 = vmatprep.subr.bf16.mxu0 %v5184
        %6204 = vmatpush2.bf16.msra.mxu0 %v5183
        %6205 = vmatprep.subr.bf16.mxu0 %v5177
        %6206 = vmatpush2.bf16.msra.mxu0 %v5176
        %6207 = vmatprep.mubr.bf16.mxu0 %v3283
        %6208 = vmatmul.mubr.bf16.gmra.mxu0 %v3282
        %v6209 = vpop.f32.mrf.mxu0
        %v6210 = vadd.f32 %v6167, %v6209
        %v6211 = vpop.f32.mrf.mxu0
        %v6212 = vadd.f32 %v6169, %v6211
        %v6213 = vpop.f32.mrf.mxu0
        %v6214 = vadd.f32 %v6171, %v6213
        %v6215 = vpop.f32.mrf.mxu0
        %v6216 = vadd.f32 %v6173, %v6215
        %6217 = vdwg.mxu0
        %6218 = vmatprep.subr.bf16.mxu0 %v5282
        %6219 = vmatpush1.bf16.msra.mxu0 %v5281
        %6220 = vmatprep.subr.bf16.mxu0 %v5275
        %6221 = vmatpush1.bf16.msra.mxu0 %v5274
        %6222 = vmatprep.subr.bf16.mxu0 %v5268
        %6223 = vmatpush1.bf16.msra.mxu0 %v5267
        %6224 = vmatprep.subr.bf16.mxu0 %v5261
        %6225 = vmatpush1.bf16.msra.mxu0 %v5260
        %6226 = vmatprep.subr.bf16.mxu0 %v5254
        %6227 = vmatpush1.bf16.msra.mxu0 %v5253
        %6228 = vmatprep.subr.bf16.mxu0 %v5247
        %6229 = vmatpush1.bf16.msra.mxu0 %v5246
        %6230 = vmatprep.subr.bf16.mxu0 %v5240
        %6231 = vmatpush1.bf16.msra.mxu0 %v5239
        %6232 = vmatprep.subr.bf16.mxu0 %v5233
        %6233 = vmatpush1.bf16.msra.mxu0 %v5232
        %6234 = vmatprep.subr.bf16.mxu0 %v5338
        %6235 = vmatpush2.bf16.msra.mxu0 %v5337
        %6236 = vmatprep.subr.bf16.mxu0 %v5331
        %6237 = vmatpush2.bf16.msra.mxu0 %v5330
        %6238 = vmatprep.subr.bf16.mxu0 %v5324
        %6239 = vmatpush2.bf16.msra.mxu0 %v5323
        %6240 = vmatprep.subr.bf16.mxu0 %v5317
        %6241 = vmatpush2.bf16.msra.mxu0 %v5316
        %6242 = vmatprep.subr.bf16.mxu0 %v5310
        %6243 = vmatpush2.bf16.msra.mxu0 %v5309
        %6244 = vmatprep.subr.bf16.mxu0 %v5303
        %6245 = vmatpush2.bf16.msra.mxu0 %v5302
        %6246 = vmatprep.subr.bf16.mxu0 %v5296
        %6247 = vmatpush2.bf16.msra.mxu0 %v5295
        %6248 = vmatprep.subr.bf16.mxu0 %v5289
        %6249 = vmatpush2.bf16.msra.mxu0 %v5288
        %6250 = vmatprep.mubr.bf16.mxu0 %v3285
        %6251 = vmatmul.mubr.bf16.gmra.mxu0 %v3284
        %v6252 = vpop.f32.mrf.mxu0
        %v6253 = vadd.f32 %v6210, %v6252
        %v6254 = vpop.f32.mrf.mxu0
        %v6255 = vadd.f32 %v6212, %v6254
        %v6256 = vpop.f32.mrf.mxu0
        %v6257 = vadd.f32 %v6214, %v6256
        %v6258 = vpop.f32.mrf.mxu0
        %v6259 = vadd.f32 %v6216, %v6258
        %6260 = vdwg.mxu0
        %6261 = vmatprep.subr.bf16.mxu0 %v5394
        %6262 = vmatpush1.bf16.msra.mxu0 %v5393
        %6263 = vmatprep.subr.bf16.mxu0 %v5387
        %6264 = vmatpush1.bf16.msra.mxu0 %v5386
        %6265 = vmatprep.subr.bf16.mxu0 %v5380
        %6266 = vmatpush1.bf16.msra.mxu0 %v5379
        %6267 = vmatprep.subr.bf16.mxu0 %v5373
        %6268 = vmatpush1.bf16.msra.mxu0 %v5372
        %6269 = vmatprep.subr.bf16.mxu0 %v5366
        %6270 = vmatpush1.bf16.msra.mxu0 %v5365
        %6271 = vmatprep.subr.bf16.mxu0 %v5359
        %6272 = vmatpush1.bf16.msra.mxu0 %v5358
        %6273 = vmatprep.subr.bf16.mxu0 %v5352
        %6274 = vmatpush1.bf16.msra.mxu0 %v5351
        %6275 = vmatprep.subr.bf16.mxu0 %v5345
        %6276 = vmatpush1.bf16.msra.mxu0 %v5344
        %6277 = vmatprep.subr.bf16.mxu0 0
        %6278 = vmatpush2.bf16.msra.mxu0 0
        %6279 = vmatprep.subr.bf16.mxu0 0
        %6280 = vmatpush2.bf16.msra.mxu0 0
        %6281 = vmatprep.subr.bf16.mxu0 0
        %6282 = vmatpush2.bf16.msra.mxu0 0
        %6283 = vmatprep.subr.bf16.mxu0 0
        %6284 = vmatpush2.bf16.msra.mxu0 0
        %6285 = vmatprep.subr.bf16.mxu0 0
        %6286 = vmatpush2.bf16.msra.mxu0 0
        %6287 = vmatprep.subr.bf16.mxu0 0
        %6288 = vmatpush2.bf16.msra.mxu0 0
        %6289 = vmatprep.subr.bf16.mxu0 0
        %6290 = vmatpush2.bf16.msra.mxu0 0
        %6291 = vmatprep.subr.bf16.mxu0 0
        %6292 = vmatpush2.bf16.msra.mxu0 0
        %6293 = vmatprep.mubr.bf16.mxu0 0
        %6294 = vmatmul.mubr.bf16.gmra.mxu0 %v3286
        %v6295 = vpop.f32.mrf.mxu0
        %v6296 = vadd.f32 %v6253, %v6295
        %v6297 = vpop.f32.mrf.mxu0
        %v6298 = vadd.f32 %v6255, %v6297
        %v6299 = vpop.f32.mrf.mxu0
        %v6300 = vadd.f32 %v6257, %v6299
        %v6301 = vpop.f32.mrf.mxu0
        %v6302 = vadd.f32 %v6259, %v6301
        %6303 = vdwg.mxu0
        %6304 = vmatprep.subr.bf16.mxu0 0
        %6305 = vmatpush1.bf16.msra.mxu0 %v5059
        %6306 = vmatprep.subr.bf16.mxu0 0
        %6307 = vmatpush1.bf16.msra.mxu0 %v5052
        %6308 = vmatprep.subr.bf16.mxu0 0
        %6309 = vmatpush1.bf16.msra.mxu0 %v5045
        %6310 = vmatprep.subr.bf16.mxu0 0
        %6311 = vmatpush1.bf16.msra.mxu0 %v5038
        %6312 = vmatprep.subr.bf16.mxu0 0
        %6313 = vmatpush1.bf16.msra.mxu0 %v5031
        %6314 = vmatprep.subr.bf16.mxu0 0
        %6315 = vmatpush1.bf16.msra.mxu0 %v5024
        %6316 = vmatprep.subr.bf16.mxu0 0
        %6317 = vmatpush1.bf16.msra.mxu0 %v5017
        %6318 = vmatprep.subr.bf16.mxu0 0
        %6319 = vmatpush1.bf16.msra.mxu0 %v5010
        %6320 = vmatprep.subr.bf16.mxu0 0
        %6321 = vmatpush2.bf16.msra.mxu0 %v5115
        %6322 = vmatprep.subr.bf16.mxu0 0
        %6323 = vmatpush2.bf16.msra.mxu0 %v5108
        %6324 = vmatprep.subr.bf16.mxu0 0
        %6325 = vmatpush2.bf16.msra.mxu0 %v5101
        %6326 = vmatprep.subr.bf16.mxu0 0
        %6327 = vmatpush2.bf16.msra.mxu0 %v5094
        %6328 = vmatprep.subr.bf16.mxu0 0
        %6329 = vmatpush2.bf16.msra.mxu0 %v5087
        %6330 = vmatprep.subr.bf16.mxu0 0
        %6331 = vmatpush2.bf16.msra.mxu0 %v5080
        %6332 = vmatprep.subr.bf16.mxu0 0
        %6333 = vmatpush2.bf16.msra.mxu0 %v5073
        %6334 = vmatprep.subr.bf16.mxu0 0
        %6335 = vmatpush2.bf16.msra.mxu0 %v5066
        %6336 = vmatprep.mubr.bf16.mxu0 %v3281
        %6337 = vmatmul.mubr.bf16.gmra.mxu0 %v3280
        %v6338 = vpop.f32.mrf.mxu0
        %v6339 = vadd.f32 %v3764, %v6338
        %v6340 = vpop.f32.mrf.mxu0
        %v6341 = vpop.f32.mrf.mxu0
        %v6342 = vadd.f32 %v3764, %v6341
        %v6343 = vpop.f32.mrf.mxu0
        %6344 = vdwg.mxu0
        %6345 = vmatprep.subr.bf16.mxu0 0
        %6346 = vmatpush1.bf16.msra.mxu0 %v5171
        %6347 = vmatprep.subr.bf16.mxu0 0
        %6348 = vmatpush1.bf16.msra.mxu0 %v5164
        %6349 = vmatprep.subr.bf16.mxu0 0
        %6350 = vmatpush1.bf16.msra.mxu0 %v5157
        %6351 = vmatprep.subr.bf16.mxu0 0
        %6352 = vmatpush1.bf16.msra.mxu0 %v5150
        %6353 = vmatprep.subr.bf16.mxu0 0
        %6354 = vmatpush1.bf16.msra.mxu0 %v5143
        %6355 = vmatprep.subr.bf16.mxu0 0
        %6356 = vmatpush1.bf16.msra.mxu0 %v5136
        %6357 = vmatprep.subr.bf16.mxu0 0
        %6358 = vmatpush1.bf16.msra.mxu0 %v5129
        %6359 = vmatprep.subr.bf16.mxu0 0
        %6360 = vmatpush1.bf16.msra.mxu0 %v5122
        %6361 = vmatprep.subr.bf16.mxu0 0
        %6362 = vmatpush2.bf16.msra.mxu0 %v5227
        %6363 = vmatprep.subr.bf16.mxu0 0
        %6364 = vmatpush2.bf16.msra.mxu0 %v5220
        %6365 = vmatprep.subr.bf16.mxu0 0
        %6366 = vmatpush2.bf16.msra.mxu0 %v5213
        %6367 = vmatprep.subr.bf16.mxu0 0
        %6368 = vmatpush2.bf16.msra.mxu0 %v5206
        %6369 = vmatprep.subr.bf16.mxu0 0
        %6370 = vmatpush2.bf16.msra.mxu0 %v5199
        %6371 = vmatprep.subr.bf16.mxu0 0
        %6372 = vmatpush2.bf16.msra.mxu0 %v5192
        %6373 = vmatprep.subr.bf16.mxu0 0
        %6374 = vmatpush2.bf16.msra.mxu0 %v5185
        %6375 = vmatprep.subr.bf16.mxu0 0
        %6376 = vmatpush2.bf16.msra.mxu0 %v5178
        %6377 = vmatprep.mubr.bf16.mxu0 %v3283
        %6378 = vmatmul.mubr.bf16.gmra.mxu0 %v3282
        %v6379 = vpop.f32.mrf.mxu0
        %v6380 = vadd.f32 %v6339, %v6379
        %v6381 = vpop.f32.mrf.mxu0
        %v6382 = vpop.f32.mrf.mxu0
        %v6383 = vadd.f32 %v6342, %v6382
        %v6384 = vpop.f32.mrf.mxu0
        %6385 = vdwg.mxu0
        %6386 = vmatprep.subr.bf16.mxu0 0
        %6387 = vmatpush1.bf16.msra.mxu0 %v5283
        %6388 = vmatprep.subr.bf16.mxu0 0
        %6389 = vmatpush1.bf16.msra.mxu0 %v5276
        %6390 = vmatprep.subr.bf16.mxu0 0
        %6391 = vmatpush1.bf16.msra.mxu0 %v5269
        %6392 = vmatprep.subr.bf16.mxu0 0
        %6393 = vmatpush1.bf16.msra.mxu0 %v5262
        %6394 = vmatprep.subr.bf16.mxu0 0
        %6395 = vmatpush1.bf16.msra.mxu0 %v5255
        %6396 = vmatprep.subr.bf16.mxu0 0
        %6397 = vmatpush1.bf16.msra.mxu0 %v5248
        %6398 = vmatprep.subr.bf16.mxu0 0
        %6399 = vmatpush1.bf16.msra.mxu0 %v5241
        %6400 = vmatprep.subr.bf16.mxu0 0
        %6401 = vmatpush1.bf16.msra.mxu0 %v5234
        %6402 = vmatprep.subr.bf16.mxu0 0
        %6403 = vmatpush2.bf16.msra.mxu0 %v5339
        %6404 = vmatprep.subr.bf16.mxu0 0
        %6405 = vmatpush2.bf16.msra.mxu0 %v5332
        %6406 = vmatprep.subr.bf16.mxu0 0
        %6407 = vmatpush2.bf16.msra.mxu0 %v5325
        %6408 = vmatprep.subr.bf16.mxu0 0
        %6409 = vmatpush2.bf16.msra.mxu0 %v5318
        %6410 = vmatprep.subr.bf16.mxu0 0
        %6411 = vmatpush2.bf16.msra.mxu0 %v5311
        %6412 = vmatprep.subr.bf16.mxu0 0
        %6413 = vmatpush2.bf16.msra.mxu0 %v5304
        %6414 = vmatprep.subr.bf16.mxu0 0
        %6415 = vmatpush2.bf16.msra.mxu0 %v5297
        %6416 = vmatprep.subr.bf16.mxu0 0
        %6417 = vmatpush2.bf16.msra.mxu0 %v5290
        %6418 = vmatprep.mubr.bf16.mxu0 %v3285
        %6419 = vmatmul.mubr.bf16.gmra.mxu0 %v3284
        %v6420 = vpop.f32.mrf.mxu0
        %v6421 = vadd.f32 %v6380, %v6420
        %v6422 = vpop.f32.mrf.mxu0
        %v6423 = vpop.f32.mrf.mxu0
        %v6424 = vadd.f32 %v6383, %v6423
        %v6425 = vpop.f32.mrf.mxu0
        %6426 = vdwg.mxu0
        %6427 = vmatprep.subr.bf16.mxu0 0
        %6428 = vmatpush1.bf16.msra.mxu0 %v5395
        %6429 = vmatprep.subr.bf16.mxu0 0
        %6430 = vmatpush1.bf16.msra.mxu0 %v5388
        %6431 = vmatprep.subr.bf16.mxu0 0
        %6432 = vmatpush1.bf16.msra.mxu0 %v5381
        %6433 = vmatprep.subr.bf16.mxu0 0
        %6434 = vmatpush1.bf16.msra.mxu0 %v5374
        %6435 = vmatprep.subr.bf16.mxu0 0
        %6436 = vmatpush1.bf16.msra.mxu0 %v5367
        %6437 = vmatprep.subr.bf16.mxu0 0
        %6438 = vmatpush1.bf16.msra.mxu0 %v5360
        %6439 = vmatprep.subr.bf16.mxu0 0
        %6440 = vmatpush1.bf16.msra.mxu0 %v5353
        %6441 = vmatprep.subr.bf16.mxu0 0
        %6442 = vmatpush1.bf16.msra.mxu0 %v5346
        %6443 = vmatprep.subr.bf16.mxu0 0
        %6444 = vmatpush2.bf16.msra.mxu0 0
        %6445 = vmatprep.subr.bf16.mxu0 0
        %6446 = vmatpush2.bf16.msra.mxu0 0
        %6447 = vmatprep.subr.bf16.mxu0 0
        %6448 = vmatpush2.bf16.msra.mxu0 0
        %6449 = vmatprep.subr.bf16.mxu0 0
        %6450 = vmatpush2.bf16.msra.mxu0 0
        %6451 = vmatprep.subr.bf16.mxu0 0
        %6452 = vmatpush2.bf16.msra.mxu0 0
        %6453 = vmatprep.subr.bf16.mxu0 0
        %6454 = vmatpush2.bf16.msra.mxu0 0
        %6455 = vmatprep.subr.bf16.mxu0 0
        %6456 = vmatpush2.bf16.msra.mxu0 0
        %6457 = vmatprep.subr.bf16.mxu0 0
        %6458 = vmatpush2.bf16.msra.mxu0 0
        %6459 = vmatprep.mubr.bf16.mxu0 0
        %6460 = vmatmul.mubr.bf16.gmra.mxu0 %v3286
        %v6461 = vpop.f32.mrf.mxu0
        %v6462 = vadd.f32 %v6421, %v6461
        %v6463 = vpop.f32.mrf.mxu0
        %v6464 = vpop.f32.mrf.mxu0
        %v6465 = vadd.f32 %v6424, %v6464
        %v6466 = vpop.f32.mrf.mxu0
        %6467 = vdwg.mxu0
        %v6468 = vmax.f32 %v5952, 0.0
        %v6469 = vmax.f32 %v5954, 0.0
        %v6470 = vmax.f32 %v6124, 0.0
        %v6471 = vmax.f32 %v6126, 0.0
        %v6472 = vmax.f32 %v6296, 0.0
        %v6473 = vmax.f32 %v6298, 0.0
        %v6474 = vmax.f32 %v6462, 0.0
        %v6475 = vmax.f32 %v5956, 0.0
        %v6476 = vmax.f32 %v5958, 0.0
        %v6477 = vmax.f32 %v6128, 0.0
        %v6478 = vmax.f32 %v6130, 0.0
        %v6479 = vmax.f32 %v6300, 0.0
        %v6480 = vmax.f32 %v6302, 0.0
        %v6481 = vmax.f32 %v6465, 0.0
        %v6482 = vpack.c.bf16 %v6475, %v6468
        %v6483 = vpack.c.bf16 %v6476, %v6469
        %v6484 = vpack.c.bf16 %v6477, %v6470
        %v6485 = vpack.c.bf16 %v6478, %v6471
        %v6486 = vpack.c.bf16 %v6479, %v6472
        %v6487 = vpack.c.bf16 %v6480, %v6473
        %v6488 = vpack.c.bf16 %v6481, %v6474
        %v6489 = vld [vmem:[#allocation9] sm:$0xf]
        %v6490 = vld [vmem:[#allocation9 + $0x4] sm:$0xf]
        %v6491 = vld [vmem:[#allocation9 + $0x8] sm:$0xf]
        %v6492 = vld [vmem:[#allocation9 + $0xc] sm:$0xf]
        %v6493 = vld [vmem:[#allocation9 + $0x10] sm:$0xf]
        %v6494 = vld [vmem:[#allocation9 + $0x14] sm:$0xf]
        %v6495 = vld [vmem:[#allocation9 + $0x18] sm:$0xf]
        %v6496 = vld [vmem:[#allocation9 + $0x1c] sm:$0xf]
        %v6497 = vld [vmem:[#allocation9 + $0x20] sm:$0xf]
        %v6498 = vld [vmem:[#allocation9 + $0x24] sm:$0xf]
        %v6499 = vld [vmem:[#allocation9 + $0x28] sm:$0xf]
        %v6500 = vld [vmem:[#allocation9 + $0x2c] sm:$0xf]
        %v6501 = vld [vmem:[#allocation9 + $0x30] sm:$0xf]
        %v6502 = vld [vmem:[#allocation9 + $0x34] sm:$0xf]
        %v6503 = vld [vmem:[#allocation9 + $0x38] sm:$0xf]
        %v6504 = vld [vmem:[#allocation9 + $0x3c] sm:$0xf]
        %v6505 = vld [vmem:[#allocation9 + $0x40] sm:$0xf]
        %v6506 = vld [vmem:[#allocation9 + $0x44] sm:$0xf]
        %v6507 = vld [vmem:[#allocation9 + $0x48] sm:$0xf]
        %v6508 = vld [vmem:[#allocation9 + $0x4c] sm:$0xf]
        %v6509 = vld [vmem:[#allocation9 + $0x50] sm:$0xf]
        %v6510 = vld [vmem:[#allocation9 + $0x54] sm:$0xf]
        %v6511 = vld [vmem:[#allocation9 + $0x58] sm:$0xf]
        %v6512 = vld [vmem:[#allocation9 + $0x5c] sm:$0xf]
        %v6513 = vld [vmem:[#allocation9 + $0x60] sm:$0xf]
        %v6514 = vld [vmem:[#allocation9 + $0x64] sm:$0xf]
        %v6515 = vld [vmem:[#allocation9 + $0x68] sm:$0xf]
        %v6516 = vld [vmem:[#allocation9 + $0x6c] sm:$0xf]
        %v6517 = vld [vmem:[#allocation9 + $0x70] sm:$0xf]
        %v6518 = vld [vmem:[#allocation9 + $0x74] sm:$0xf]
        %v6519 = vld [vmem:[#allocation9 + $0x78] sm:$0xf]
        %v6520 = vld [vmem:[#allocation9 + $0x7c] sm:$0xf]
        %v6521 = vld [vmem:[#allocation9 + $0x80] sm:$0xf]
        %v6522 = vld [vmem:[#allocation9 + $0x84] sm:$0xf]
        %v6523 = vld [vmem:[#allocation9 + $0x88] sm:$0xf]
        %v6524 = vld [vmem:[#allocation9 + $0x8c] sm:$0xf]
        %v6525 = vld [vmem:[#allocation9 + $0x90] sm:$0xf]
        %v6526 = vld [vmem:[#allocation9 + $0x94] sm:$0xf]
        %v6527 = vld [vmem:[#allocation9 + $0x98] sm:$0xf]
        %v6528 = vld [vmem:[#allocation9 + $0x9c] sm:$0xf]
        %v6529 = vld [vmem:[#allocation9 + $0xa0] sm:$0xf]
        %v6530 = vld [vmem:[#allocation9 + $0xa4] sm:$0xf]
        %v6531 = vld [vmem:[#allocation9 + $0xa8] sm:$0xf]
        %v6532 = vld [vmem:[#allocation9 + $0xac] sm:$0xf]
        %v6533 = vld [vmem:[#allocation9 + $0xb0] sm:$0xf]
        %v6534 = vld [vmem:[#allocation9 + $0xb4] sm:$0xf]
        %v6535 = vld [vmem:[#allocation9 + $0xb8] sm:$0xf]
        %v6536 = vld [vmem:[#allocation9 + $0xbc] sm:$0xf]
        %v6537 = vld [vmem:[#allocation9 + $0xc0] sm:$0xf]
        %v6538 = vld [vmem:[#allocation9 + $0xc4] sm:$0xf]
        %v6539 = vld [vmem:[#allocation9 + $0xc8] sm:$0xf]
        %v6540 = vld [vmem:[#allocation9 + $0xcc] sm:$0xf]
        %v6541 = vld [vmem:[#allocation9 + $0xd0] sm:$0xf]
        %v6542 = vld [vmem:[#allocation9 + $0xd4] sm:$0xf]
        %v6543 = vld [vmem:[#allocation9 + $0xd8] sm:$0xf]
        %v6544 = vld [vmem:[#allocation9 + $0xdc] sm:$0xf]
        %v6545 = vld [vmem:[#allocation9 + $0xe0] sm:$0xf]
        %v6546 = vld [vmem:[#allocation9 + $0xe4] sm:$0xf]
        %v6547 = vld [vmem:[#allocation9 + $0xe8] sm:$0xf]
        %v6548 = vld [vmem:[#allocation9 + $0xec] sm:$0xf]
        %v6549 = vld [vmem:[#allocation9 + $0xf0] sm:$0xf]
        %v6550 = vld [vmem:[#allocation9 + $0xf4] sm:$0xf]
        %v6551 = vld [vmem:[#allocation9 + $0xf8] sm:$0xf]
        %v6552 = vld [vmem:[#allocation9 + $0xfc] sm:$0xf]
        %v6553 = vld [vmem:[#allocation9 + $0x100] sm:$0xf]
        %v6554 = vld [vmem:[#allocation9 + $0x104] sm:$0xf]
        %v6555 = vld [vmem:[#allocation9 + $0x108] sm:$0xf]
        %v6556 = vld [vmem:[#allocation9 + $0x10c] sm:$0xf]
        %v6557 = vld [vmem:[#allocation9 + $0x110] sm:$0xf]
        %v6558 = vld [vmem:[#allocation9 + $0x114] sm:$0xf]
        %v6559 = vld [vmem:[#allocation9 + $0x118] sm:$0xf]
        %v6560 = vld [vmem:[#allocation9 + $0x11c] sm:$0xf]
        %v6561 = vld [vmem:[#allocation9 + $0x120] sm:$0xf]
        %v6562 = vld [vmem:[#allocation9 + $0x124] sm:$0xf]
        %v6563 = vld [vmem:[#allocation9 + $0x128] sm:$0xf]
        %v6564 = vld [vmem:[#allocation9 + $0x12c] sm:$0xf]
        %v6565 = vld [vmem:[#allocation9 + $0x130] sm:$0xf]
        %v6566 = vld [vmem:[#allocation9 + $0x134] sm:$0xf]
        %v6567 = vld [vmem:[#allocation9 + $0x138] sm:$0xf]
        %v6568 = vld [vmem:[#allocation9 + $0x13c] sm:$0xf]
        %v6569 = vld [vmem:[#allocation9 + $0x140] sm:$0xf]
        %v6570 = vld [vmem:[#allocation9 + $0x144] sm:$0xf]
        %v6571 = vld [vmem:[#allocation9 + $0x148] sm:$0xf]
        %v6572 = vld [vmem:[#allocation9 + $0x14c] sm:$0xf]
        %v6573 = vld [vmem:[#allocation9 + $0x150] sm:$0xf]
        %v6574 = vld [vmem:[#allocation9 + $0x154] sm:$0xf]
        %v6575 = vld [vmem:[#allocation9 + $0x158] sm:$0xf]
        %v6576 = vld [vmem:[#allocation9 + $0x15c] sm:$0xf]
        %v6577 = vld [vmem:[#allocation9 + $0x160] sm:$0xf]
        %v6578 = vld [vmem:[#allocation9 + $0x164] sm:$0xf]
        %v6579 = vld [vmem:[#allocation9 + $0x168] sm:$0xf]
        %v6580 = vld [vmem:[#allocation9 + $0x16c] sm:$0xf]
        %v6581 = vld [vmem:[#allocation9 + $0x170] sm:$0xf]
        %v6582 = vld [vmem:[#allocation9 + $0x174] sm:$0xf]
        %v6583 = vld [vmem:[#allocation9 + $0x178] sm:$0xf]
        %v6584 = vld [vmem:[#allocation9 + $0x17c] sm:$0xf]
        %v6585 = vld [vmem:[#allocation9 + $0x180] sm:$0xf]
        %v6586 = vld [vmem:[#allocation9 + $0x184] sm:$0xf]
        %v6587 = vld [vmem:[#allocation9 + $0x188] sm:$0xf]
        %v6588 = vld [vmem:[#allocation9 + $0x18c] sm:$0xf]
        %v6589 = vld [vmem:[#allocation9 + $0x190] sm:$0xf]
        %v6590 = vld [vmem:[#allocation9 + $0x194] sm:$0xf]
        %v6591 = vld [vmem:[#allocation9 + $0x198] sm:$0xf]
        %v6592 = vld [vmem:[#allocation9 + $0x19c] sm:$0xf]
        %v6593 = vld [vmem:[#allocation9 + $0x1a0] sm:$0xf]
        %v6594 = vld [vmem:[#allocation9 + $0x1a4] sm:$0xf]
        %v6595 = vld [vmem:[#allocation9 + $0x1a8] sm:$0xf]
        %v6596 = vld [vmem:[#allocation9 + $0x1ac] sm:$0xf]
        %v6597 = vld [vmem:[#allocation9 + $0x1b0] sm:$0xf]
        %v6598 = vld [vmem:[#allocation9 + $0x1b4] sm:$0xf]
        %v6599 = vld [vmem:[#allocation9 + $0x1b8] sm:$0xf]
        %v6600 = vld [vmem:[#allocation9 + $0x1bc] sm:$0xf]
        %v6601 = vld [vmem:[#allocation10] sm:$0x1]
        %v6603 = vlaneseq
        %v6604 = vshrl.u32 %v6603, 7
        %v6605 = vsub.s32 0, %v6604
        %v6606 = vrot.slane %v6601, %v6605
        %v6720 = vunpack.c.l.b16 %v6489
        %v6721 = vunpack.c.l.b16 %v6490
        %v6722 = vunpack.c.l.b16 %v6491
        %v6723 = vunpack.c.l.b16 %v6492
        %v6724 = vunpack.c.l.b16 %v6493
        %v6725 = vunpack.c.l.b16 %v6494
        %v6726 = vunpack.c.l.b16 %v6495
        %v6727 = vunpack.c.l.b16 %v6496
        %v6728 = vunpack.c.l.b16 %v6497
        %v6729 = vunpack.c.l.b16 %v6498
        %v6730 = vunpack.c.l.b16 %v6499
        %v6731 = vunpack.c.l.b16 %v6500
        %v6732 = vunpack.c.l.b16 %v6501
        %v6733 = vunpack.c.l.b16 %v6502
        %v6734 = vunpack.c.l.b16 %v6503
        %v6735 = vunpack.c.l.b16 %v6504
        %v6736 = vunpack.c.l.b16 %v6505
        %v6737 = vunpack.c.l.b16 %v6506
        %v6738 = vunpack.c.l.b16 %v6507
        %v6739 = vunpack.c.l.b16 %v6508
        %v6740 = vunpack.c.l.b16 %v6509
        %v6741 = vunpack.c.l.b16 %v6510
        %v6742 = vunpack.c.l.b16 %v6511
        %v6743 = vunpack.c.l.b16 %v6512
        %v6744 = vunpack.c.l.b16 %v6513
        %v6745 = vunpack.c.l.b16 %v6514
        %v6746 = vunpack.c.l.b16 %v6515
        %v6747 = vunpack.c.l.b16 %v6516
        %v6748 = vunpack.c.l.b16 %v6517
        %v6749 = vunpack.c.l.b16 %v6518
        %v6750 = vunpack.c.l.b16 %v6519
        %v6751 = vunpack.c.l.b16 %v6520
        %v6752 = vunpack.c.l.b16 %v6521
        %v6753 = vunpack.c.l.b16 %v6522
        %v6754 = vunpack.c.l.b16 %v6523
        %v6755 = vunpack.c.l.b16 %v6524
        %v6756 = vunpack.c.l.b16 %v6525
        %v6757 = vunpack.c.l.b16 %v6526
        %v6758 = vunpack.c.l.b16 %v6527
        %v6759 = vunpack.c.l.b16 %v6528
        %v6760 = vunpack.c.l.b16 %v6529
        %v6761 = vunpack.c.l.b16 %v6530
        %v6762 = vunpack.c.l.b16 %v6531
        %v6763 = vunpack.c.l.b16 %v6532
        %v6764 = vunpack.c.l.b16 %v6533
        %v6765 = vunpack.c.l.b16 %v6534
        %v6766 = vunpack.c.l.b16 %v6535
        %v6767 = vunpack.c.l.b16 %v6536
        %v6768 = vunpack.c.l.b16 %v6537
        %v6769 = vunpack.c.l.b16 %v6538
        %v6770 = vunpack.c.l.b16 %v6539
        %v6771 = vunpack.c.l.b16 %v6540
        %v6772 = vunpack.c.l.b16 %v6541
        %v6773 = vunpack.c.l.b16 %v6542
        %v6774 = vunpack.c.l.b16 %v6543
        %v6775 = vunpack.c.l.b16 %v6544
        %v6776 = vunpack.c.l.b16 %v6545
        %v6777 = vunpack.c.l.b16 %v6546
        %v6778 = vunpack.c.l.b16 %v6547
        %v6779 = vunpack.c.l.b16 %v6548
        %v6780 = vunpack.c.l.b16 %v6549
        %v6781 = vunpack.c.l.b16 %v6550
        %v6782 = vunpack.c.l.b16 %v6551
        %v6783 = vunpack.c.l.b16 %v6552
        %v6784 = vunpack.c.l.b16 %v6553
        %v6785 = vunpack.c.l.b16 %v6554
        %v6786 = vunpack.c.l.b16 %v6555
        %v6787 = vunpack.c.l.b16 %v6556
        %v6788 = vunpack.c.l.b16 %v6557
        %v6789 = vunpack.c.l.b16 %v6558
        %v6790 = vunpack.c.l.b16 %v6559
        %v6791 = vunpack.c.l.b16 %v6560
        %v6792 = vunpack.c.l.b16 %v6561
        %v6793 = vunpack.c.l.b16 %v6562
        %v6794 = vunpack.c.l.b16 %v6563
        %v6795 = vunpack.c.l.b16 %v6564
        %v6796 = vunpack.c.l.b16 %v6565
        %v6797 = vunpack.c.l.b16 %v6566
        %v6798 = vunpack.c.l.b16 %v6567
        %v6799 = vunpack.c.l.b16 %v6568
        %v6800 = vunpack.c.l.b16 %v6569
        %v6801 = vunpack.c.l.b16 %v6570
        %v6802 = vunpack.c.l.b16 %v6571
        %v6803 = vunpack.c.l.b16 %v6572
        %v6804 = vunpack.c.l.b16 %v6573
        %v6805 = vunpack.c.l.b16 %v6574
        %v6806 = vunpack.c.l.b16 %v6575
        %v6807 = vunpack.c.l.b16 %v6576
        %v6808 = vunpack.c.l.b16 %v6577
        %v6809 = vunpack.c.l.b16 %v6578
        %v6810 = vunpack.c.l.b16 %v6579
        %v6811 = vunpack.c.l.b16 %v6580
        %v6812 = vunpack.c.l.b16 %v6581
        %v6813 = vunpack.c.l.b16 %v6582
        %v6814 = vunpack.c.l.b16 %v6583
        %v6815 = vunpack.c.l.b16 %v6584
        %v6816 = vunpack.c.l.b16 %v6585
        %v6817 = vunpack.c.l.b16 %v6586
        %v6818 = vunpack.c.l.b16 %v6587
        %v6819 = vunpack.c.l.b16 %v6588
        %v6820 = vunpack.c.l.b16 %v6589
        %v6821 = vunpack.c.l.b16 %v6590
        %v6822 = vunpack.c.l.b16 %v6591
        %v6823 = vunpack.c.l.b16 %v6592
        %v6824 = vunpack.c.l.b16 %v6593
        %v6825 = vunpack.c.l.b16 %v6594
        %v6826 = vunpack.c.l.b16 %v6595
        %v6827 = vunpack.c.l.b16 %v6596
        %v6828 = vunpack.c.l.b16 %v6597
        %v6829 = vunpack.c.l.b16 %v6598
        %v6830 = vunpack.c.l.b16 %v6599
        %v6831 = vunpack.c.l.b16 %v6600
        %v6832 = vpack.c.b16 %v6721, %v6720
        %v6833 = vpack.c.b16 %v6723, %v6722
        %v6834 = vpack.c.b16 %v6725, %v6724
        %v6835 = vpack.c.b16 %v6727, %v6726
        %v6836 = vpack.c.b16 %v6729, %v6728
        %v6837 = vpack.c.b16 %v6731, %v6730
        %v6838 = vpack.c.b16 %v6733, %v6732
        %v6839 = vpack.c.b16 %v6735, %v6734
        %v6840 = vpack.c.b16 %v6737, %v6736
        %v6841 = vpack.c.b16 %v6739, %v6738
        %v6842 = vpack.c.b16 %v6741, %v6740
        %v6843 = vpack.c.b16 %v6743, %v6742
        %v6844 = vpack.c.b16 %v6745, %v6744
        %v6845 = vpack.c.b16 %v6747, %v6746
        %v6846 = vpack.c.b16 %v6749, %v6748
        %v6847 = vpack.c.b16 %v6751, %v6750
        %v6848 = vpack.c.b16 %v6753, %v6752
        %v6849 = vpack.c.b16 %v6755, %v6754
        %v6850 = vpack.c.b16 %v6757, %v6756
        %v6851 = vpack.c.b16 %v6759, %v6758
        %v6852 = vpack.c.b16 %v6761, %v6760
        %v6853 = vpack.c.b16 %v6763, %v6762
        %v6854 = vpack.c.b16 %v6765, %v6764
        %v6855 = vpack.c.b16 %v6767, %v6766
        %v6856 = vpack.c.b16 %v6769, %v6768
        %v6857 = vpack.c.b16 %v6771, %v6770
        %v6858 = vpack.c.b16 %v6773, %v6772
        %v6859 = vpack.c.b16 %v6775, %v6774
        %v6860 = vpack.c.b16 %v6777, %v6776
        %v6861 = vpack.c.b16 %v6779, %v6778
        %v6862 = vpack.c.b16 %v6781, %v6780
        %v6863 = vpack.c.b16 %v6783, %v6782
        %v6864 = vpack.c.b16 %v6785, %v6784
        %v6865 = vpack.c.b16 %v6787, %v6786
        %v6866 = vpack.c.b16 %v6789, %v6788
        %v6867 = vpack.c.b16 %v6791, %v6790
        %v6868 = vpack.c.b16 %v6793, %v6792
        %v6869 = vpack.c.b16 %v6795, %v6794
        %v6870 = vpack.c.b16 %v6797, %v6796
        %v6871 = vpack.c.b16 %v6799, %v6798
        %v6872 = vpack.c.b16 %v6801, %v6800
        %v6873 = vpack.c.b16 %v6803, %v6802
        %v6874 = vpack.c.b16 %v6805, %v6804
        %v6875 = vpack.c.b16 %v6807, %v6806
        %v6876 = vpack.c.b16 %v6809, %v6808
        %v6877 = vpack.c.b16 %v6811, %v6810
        %v6878 = vpack.c.b16 %v6813, %v6812
        %v6879 = vpack.c.b16 %v6815, %v6814
        %v6880 = vpack.c.b16 %v6817, %v6816
        %v6881 = vpack.c.b16 %v6819, %v6818
        %v6882 = vpack.c.b16 %v6821, %v6820
        %v6883 = vpack.c.b16 %v6823, %v6822
        %v6884 = vpack.c.b16 %v6825, %v6824
        %v6885 = vpack.c.b16 %v6827, %v6826
        %v6886 = vpack.c.b16 %v6829, %v6828
        %v6887 = vpack.c.b16 %v6831, %v6830
        %6944 = vmatprep.subr.bf16.mxu0 0
        %6945 = vmatpush1.bf16.msra.mxu0 %v6839
        %6946 = vmatprep.subr.bf16.mxu0 0
        %6947 = vmatpush1.bf16.msra.mxu0 %v6838
        %6948 = vmatprep.subr.bf16.mxu0 0
        %6949 = vmatpush1.bf16.msra.mxu0 %v6837
        %6950 = vmatprep.subr.bf16.mxu0 0
        %6951 = vmatpush1.bf16.msra.mxu0 %v6836
        %6952 = vmatprep.subr.bf16.mxu0 0
        %6953 = vmatpush1.bf16.msra.mxu0 %v6835
        %6954 = vmatprep.subr.bf16.mxu0 0
        %6955 = vmatpush1.bf16.msra.mxu0 %v6834
        %6956 = vmatprep.subr.bf16.mxu0 0
        %6957 = vmatpush1.bf16.msra.mxu0 %v6833
        %6958 = vmatprep.subr.bf16.mxu0 0
        %6959 = vmatpush1.bf16.msra.mxu0 %v6832
        %6960 = vmatprep.subr.bf16.mxu0 0
        %6961 = vmatpush2.bf16.msra.mxu0 %v6847
        %6962 = vmatprep.subr.bf16.mxu0 0
        %6963 = vmatpush2.bf16.msra.mxu0 %v6846
        %6964 = vmatprep.subr.bf16.mxu0 0
        %6965 = vmatpush2.bf16.msra.mxu0 %v6845
        %6966 = vmatprep.subr.bf16.mxu0 0
        %6967 = vmatpush2.bf16.msra.mxu0 %v6844
        %6968 = vmatprep.subr.bf16.mxu0 0
        %6969 = vmatpush2.bf16.msra.mxu0 %v6843
        %6970 = vmatprep.subr.bf16.mxu0 0
        %6971 = vmatpush2.bf16.msra.mxu0 %v6842
        %6972 = vmatprep.subr.bf16.mxu0 0
        %6973 = vmatpush2.bf16.msra.mxu0 %v6841
        %6974 = vmatprep.subr.bf16.mxu0 0
        %6975 = vmatpush2.bf16.msra.mxu0 %v6840
        %6976 = vmatprep.mubr.bf16.mxu0 %v6483
        %6977 = vmatmul.mubr.bf16.gmra.mxu0 %v6482
        %v6978 = vpop.f32.mrf.mxu0
        %v6979 = vadd.f32 %v6606, %v6978
        %v6980 = vpop.f32.mrf.mxu0
        %v6981 = vpop.f32.mrf.mxu0
        %v6982 = vadd.f32 %v6606, %v6981
        %v6983 = vpop.f32.mrf.mxu0
        %6984 = vdwg.mxu0
        %6985 = vmatprep.subr.bf16.mxu0 0
        %6986 = vmatpush1.bf16.msra.mxu0 %v6855
        %6987 = vmatprep.subr.bf16.mxu0 0
        %6988 = vmatpush1.bf16.msra.mxu0 %v6854
        %6989 = vmatprep.subr.bf16.mxu0 0
        %6990 = vmatpush1.bf16.msra.mxu0 %v6853
        %6991 = vmatprep.subr.bf16.mxu0 0
        %6992 = vmatpush1.bf16.msra.mxu0 %v6852
        %6993 = vmatprep.subr.bf16.mxu0 0
        %6994 = vmatpush1.bf16.msra.mxu0 %v6851
        %6995 = vmatprep.subr.bf16.mxu0 0
        %6996 = vmatpush1.bf16.msra.mxu0 %v6850
        %6997 = vmatprep.subr.bf16.mxu0 0
        %6998 = vmatpush1.bf16.msra.mxu0 %v6849
        %6999 = vmatprep.subr.bf16.mxu0 0
        %7000 = vmatpush1.bf16.msra.mxu0 %v6848
        %7001 = vmatprep.subr.bf16.mxu0 0
        %7002 = vmatpush2.bf16.msra.mxu0 %v6863
        %7003 = vmatprep.subr.bf16.mxu0 0
        %7004 = vmatpush2.bf16.msra.mxu0 %v6862
        %7005 = vmatprep.subr.bf16.mxu0 0
        %7006 = vmatpush2.bf16.msra.mxu0 %v6861
        %7007 = vmatprep.subr.bf16.mxu0 0
        %7008 = vmatpush2.bf16.msra.mxu0 %v6860
        %7009 = vmatprep.subr.bf16.mxu0 0
        %7010 = vmatpush2.bf16.msra.mxu0 %v6859
        %7011 = vmatprep.subr.bf16.mxu0 0
        %7012 = vmatpush2.bf16.msra.mxu0 %v6858
        %7013 = vmatprep.subr.bf16.mxu0 0
        %7014 = vmatpush2.bf16.msra.mxu0 %v6857
        %7015 = vmatprep.subr.bf16.mxu0 0
        %7016 = vmatpush2.bf16.msra.mxu0 %v6856
        %7017 = vmatprep.mubr.bf16.mxu0 %v6485
        %7018 = vmatmul.mubr.bf16.gmra.mxu0 %v6484
        %v7019 = vpop.f32.mrf.mxu0
        %v7020 = vadd.f32 %v6979, %v7019
        %v7021 = vpop.f32.mrf.mxu0
        %v7022 = vpop.f32.mrf.mxu0
        %v7023 = vadd.f32 %v6982, %v7022
        %v7024 = vpop.f32.mrf.mxu0
        %7025 = vdwg.mxu0
        %7026 = vmatprep.subr.bf16.mxu0 0
        %7027 = vmatpush1.bf16.msra.mxu0 %v6871
        %7028 = vmatprep.subr.bf16.mxu0 0
        %7029 = vmatpush1.bf16.msra.mxu0 %v6870
        %7030 = vmatprep.subr.bf16.mxu0 0
        %7031 = vmatpush1.bf16.msra.mxu0 %v6869
        %7032 = vmatprep.subr.bf16.mxu0 0
        %7033 = vmatpush1.bf16.msra.mxu0 %v6868
        %7034 = vmatprep.subr.bf16.mxu0 0
        %7035 = vmatpush1.bf16.msra.mxu0 %v6867
        %7036 = vmatprep.subr.bf16.mxu0 0
        %7037 = vmatpush1.bf16.msra.mxu0 %v6866
        %7038 = vmatprep.subr.bf16.mxu0 0
        %7039 = vmatpush1.bf16.msra.mxu0 %v6865
        %7040 = vmatprep.subr.bf16.mxu0 0
        %7041 = vmatpush1.bf16.msra.mxu0 %v6864
        %7042 = vmatprep.subr.bf16.mxu0 0
        %7043 = vmatpush2.bf16.msra.mxu0 %v6879
        %7044 = vmatprep.subr.bf16.mxu0 0
        %7045 = vmatpush2.bf16.msra.mxu0 %v6878
        %7046 = vmatprep.subr.bf16.mxu0 0
        %7047 = vmatpush2.bf16.msra.mxu0 %v6877
        %7048 = vmatprep.subr.bf16.mxu0 0
        %7049 = vmatpush2.bf16.msra.mxu0 %v6876
        %7050 = vmatprep.subr.bf16.mxu0 0
        %7051 = vmatpush2.bf16.msra.mxu0 %v6875
        %7052 = vmatprep.subr.bf16.mxu0 0
        %7053 = vmatpush2.bf16.msra.mxu0 %v6874
        %7054 = vmatprep.subr.bf16.mxu0 0
        %7055 = vmatpush2.bf16.msra.mxu0 %v6873
        %7056 = vmatprep.subr.bf16.mxu0 0
        %7057 = vmatpush2.bf16.msra.mxu0 %v6872
        %7058 = vmatprep.mubr.bf16.mxu0 %v6487
        %7059 = vmatmul.mubr.bf16.gmra.mxu0 %v6486
        %v7060 = vpop.f32.mrf.mxu0
        %v7061 = vadd.f32 %v7020, %v7060
        %v7062 = vpop.f32.mrf.mxu0
        %v7063 = vpop.f32.mrf.mxu0
        %v7064 = vadd.f32 %v7023, %v7063
        %v7065 = vpop.f32.mrf.mxu0
        %7066 = vdwg.mxu0
        %7067 = vmatprep.subr.bf16.mxu0 0
        %7068 = vmatpush1.bf16.msra.mxu0 %v6887
        %7069 = vmatprep.subr.bf16.mxu0 0
        %7070 = vmatpush1.bf16.msra.mxu0 %v6886
        %7071 = vmatprep.subr.bf16.mxu0 0
        %7072 = vmatpush1.bf16.msra.mxu0 %v6885
        %7073 = vmatprep.subr.bf16.mxu0 0
        %7074 = vmatpush1.bf16.msra.mxu0 %v6884
        %7075 = vmatprep.subr.bf16.mxu0 0
        %7076 = vmatpush1.bf16.msra.mxu0 %v6883
        %7077 = vmatprep.subr.bf16.mxu0 0
        %7078 = vmatpush1.bf16.msra.mxu0 %v6882
        %7079 = vmatprep.subr.bf16.mxu0 0
        %7080 = vmatpush1.bf16.msra.mxu0 %v6881
        %7081 = vmatprep.subr.bf16.mxu0 0
        %7082 = vmatpush1.bf16.msra.mxu0 %v6880
        %7083 = vmatprep.subr.bf16.mxu0 0
        %7084 = vmatpush2.bf16.msra.mxu0 0
        %7085 = vmatprep.subr.bf16.mxu0 0
        %7086 = vmatpush2.bf16.msra.mxu0 0
        %7087 = vmatprep.subr.bf16.mxu0 0
        %7088 = vmatpush2.bf16.msra.mxu0 0
        %7089 = vmatprep.subr.bf16.mxu0 0
        %7090 = vmatpush2.bf16.msra.mxu0 0
        %7091 = vmatprep.subr.bf16.mxu0 0
        %7092 = vmatpush2.bf16.msra.mxu0 0
        %7093 = vmatprep.subr.bf16.mxu0 0
        %7094 = vmatpush2.bf16.msra.mxu0 0
        %7095 = vmatprep.subr.bf16.mxu0 0
        %7096 = vmatpush2.bf16.msra.mxu0 0
        %7097 = vmatprep.subr.bf16.mxu0 0
        %7098 = vmatpush2.bf16.msra.mxu0 0
        %7099 = vmatprep.mubr.bf16.mxu0 0
        %7100 = vmatmul.mubr.bf16.gmra.mxu0 %v6488
        %v7101 = vpop.f32.mrf.mxu0
        %v7102 = vadd.f32 %v7061, %v7101
        %v7103 = vpop.f32.mrf.mxu0
        %v7104 = vpop.f32.mrf.mxu0
        %v7105 = vadd.f32 %v7064, %v7104
        %v7106 = vpop.f32.mrf.mxu0
        %7107 = vdwg.mxu0
        %7108 = vst [vmem:[%s365] sm:$0xff] %v7102
        %7109 = vst [vmem:[%s365 + $0x8] sm:$0xff] %v7105
        %s7110 = smul.u32 2, %s22
        %p7111 = scmp.lt.s32.totalorder %s7110, 3
        %s7112 = scalar_select %p7111, %s7110, 3
        %s7113 = smul.addr %s7112, 8
        %s7114 = scalar_lea.vmem %s7, %s7113
        // Predicated region
        $region73: #{ibp_encoder_forward.1} parent=47 // pred_check
          %p7115 = pneg %p192
        $region74: #{ibp_encoder_forward.1} parent=47 // pred_check_branch
          %7117 = sbr.rel (%p7115) target = $region76
        $region75: #{ibp_encoder_forward.1} parent=47 // pred_region
          %s7118 = smul.u32 2, %s22
        $region76: #{ibp_encoder_forward.1} parent=47 // pred_fallthru
          _
      $region48: #{ibp_encoder_forward.1} parent=5 // pred_fallthru
        _
      %p7119 = scmp.le.s32.totalorder 2, %s17
      // Predicated region
      $region77: #{ibp_encoder_forward.1} parent=5 // pred_check
        %p7120 = pneg %p7119
      $region78: #{ibp_encoder_forward.1} parent=5 // pred_check_branch
        %7122 = sbr.rel (%p7120) target = $region80
      $region79: #{ibp_encoder_forward.1} parent=5 // pred_region
        %s7123 = ssub.s32 %s17, 2
        // Predicated region
        $region81: #{ibp_encoder_forward.1} parent=79 // pred_check
          %p7124 = pneg %p198
        $region82: #{ibp_encoder_forward.1} parent=79 // pred_check_branch
          %7126 = sbr.rel (%p7124) target = $region84
        $region83: #{ibp_encoder_forward.1} parent=79 // pred_region
          %s7127 = smul.u32 2, %s23
          %p7128 = scmp.lt.s32.totalorder %s7127, 3
          %s7129 = scalar_select %p7128, %s7127, 3
          %s7130 = smul.addr %s7129, 8
          %s7131 = scalar_lea.vmem %s7, %s7130
        $region84: #{ibp_encoder_forward.1} parent=79 // pred_fallthru
          _
      $region80: #{ibp_encoder_forward.1} parent=5 // pred_fallthru
        _
    $region6: #{ibp_encoder_forward.1} parent=1 // loop_footer
      %s21 = sadd.s32 1, %s17
    $region7: #{ibp_encoder_forward.1} parent=1 // loop_footer_branch
      %16 = sbr.rel target = $region3
    $region8: #{ibp_encoder_forward.1} parent=1 // loop_exit
      _
    %7132 = vsyncpa [#allocation3], 1
    %s7133 = scalar_lea.sflag [#allocation3], 1
    %7134 = vsyncpa %s7133, 1
    %7135 = vsyncpa [#allocation5], 1
    %7136 = vsyncpa [#allocation8], 1
    %7137 = vsyncpa [#allocation11], 1

</llo_original>
